<compile_context>
chip_gen: v7x
topology: tpu7x:2x2x1
jax: 0.10.0
libtpu: 0.0.40
codegen_flags: <defaults>
</compile_context>

<pallas_src>
import math

import jax
import jax.numpy as jnp
import numpy as np
from jax.experimental import pallas as pl
from jax.experimental.pallas import tpu as pltpu

# torch gate order along the 4H axis is [i, f, g, o]; kernel uses [i, f, o, g].
_GATE_PERM = np.array([0, 1, 3, 2])


# ----------------------------------------------------------------------------
# Kernel
# ----------------------------------------------------------------------------
def _make_encoder_kernel(num_layers, t_blk, mm_dtype, unroll, hoist_weights):
    """Kernel body for a fixed number of LSTM layers and time block."""
    n_mid = num_layers - 1  # layers >= 1 use fused [Wx; Wh] weights

    def kernel(*refs):
        # refs = [x, Wx0, Wh0, b0, (Wcat_l, b_l)*{L-1}, W_head, b_head,
        #         out, h_scr, c_scr, xz_scr, top_scr]
        x_ref = refs[0]
        wx0_ref, wh0_ref, b0_ref = refs[1], refs[2], refs[3]
        mid_refs = refs[4:4 + 2 * n_mid]
        w_head_ref = refs[4 + 2 * n_mid]
        b_head_ref = refs[5 + 2 * n_mid]
        out_ref = refs[6 + 2 * n_mid]
        h_scr, c_scr, xz_scr, top_scr = refs[7 + 2 * n_mid:]

        H = h_scr.shape[-1]
        b_tile = h_scr.shape[1]

        @pl.when(pl.program_id(1) == 0)        # first time-chunk of this batch tile
        def _init():
            h_scr[...] = jnp.zeros_like(h_scr)
            c_scr[...] = jnp.zeros_like(c_scr)

        # --- hoisted layer-0 input projection: one big GEMM per chunk --------
        x_flat = x_ref[...].reshape(t_blk * b_tile, -1).astype(mm_dtype)
        xz = (jnp.dot(x_flat, wx0_ref[...], preferred_element_type=jnp.float32)
              + b0_ref[...])                   # (t_blk*b_tile, 4H) f32, bias folded
        xz_scr[...] = xz.reshape(t_blk, b_tile, 4 * H)

        # --- hoist loop-invariant weight loads / bias broadcasts -------------
        wh0 = wh0_ref[...] if hoist_weights else None
        wcats = ([mid_refs[2 * i][...] for i in range(n_mid)]
                 if hoist_weights else None)
        biases = [jnp.broadcast_to(mid_refs[2 * i + 1][...], (b_tile, 4 * H))
                  for i in range(n_mid)]

        def gates(z, c_prev):
            s = jax.nn.sigmoid(z[:, :3 * H])   # gates i, f, o (one EUP launch)
            g_g = jnp.tanh(z[:, 3 * H:])       # gate g
            i_g, f_g, o_g = s[:, :H], s[:, H:2 * H], s[:, 2 * H:]
            c_new = f_g * c_prev + i_g * g_g   # f32 elementwise
            h_new = o_g * jnp.tanh(c_new)
            return h_new, c_new

        def step(tau, carry):
            # Layer 0: x-projection precomputed, only the recurrent matmul here.
            w = wh0 if hoist_weights else wh0_ref[...]
            z = xz_scr[tau] + jnp.dot(h_scr[0].astype(mm_dtype), w,
                                      preferred_element_type=jnp.float32)
            h_new, c_new = gates(z, c_scr[0])
            h_scr[0] = h_new
            c_scr[0] = c_new
            inp = h_new

            # Layers >= 1: one fused [inp, h_prev] @ [[Wx]; [Wh]] matmul each.
            for l in range(1, num_layers):
                w = wcats[l - 1] if hoist_weights else mid_refs[2 * (l - 1)][...]
                lhs = jnp.concatenate([inp, h_scr[l]], axis=1).astype(mm_dtype)
                z = (jnp.dot(lhs, w, preferred_element_type=jnp.float32)
                     + biases[l - 1])
                h_new, c_new = gates(z, c_scr[l])
                h_scr[l] = h_new
                c_scr[l] = c_new
                inp = h_new

            top_scr[tau] = inp                 # top-layer hidden for this step
            return carry

        jax.lax.fori_loop(0, t_blk, step, 0, unroll=unroll)

        # --- fused mu/logvar head, lane-dense store ---------------------------
        # y[r, n] = w_head[r] . tops[n] + b_head[r]  ->  (2*latent, t_blk*b_tile)
        tops = top_scr[...].reshape(t_blk * b_tile, H).astype(mm_dtype)
        y = jax.lax.dot_general(
            w_head_ref[...], tops,
            dimension_numbers=(((1,), (1,)), ((), ())),
            preferred_element_type=jnp.float32) + b_head_ref[...]
        out_ref[0] = y.astype(out_ref.dtype)

    return kernel


# ----------------------------------------------------------------------------
# Weight packing (PyTorch layout -> kernel layout)
# ----------------------------------------------------------------------------
def _pack_lstm_layer(w_ih, w_hh, b_ih, b_hh, hidden_dim, mm_dtype):
    """torch (4H,in)/(4H,H)/(4H,)/(4H,) -> (in,4H), (H,4H), (1,4H) in [i,f,o,g]."""
    in_l = w_ih.shape[1]
    H = hidden_dim
    wx = jnp.transpose(w_ih.reshape(4, H, in_l)[_GATE_PERM], (2, 0, 1))
    wx = wx.reshape(in_l, 4 * H).astype(mm_dtype)
    wh = jnp.transpose(w_hh.reshape(4, H, H)[_GATE_PERM], (2, 0, 1))
    wh = wh.reshape(H, 4 * H).astype(mm_dtype)
    b = (b_ih + b_hh).reshape(4, H)[_GATE_PERM].reshape(1, 4 * H)
    return wx, wh, b.astype(jnp.float32)


# ----------------------------------------------------------------------------
# Wrapper
# ----------------------------------------------------------------------------
def lstm_vae_encoder(x, params, *, t_blk=None, b_tile=None, use_bf16=True):
    """x: (B, T, input_dim) batch-first. Returns (mu, logvar), each (B, T, latent)."""
    B, T, D_in = x.shape
    H = params["hidden_dim"]
    latent = params["latent_dim"]
    lstm = params["lstm"]
    L = len(lstm)
    mm_dtype = jnp.bfloat16 if use_bf16 else jnp.float32
    d_head = 2 * latent

    # Pack LSTM weights: layer 0 keeps Wx0 separate (hoisted GEMM); layers >= 1
    # use a fused [Wx; Wh] of shape (2H, 4H). mu/logvar heads fused to (2L, H).
    weight_args = []
    for l, (w_ih, w_hh, b_ih, b_hh) in enumerate(lstm):
        wx, wh, b = _pack_lstm_layer(w_ih, w_hh, b_ih, b_hh, H, mm_dtype)
        if l == 0:
            weight_args += [wx, wh, b]
        else:
            weight_args += [jnp.concatenate([wx, wh], axis=0), b]
    w_mu, b_mu = params["mu"]
    w_lv, b_lv = params["logvar"]
    w_head = jnp.concatenate([w_mu, w_lv], axis=0).astype(mm_dtype)   # (2*latent, H)
    b_head = jnp.concatenate([b_mu, b_lv]).reshape(d_head, 1).astype(jnp.float32)
    weight_args += [w_head, b_head]

    # ---- padding / tiling ----------------------------------------------------
    B_pad = max(8, ((B + 7) // 8) * 8)
    if b_tile is None:
        b_tile = B_pad                       # one batch tile; >1 tiles feed v7x megacore
    b_tile = max(8, ((b_tile + 7) // 8) * 8)
    B_pad = ((B_pad + b_tile - 1) // b_tile) * b_tile
    n_bt = B_pad // b_tile

    if t_blk is None:
        t_blk = T if T <= 64 else 64
    T_pad = pl.cdiv(T, t_blk) * t_blk
    n_chunks = T_pad // t_blk
    if n_chunks > 1:
        # lane-dense output block (d_head, t_blk*b_tile) needs a 128-multiple lane dim
        while (t_blk * b_tile) % 128 != 0:
            t_blk *= 2
        T_pad = pl.cdiv(T, t_blk) * t_blk
        n_chunks = T_pad // t_blk
    unroll = True if t_blk <= 16 else 8

    # Hoist weight loads into values only when they comfortably fit in vregs.
    hoisted_bytes = (4 * H * H + 8 * H * H * (L - 1)) * jnp.dtype(mm_dtype).itemsize
    hoist_weights = hoisted_bytes <= 64 * 1024

    x_tm = jnp.transpose(x, (1, 0, 2))                                  # (T, B, D_in)
    x_tm = jnp.pad(x_tm, ((0, T_pad - T), (0, B_pad - B), (0, 0))).astype(mm_dtype)

    in_specs = [pl.BlockSpec((t_blk, b_tile, D_in), lambda bt, t: (t, bt, 0))]
    for arr in weight_args:                                             # grid-invariant
        in_specs.append(pl.BlockSpec(arr.shape, lambda bt, t: (0, 0)))
    out_spec = pl.BlockSpec((1, d_head, t_blk * b_tile), lambda bt, t: (bt, 0, t))

    kernel = _make_encoder_kernel(L, t_blk, mm_dtype, unroll, hoist_weights)

    y = pl.pallas_call(
        kernel,
        out_shape=jax.ShapeDtypeStruct((n_bt, d_head, T_pad * b_tile), jnp.float32),
        grid_spec=pltpu.PrefetchScalarGridSpec(
            num_scalar_prefetch=0,
            grid=(n_bt, n_chunks),                       # batch tiles x time chunks
            in_specs=in_specs,
            out_specs=out_spec,
            scratch_shapes=[
                pltpu.VMEM((L, b_tile, H), jnp.float32),           # h state per layer
                pltpu.VMEM((L, b_tile, H), jnp.float32),           # c state per layer
                pltpu.VMEM((t_blk, b_tile, 4 * H), jnp.float32),   # hoisted layer-0 x-proj
                pltpu.VMEM((t_blk, b_tile, H), jnp.float32),       # top-layer h per step
            ],
        ),
        compiler_params=pltpu.CompilerParams(
            dimension_semantics=("parallel", "arbitrary"),   # batch ||, time sequential
        ),
    )(x_tm, *weight_args)

    # Undo the lane-dense transpose and the batch/time padding.
    y = y.reshape(n_bt, d_head, T_pad, b_tile)
    y = jnp.transpose(y, (0, 3, 2, 1)).reshape(B_pad, T_pad, d_head)
    y = y[:B, :T]
    mu = y[..., :latent]
    logvar = y[..., latent:]
    return mu, logvar


# ----------------------------------------------------------------------------
# Deterministic parameter construction (PyTorch nn.LSTM / nn.Linear layout)
# ----------------------------------------------------------------------------
def init_params(key, input_dim, hidden_dim, latent_dim, num_layers):
    stdv = 1.0 / math.sqrt(hidden_dim)
    lstm = []
    for l in range(num_layers):
        in_l = input_dim if l == 0 else hidden_dim
        key, k1, k2, k3, k4 = jax.random.split(key, 5)
        w_ih = jax.random.uniform(k1, (4 * hidden_dim, in_l), jnp.float32, -stdv, stdv)
        w_hh = jax.random.uniform(k2, (4 * hidden_dim, hidden_dim), jnp.float32, -stdv, stdv)
        b_ih = jax.random.uniform(k3, (4 * hidden_dim,), jnp.float32, -stdv, stdv)
        b_hh = jax.random.uniform(k4, (4 * hidden_dim,), jnp.float32, -stdv, stdv)
        lstm.append((w_ih, w_hh, b_ih, b_hh))

    lim = 1.0 / math.sqrt(hidden_dim)
    key, k1, k2, k3, k4 = jax.random.split(key, 5)
    w_mu = jax.random.uniform(k1, (latent_dim, hidden_dim), jnp.float32, -lim, lim)
    b_mu = jax.random.uniform(k2, (latent_dim,), jnp.float32, -lim, lim)
    w_lv = jax.random.uniform(k3, (latent_dim, hidden_dim), jnp.float32, -lim, lim)
    b_lv = jax.random.uniform(k4, (latent_dim,), jnp.float32, -lim, lim)
    return {
        "lstm": lstm,
        "mu": (w_mu, b_mu),
        "logvar": (w_lv, b_lv),
        "hidden_dim": hidden_dim,
        "latent_dim": latent_dim,
    }


# ----------------------------------------------------------------------------
# Pure-JAX f32 reference (mirrors the PyTorch forward exactly)
# ----------------------------------------------------------------------------
def reference_forward(x, params):
    B, T, _ = x.shape
    H = params["hidden_dim"]
    lstm = params["lstm"]
    L = len(lstm)
    w_mu, b_mu = params["mu"]
    w_lv, b_lv = params["logvar"]

    h = [jnp.zeros((B, H), jnp.float32) for _ in range(L)]
    c = [jnp.zeros((B, H), jnp.float32) for _ in range(L)]
    tops = []
    for t in range(T):
        inp = x[:, t, :]
        for l in range(L):
            w_ih, w_hh, b_ih, b_hh = lstm[l]
            z = inp @ w_ih.T + b_ih + h[l] @ w_hh.T + b_hh   # torch order [i,f,g,o]
            i_g = jax.nn.sigmoid(z[:, 0 * H:1 * H])
            f_g = jax.nn.sigmoid(z[:, 1 * H:2 * H])
            g_g = jnp.tanh(z[:, 2 * H:3 * H])
            o_g = jax.nn.sigmoid(z[:, 3 * H:4 * H])
            c[l] = f_g * c[l] + i_g * g_g
            h[l] = o_g * jnp.tanh(c[l])
            inp = h[l]
        tops.append(inp)
    hs = jnp.stack(tops, axis=1)                             # (B, T, H)
    mu = hs @ w_mu.T + b_mu
    logvar = hs @ w_lv.T + b_lv
    return mu, logvar


# ----------------------------------------------------------------------------
if __name__ == "__main__":
    input_dim, hidden_dim, latent_dim, num_layers = 16, 32, 8, 2
    B, T = 2, 8

    key = jax.random.PRNGKey(0)
    key, kx = jax.random.split(key)
    x = jax.random.normal(kx, (B, T, input_dim), jnp.float32)
    params = init_params(key, input_dim, hidden_dim, latent_dim, num_layers)

    mu_ref, lv_ref = reference_forward(x, params)
    mu_ref = np.asarray(mu_ref)
    lv_ref = np.asarray(lv_ref)

    ok = True
    # f32 path checked tightly; bf16-matmul path checked with a looser tolerance.
    for use_bf16, tol in [(False, 5e-3), (True, 3e-2)]:
        mu, lv = lstm_vae_encoder(x, params, use_bf16=use_bf16)
        mu, lv = jax.block_until_ready((mu, lv))
        for name, got, ref in [("mu", mu, mu_ref), ("logvar", lv, lv_ref)]:
            got = np.asarray(got)
            if not np.allclose(got, ref, atol=tol, rtol=tol):
                ok = False
                print("MISMATCH", name, "bf16" if use_bf16 else "f32",
                      float(np.max(np.abs(got - ref))))

    if ok:
        print("KERNEL_OK")
</pallas_src>

<mosaic_0001>
module attributes {stable_mosaic.version = 11 : i64} {
  func.func @kernel(%arg0: i32, %arg1: i32, %arg2: memref<8x8x16xf32, #tpu.memory_space<vmem>>, %arg3: memref<16x128xf32, #tpu.memory_space<vmem>>, %arg4: memref<32x128xf32, #tpu.memory_space<vmem>>, %arg5: memref<1x128xf32, #tpu.memory_space<vmem>>, %arg6: memref<64x128xf32, #tpu.memory_space<vmem>>, %arg7: memref<1x128xf32, #tpu.memory_space<vmem>>, %arg8: memref<16x32xf32, #tpu.memory_space<vmem>>, %arg9: memref<16x1xf32, #tpu.memory_space<vmem>>, %arg10: memref<1x16x64xf32, #tpu.memory_space<vmem>>, %arg11: memref<2x8x32xf32, #tpu.memory_space<vmem>>, %arg12: memref<2x8x32xf32, #tpu.memory_space<vmem>>, %arg13: memref<8x8x128xf32, #tpu.memory_space<vmem>>, %arg14: memref<8x8x32xf32, #tpu.memory_space<vmem>>) attributes {dimension_semantics = [#tpu.dimension_semantics<parallel>, #tpu.dimension_semantics<arbitrary>], iteration_bounds = array<i64: 1, 1>, scalar_prefetch = 0 : i64, scratch_operands = 4 : i64, tpu.core_type = #tpu.core_type<tc>, window_params = [{transform_indices = @transform_0, window_bounds = array<i64: 8, 8, 16>}, {pipeline_mode = #tpu.pipeline_mode<synchronous>, transform_indices = @transform_1, window_bounds = array<i64: 16, 128>}, {pipeline_mode = #tpu.pipeline_mode<synchronous>, transform_indices = @transform_2, window_bounds = array<i64: 32, 128>}, {pipeline_mode = #tpu.pipeline_mode<synchronous>, transform_indices = @transform_3, window_bounds = array<i64: 1, 128>}, {pipeline_mode = #tpu.pipeline_mode<synchronous>, transform_indices = @transform_4, window_bounds = array<i64: 64, 128>}, {pipeline_mode = #tpu.pipeline_mode<synchronous>, transform_indices = @transform_5, window_bounds = array<i64: 1, 128>}, {pipeline_mode = #tpu.pipeline_mode<synchronous>, transform_indices = @transform_6, window_bounds = array<i64: 16, 32>}, {pipeline_mode = #tpu.pipeline_mode<synchronous>, transform_indices = @transform_7, window_bounds = array<i64: 16, 1>}, {transform_indices = @transform_8, window_bounds = array<i64: 1, 16, 64>}]} {
    %c0_i32 = arith.constant 0 : i32
    %0 = arith.cmpi eq, %arg1, %c0_i32 : i32
    %1 = arith.extui %0 : i1 to i32
    %c0_i32_0 = arith.constant 0 : i32
    %2 = arith.cmpi ne, %1, %c0_i32_0 : i32
    scf.if %2 {
      %cst_283 = arith.constant 0.000000e+00 : f32
      %539 = vector.broadcast %cst_283 : f32 to vector<2x8x32xf32>
      %c0_284 = arith.constant 0 : index
      %c0_285 = arith.constant 0 : index
      %c0_286 = arith.constant 0 : index
      %540 = vector.load %arg11[%c0_284, %c0_285, %c0_286] : memref<2x8x32xf32, #tpu.memory_space<vmem>>, vector<2x8x32xf32>
      tpu.vector_store %arg11[%c0_284, %c0_285, %c0_286], %539 {strides = array<i32>} : memref<2x8x32xf32, #tpu.memory_space<vmem>>, vector<2x8x32xf32>,
      %cst_287 = arith.constant 0.000000e+00 : f32
      %541 = vector.broadcast %cst_287 : f32 to vector<2x8x32xf32>
      %c0_288 = arith.constant 0 : index
      %c0_289 = arith.constant 0 : index
      %c0_290 = arith.constant 0 : index
      %542 = vector.load %arg12[%c0_288, %c0_289, %c0_290] : memref<2x8x32xf32, #tpu.memory_space<vmem>>, vector<2x8x32xf32>
      tpu.vector_store %arg12[%c0_288, %c0_289, %c0_290], %541 {strides = array<i32>} : memref<2x8x32xf32, #tpu.memory_space<vmem>>, vector<2x8x32xf32>,
    } else {
    }
    %c0 = arith.constant 0 : index
    %c0_1 = arith.constant 0 : index
    %c0_2 = arith.constant 0 : index
    %3 = vector.load %arg2[%c0, %c0_1, %c0_2] : memref<8x8x16xf32, #tpu.memory_space<vmem>>, vector<8x8x16xf32>
    %4 = vector.shape_cast %3 : vector<8x8x16xf32> to vector<64x16xf32>
    %c0_3 = arith.constant 0 : index
    %c0_4 = arith.constant 0 : index
    %5 = vector.load %arg3[%c0_3, %c0_4] : memref<16x128xf32, #tpu.memory_space<vmem>>, vector<16x128xf32>
    %cst = arith.constant dense<0.000000e+00> : vector<64x128xf32>
    %6 = tpu.matmul %4, %5, %cst {dimension_numbers = #tpu.dot_dimension_numbers<[1], [0], [0], [1], [0, 0, 1, 1], [], []>} : vector<64x16xf32>, vector<16x128xf32>, vector<64x128xf32> -> vector<64x128xf32>
    %c0_5 = arith.constant 0 : index
    %c0_6 = arith.constant 0 : index
    %7 = vector.load %arg5[%c0_5, %c0_6] : memref<1x128xf32, #tpu.memory_space<vmem>>, vector<1x128xf32>
    %8 = vector.broadcast %7 : vector<1x128xf32> to vector<64x128xf32>
    %9 = arith.addf %6, %8 : vector<64x128xf32>
    %10 = vector.shape_cast %9 : vector<64x128xf32> to vector<8x8x128xf32>
    %c0_7 = arith.constant 0 : index
    %c0_8 = arith.constant 0 : index
    %c0_9 = arith.constant 0 : index
    %11 = vector.load %arg13[%c0_7, %c0_8, %c0_9] : memref<8x8x128xf32, #tpu.memory_space<vmem>>, vector<8x8x128xf32>
    tpu.vector_store %arg13[%c0_7, %c0_8, %c0_9], %10 {strides = array<i32>} : memref<8x8x128xf32, #tpu.memory_space<vmem>>, vector<8x8x128xf32>,
    %c0_10 = arith.constant 0 : index
    %c0_11 = arith.constant 0 : index
    %12 = vector.load %arg4[%c0_10, %c0_11] : memref<32x128xf32, #tpu.memory_space<vmem>>, vector<32x128xf32>
    %c0_12 = arith.constant 0 : index
    %c0_13 = arith.constant 0 : index
    %13 = vector.load %arg6[%c0_12, %c0_13] : memref<64x128xf32, #tpu.memory_space<vmem>>, vector<64x128xf32>
    %c0_14 = arith.constant 0 : index
    %c0_15 = arith.constant 0 : index
    %14 = vector.load %arg7[%c0_14, %c0_15] : memref<1x128xf32, #tpu.memory_space<vmem>>, vector<1x128xf32>
    %15 = vector.shape_cast %14 : vector<1x128xf32> to vector<1x128xf32>
    %16 = vector.broadcast %15 : vector<1x128xf32> to vector<8x128xf32>
    %c0_i32_16 = arith.constant 0 : i32
    %17 = arith.index_cast %c0_i32_16 : i32 to index
    %c0_17 = arith.constant 0 : index
    %c0_18 = arith.constant 0 : index
    %18 = vector.load %arg13[%17, %c0_17, %c0_18] : memref<8x8x128xf32, #tpu.memory_space<vmem>>, vector<1x8x128xf32>
    %19 = vector.shape_cast %18 : vector<1x8x128xf32> to vector<8x128xf32>
    %c0_19 = arith.constant 0 : index
    %c0_20 = arith.constant 0 : index
    %c0_21 = arith.constant 0 : index
    %20 = vector.load %arg11[%c0_19, %c0_20, %c0_21] : memref<2x8x32xf32, #tpu.memory_space<vmem>>, vector<1x8x32xf32>
    %21 = vector.shape_cast %20 : vector<1x8x32xf32> to vector<8x32xf32>
    %cst_22 = arith.constant dense<0.000000e+00> : vector<8x128xf32>
    %22 = tpu.matmul %21, %12, %cst_22 {dimension_numbers = #tpu.dot_dimension_numbers<[1], [0], [0], [1], [0, 0, 1, 1], [], []>} : vector<8x32xf32>, vector<32x128xf32>, vector<8x128xf32> -> vector<8x128xf32>
    %23 = arith.addf %19, %22 : vector<8x128xf32>
    %c0_23 = arith.constant 0 : index
    %c0_24 = arith.constant 0 : index
    %c0_25 = arith.constant 0 : index
    %24 = vector.load %arg12[%c0_23, %c0_24, %c0_25] : memref<2x8x32xf32, #tpu.memory_space<vmem>>, vector<1x8x32xf32>
    %25 = vector.shape_cast %24 : vector<1x8x32xf32> to vector<8x32xf32>
    %26 = vector.extract_strided_slice %23 {offsets = [0, 0], sizes = [8, 96], strides = [1, 1]} : vector<8x128xf32> to vector<8x96xf32>
    %27 = arith.negf %26 : vector<8x96xf32>
    %28 = math.exp %27 : vector<8x96xf32>
    %cst_26 = arith.constant 1.000000e+00 : f32
    %29 = vector.broadcast %cst_26 : f32 to vector<8x96xf32>
    %30 = arith.addf %29, %28 : vector<8x96xf32>
    %31 = arith.divf %29, %30 : vector<8x96xf32>
    %32 = vector.extract_strided_slice %23 {offsets = [0, 96], sizes = [8, 32], strides = [1, 1]} : vector<8x128xf32> to vector<8x32xf32>
    %33 = math.tanh %32 : vector<8x32xf32>
    %34 = vector.extract_strided_slice %31 {offsets = [0, 0], sizes = [8, 32], strides = [1, 1]} : vector<8x96xf32> to vector<8x32xf32>
    %35 = vector.extract_strided_slice %31 {offsets = [0, 32], sizes = [8, 32], strides = [1, 1]} : vector<8x96xf32> to vector<8x32xf32>
    %36 = vector.extract_strided_slice %31 {offsets = [0, 64], sizes = [8, 32], strides = [1, 1]} : vector<8x96xf32> to vector<8x32xf32>
    %37 = arith.mulf %35, %25 : vector<8x32xf32>
    %38 = arith.mulf %34, %33 : vector<8x32xf32>
    %39 = arith.addf %37, %38 : vector<8x32xf32>
    %40 = math.tanh %39 : vector<8x32xf32>
    %41 = arith.mulf %36, %40 : vector<8x32xf32>
    %c0_27 = arith.constant 0 : index
    %c0_28 = arith.constant 0 : index
    %c0_29 = arith.constant 0 : index
    %42 = vector.load %arg11[%c0_27, %c0_28, %c0_29] : memref<2x8x32xf32, #tpu.memory_space<vmem>>, vector<1x8x32xf32>
    %43 = vector.shape_cast %42 : vector<1x8x32xf32> to vector<8x32xf32>
    %44 = vector.shape_cast %41 : vector<8x32xf32> to vector<1x8x32xf32>
    tpu.vector_store %arg11[%c0_27, %c0_28, %c0_29], %44 {strides = array<i32>} : memref<2x8x32xf32, #tpu.memory_space<vmem>>, vector<1x8x32xf32>,
    %c0_30 = arith.constant 0 : index
    %c0_31 = arith.constant 0 : index
    %c0_32 = arith.constant 0 : index
    %45 = vector.load %arg12[%c0_30, %c0_31, %c0_32] : memref<2x8x32xf32, #tpu.memory_space<vmem>>, vector<1x8x32xf32>
    %46 = vector.shape_cast %45 : vector<1x8x32xf32> to vector<8x32xf32>
    %47 = vector.shape_cast %39 : vector<8x32xf32> to vector<1x8x32xf32>
    tpu.vector_store %arg12[%c0_30, %c0_31, %c0_32], %47 {strides = array<i32>} : memref<2x8x32xf32, #tpu.memory_space<vmem>>, vector<1x8x32xf32>,
    %c1 = arith.constant 1 : index
    %c0_33 = arith.constant 0 : index
    %c0_34 = arith.constant 0 : index
    %48 = vector.load %arg11[%c1, %c0_33, %c0_34] : memref<2x8x32xf32, #tpu.memory_space<vmem>>, vector<1x8x32xf32>
    %49 = vector.shape_cast %48 : vector<1x8x32xf32> to vector<8x32xf32>
    %50 = tpu.concatenate %41, %49 in 1 : vector<8x32xf32>, vector<8x32xf32> -> vector<8x64xf32>
    %cst_35 = arith.constant dense<0.000000e+00> : vector<8x128xf32>
    %51 = tpu.matmul %50, %13, %cst_35 {dimension_numbers = #tpu.dot_dimension_numbers<[1], [0], [0], [1], [0, 0, 1, 1], [], []>} : vector<8x64xf32>, vector<64x128xf32>, vector<8x128xf32> -> vector<8x128xf32>
    %52 = arith.addf %51, %16 : vector<8x128xf32>
    %c1_36 = arith.constant 1 : index
    %c0_37 = arith.constant 0 : index
    %c0_38 = arith.constant 0 : index
    %53 = vector.load %arg12[%c1_36, %c0_37, %c0_38] : memref<2x8x32xf32, #tpu.memory_space<vmem>>, vector<1x8x32xf32>
    %54 = vector.shape_cast %53 : vector<1x8x32xf32> to vector<8x32xf32>
    %55 = vector.extract_strided_slice %52 {offsets = [0, 0], sizes = [8, 96], strides = [1, 1]} : vector<8x128xf32> to vector<8x96xf32>
    %56 = arith.negf %55 : vector<8x96xf32>
    %57 = math.exp %56 : vector<8x96xf32>
    %cst_39 = arith.constant 1.000000e+00 : f32
    %58 = vector.broadcast %cst_39 : f32 to vector<8x96xf32>
    %59 = arith.addf %58, %57 : vector<8x96xf32>
    %60 = arith.divf %58, %59 : vector<8x96xf32>
    %61 = vector.extract_strided_slice %52 {offsets = [0, 96], sizes = [8, 32], strides = [1, 1]} : vector<8x128xf32> to vector<8x32xf32>
    %62 = math.tanh %61 : vector<8x32xf32>
    %63 = vector.extract_strided_slice %60 {offsets = [0, 0], sizes = [8, 32], strides = [1, 1]} : vector<8x96xf32> to vector<8x32xf32>
    %64 = vector.extract_strided_slice %60 {offsets = [0, 32], sizes = [8, 32], strides = [1, 1]} : vector<8x96xf32> to vector<8x32xf32>
    %65 = vector.extract_strided_slice %60 {offsets = [0, 64], sizes = [8, 32], strides = [1, 1]} : vector<8x96xf32> to vector<8x32xf32>
    %66 = arith.mulf %64, %54 : vector<8x32xf32>
    %67 = arith.mulf %63, %62 : vector<8x32xf32>
    %68 = arith.addf %66, %67 : vector<8x32xf32>
    %69 = math.tanh %68 : vector<8x32xf32>
    %70 = arith.mulf %65, %69 : vector<8x32xf32>
    %c1_40 = arith.constant 1 : index
    %c0_41 = arith.constant 0 : index
    %c0_42 = arith.constant 0 : index
    %71 = vector.load %arg11[%c1_40, %c0_41, %c0_42] : memref<2x8x32xf32, #tpu.memory_space<vmem>>, vector<1x8x32xf32>
    %72 = vector.shape_cast %71 : vector<1x8x32xf32> to vector<8x32xf32>
    %73 = vector.shape_cast %70 : vector<8x32xf32> to vector<1x8x32xf32>
    tpu.vector_store %arg11[%c1_40, %c0_41, %c0_42], %73 {strides = array<i32>} : memref<2x8x32xf32, #tpu.memory_space<vmem>>, vector<1x8x32xf32>,
    %c1_43 = arith.constant 1 : index
    %c0_44 = arith.constant 0 : index
    %c0_45 = arith.constant 0 : index
    %74 = vector.load %arg12[%c1_43, %c0_44, %c0_45] : memref<2x8x32xf32, #tpu.memory_space<vmem>>, vector<1x8x32xf32>
    %75 = vector.shape_cast %74 : vector<1x8x32xf32> to vector<8x32xf32>
    %76 = vector.shape_cast %68 : vector<8x32xf32> to vector<1x8x32xf32>
    tpu.vector_store %arg12[%c1_43, %c0_44, %c0_45], %76 {strides = array<i32>} : memref<2x8x32xf32, #tpu.memory_space<vmem>>, vector<1x8x32xf32>,
    %77 = arith.index_cast %c0_i32_16 : i32 to index
    %c0_46 = arith.constant 0 : index
    %c0_47 = arith.constant 0 : index
    %78 = vector.load %arg14[%77, %c0_46, %c0_47] : memref<8x8x32xf32, #tpu.memory_space<vmem>>, vector<1x8x32xf32>
    %79 = vector.shape_cast %78 : vector<1x8x32xf32> to vector<8x32xf32>
    %80 = vector.shape_cast %70 : vector<8x32xf32> to vector<1x8x32xf32>
    tpu.vector_store %arg14[%77, %c0_46, %c0_47], %80 {strides = array<i32>} : memref<8x8x32xf32, #tpu.memory_space<vmem>>, vector<1x8x32xf32>,
    %c1_i32 = arith.constant 1 : i32
    %81 = arith.index_cast %c1_i32 : i32 to index
    %c0_48 = arith.constant 0 : index
    %c0_49 = arith.constant 0 : index
    %82 = vector.load %arg13[%81, %c0_48, %c0_49] : memref<8x8x128xf32, #tpu.memory_space<vmem>>, vector<1x8x128xf32>
    %83 = vector.shape_cast %82 : vector<1x8x128xf32> to vector<8x128xf32>
    %c0_50 = arith.constant 0 : index
    %c0_51 = arith.constant 0 : index
    %c0_52 = arith.constant 0 : index
    %84 = vector.load %arg11[%c0_50, %c0_51, %c0_52] : memref<2x8x32xf32, #tpu.memory_space<vmem>>, vector<1x8x32xf32>
    %85 = vector.shape_cast %84 : vector<1x8x32xf32> to vector<8x32xf32>
    %cst_53 = arith.constant dense<0.000000e+00> : vector<8x128xf32>
    %86 = tpu.matmul %85, %12, %cst_53 {dimension_numbers = #tpu.dot_dimension_numbers<[1], [0], [0], [1], [0, 0, 1, 1], [], []>} : vector<8x32xf32>, vector<32x128xf32>, vector<8x128xf32> -> vector<8x128xf32>
    %87 = arith.addf %83, %86 : vector<8x128xf32>
    %c0_54 = arith.constant 0 : index
    %c0_55 = arith.constant 0 : index
    %c0_56 = arith.constant 0 : index
    %88 = vector.load %arg12[%c0_54, %c0_55, %c0_56] : memref<2x8x32xf32, #tpu.memory_space<vmem>>, vector<1x8x32xf32>
    %89 = vector.shape_cast %88 : vector<1x8x32xf32> to vector<8x32xf32>
    %90 = vector.extract_strided_slice %87 {offsets = [0, 0], sizes = [8, 96], strides = [1, 1]} : vector<8x128xf32> to vector<8x96xf32>
    %91 = arith.negf %90 : vector<8x96xf32>
    %92 = math.exp %91 : vector<8x96xf32>
    %cst_57 = arith.constant 1.000000e+00 : f32
    %93 = vector.broadcast %cst_57 : f32 to vector<8x96xf32>
    %94 = arith.addf %93, %92 : vector<8x96xf32>
    %95 = arith.divf %93, %94 : vector<8x96xf32>
    %96 = vector.extract_strided_slice %87 {offsets = [0, 96], sizes = [8, 32], strides = [1, 1]} : vector<8x128xf32> to vector<8x32xf32>
    %97 = math.tanh %96 : vector<8x32xf32>
    %98 = vector.extract_strided_slice %95 {offsets = [0, 0], sizes = [8, 32], strides = [1, 1]} : vector<8x96xf32> to vector<8x32xf32>
    %99 = vector.extract_strided_slice %95 {offsets = [0, 32], sizes = [8, 32], strides = [1, 1]} : vector<8x96xf32> to vector<8x32xf32>
    %100 = vector.extract_strided_slice %95 {offsets = [0, 64], sizes = [8, 32], strides = [1, 1]} : vector<8x96xf32> to vector<8x32xf32>
    %101 = arith.mulf %99, %89 : vector<8x32xf32>
    %102 = arith.mulf %98, %97 : vector<8x32xf32>
    %103 = arith.addf %101, %102 : vector<8x32xf32>
    %104 = math.tanh %103 : vector<8x32xf32>
    %105 = arith.mulf %100, %104 : vector<8x32xf32>
    %c0_58 = arith.constant 0 : index
    %c0_59 = arith.constant 0 : index
    %c0_60 = arith.constant 0 : index
    %106 = vector.load %arg11[%c0_58, %c0_59, %c0_60] : memref<2x8x32xf32, #tpu.memory_space<vmem>>, vector<1x8x32xf32>
    %107 = vector.shape_cast %106 : vector<1x8x32xf32> to vector<8x32xf32>
    %108 = vector.shape_cast %105 : vector<8x32xf32> to vector<1x8x32xf32>
    tpu.vector_store %arg11[%c0_58, %c0_59, %c0_60], %108 {strides = array<i32>} : memref<2x8x32xf32, #tpu.memory_space<vmem>>, vector<1x8x32xf32>,
    %c0_61 = arith.constant 0 : index
    %c0_62 = arith.constant 0 : index
    %c0_63 = arith.constant 0 : index
    %109 = vector.load %arg12[%c0_61, %c0_62, %c0_63] : memref<2x8x32xf32, #tpu.memory_space<vmem>>, vector<1x8x32xf32>
    %110 = vector.shape_cast %109 : vector<1x8x32xf32> to vector<8x32xf32>
    %111 = vector.shape_cast %103 : vector<8x32xf32> to vector<1x8x32xf32>
    tpu.vector_store %arg12[%c0_61, %c0_62, %c0_63], %111 {strides = array<i32>} : memref<2x8x32xf32, #tpu.memory_space<vmem>>, vector<1x8x32xf32>,
    %c1_64 = arith.constant 1 : index
    %c0_65 = arith.constant 0 : index
    %c0_66 = arith.constant 0 : index
    %112 = vector.load %arg11[%c1_64, %c0_65, %c0_66] : memref<2x8x32xf32, #tpu.memory_space<vmem>>, vector<1x8x32xf32>
    %113 = vector.shape_cast %112 : vector<1x8x32xf32> to vector<8x32xf32>
    %114 = tpu.concatenate %105, %113 in 1 : vector<8x32xf32>, vector<8x32xf32> -> vector<8x64xf32>
    %cst_67 = arith.constant dense<0.000000e+00> : vector<8x128xf32>
    %115 = tpu.matmul %114, %13, %cst_67 {dimension_numbers = #tpu.dot_dimension_numbers<[1], [0], [0], [1], [0, 0, 1, 1], [], []>} : vector<8x64xf32>, vector<64x128xf32>, vector<8x128xf32> -> vector<8x128xf32>
    %116 = arith.addf %115, %16 : vector<8x128xf32>
    %c1_68 = arith.constant 1 : index
    %c0_69 = arith.constant 0 : index
    %c0_70 = arith.constant 0 : index
    %117 = vector.load %arg12[%c1_68, %c0_69, %c0_70] : memref<2x8x32xf32, #tpu.memory_space<vmem>>, vector<1x8x32xf32>
    %118 = vector.shape_cast %117 : vector<1x8x32xf32> to vector<8x32xf32>
    %119 = vector.extract_strided_slice %116 {offsets = [0, 0], sizes = [8, 96], strides = [1, 1]} : vector<8x128xf32> to vector<8x96xf32>
    %120 = arith.negf %119 : vector<8x96xf32>
    %121 = math.exp %120 : vector<8x96xf32>
    %cst_71 = arith.constant 1.000000e+00 : f32
    %122 = vector.broadcast %cst_71 : f32 to vector<8x96xf32>
    %123 = arith.addf %122, %121 : vector<8x96xf32>
    %124 = arith.divf %122, %123 : vector<8x96xf32>
    %125 = vector.extract_strided_slice %116 {offsets = [0, 96], sizes = [8, 32], strides = [1, 1]} : vector<8x128xf32> to vector<8x32xf32>
    %126 = math.tanh %125 : vector<8x32xf32>
    %127 = vector.extract_strided_slice %124 {offsets = [0, 0], sizes = [8, 32], strides = [1, 1]} : vector<8x96xf32> to vector<8x32xf32>
    %128 = vector.extract_strided_slice %124 {offsets = [0, 32], sizes = [8, 32], strides = [1, 1]} : vector<8x96xf32> to vector<8x32xf32>
    %129 = vector.extract_strided_slice %124 {offsets = [0, 64], sizes = [8, 32], strides = [1, 1]} : vector<8x96xf32> to vector<8x32xf32>
    %130 = arith.mulf %128, %118 : vector<8x32xf32>
    %131 = arith.mulf %127, %126 : vector<8x32xf32>
    %132 = arith.addf %130, %131 : vector<8x32xf32>
    %133 = math.tanh %132 : vector<8x32xf32>
    %134 = arith.mulf %129, %133 : vector<8x32xf32>
    %c1_72 = arith.constant 1 : index
    %c0_73 = arith.constant 0 : index
    %c0_74 = arith.constant 0 : index
    %135 = vector.load %arg11[%c1_72, %c0_73, %c0_74] : memref<2x8x32xf32, #tpu.memory_space<vmem>>, vector<1x8x32xf32>
    %136 = vector.shape_cast %135 : vector<1x8x32xf32> to vector<8x32xf32>
    %137 = vector.shape_cast %134 : vector<8x32xf32> to vector<1x8x32xf32>
    tpu.vector_store %arg11[%c1_72, %c0_73, %c0_74], %137 {strides = array<i32>} : memref<2x8x32xf32, #tpu.memory_space<vmem>>, vector<1x8x32xf32>,
    %c1_75 = arith.constant 1 : index
    %c0_76 = arith.constant 0 : index
    %c0_77 = arith.constant 0 : index
    %138 = vector.load %arg12[%c1_75, %c0_76, %c0_77] : memref<2x8x32xf32, #tpu.memory_space<vmem>>, vector<1x8x32xf32>
    %139 = vector.shape_cast %138 : vector<1x8x32xf32> to vector<8x32xf32>
    %140 = vector.shape_cast %132 : vector<8x32xf32> to vector<1x8x32xf32>
    tpu.vector_store %arg12[%c1_75, %c0_76, %c0_77], %140 {strides = array<i32>} : memref<2x8x32xf32, #tpu.memory_space<vmem>>, vector<1x8x32xf32>,
    %141 = arith.index_cast %c1_i32 : i32 to index
    %c0_78 = arith.constant 0 : index
    %c0_79 = arith.constant 0 : index
    %142 = vector.load %arg14[%141, %c0_78, %c0_79] : memref<8x8x32xf32, #tpu.memory_space<vmem>>, vector<1x8x32xf32>
    %143 = vector.shape_cast %142 : vector<1x8x32xf32> to vector<8x32xf32>
    %144 = vector.shape_cast %134 : vector<8x32xf32> to vector<1x8x32xf32>
    tpu.vector_store %arg14[%141, %c0_78, %c0_79], %144 {strides = array<i32>} : memref<8x8x32xf32, #tpu.memory_space<vmem>>, vector<1x8x32xf32>,
    %c2_i32 = arith.constant 2 : i32
    %145 = arith.index_cast %c2_i32 : i32 to index
    %c0_80 = arith.constant 0 : index
    %c0_81 = arith.constant 0 : index
    %146 = vector.load %arg13[%145, %c0_80, %c0_81] : memref<8x8x128xf32, #tpu.memory_space<vmem>>, vector<1x8x128xf32>
    %147 = vector.shape_cast %146 : vector<1x8x128xf32> to vector<8x128xf32>
    %c0_82 = arith.constant 0 : index
    %c0_83 = arith.constant 0 : index
    %c0_84 = arith.constant 0 : index
    %148 = vector.load %arg11[%c0_82, %c0_83, %c0_84] : memref<2x8x32xf32, #tpu.memory_space<vmem>>, vector<1x8x32xf32>
    %149 = vector.shape_cast %148 : vector<1x8x32xf32> to vector<8x32xf32>
    %cst_85 = arith.constant dense<0.000000e+00> : vector<8x128xf32>
    %150 = tpu.matmul %149, %12, %cst_85 {dimension_numbers = #tpu.dot_dimension_numbers<[1], [0], [0], [1], [0, 0, 1, 1], [], []>} : vector<8x32xf32>, vector<32x128xf32>, vector<8x128xf32> -> vector<8x128xf32>
    %151 = arith.addf %147, %150 : vector<8x128xf32>
    %c0_86 = arith.constant 0 : index
    %c0_87 = arith.constant 0 : index
    %c0_88 = arith.constant 0 : index
    %152 = vector.load %arg12[%c0_86, %c0_87, %c0_88] : memref<2x8x32xf32, #tpu.memory_space<vmem>>, vector<1x8x32xf32>
    %153 = vector.shape_cast %152 : vector<1x8x32xf32> to vector<8x32xf32>
    %154 = vector.extract_strided_slice %151 {offsets = [0, 0], sizes = [8, 96], strides = [1, 1]} : vector<8x128xf32> to vector<8x96xf32>
    %155 = arith.negf %154 : vector<8x96xf32>
    %156 = math.exp %155 : vector<8x96xf32>
    %cst_89 = arith.constant 1.000000e+00 : f32
    %157 = vector.broadcast %cst_89 : f32 to vector<8x96xf32>
    %158 = arith.addf %157, %156 : vector<8x96xf32>
    %159 = arith.divf %157, %158 : vector<8x96xf32>
    %160 = vector.extract_strided_slice %151 {offsets = [0, 96], sizes = [8, 32], strides = [1, 1]} : vector<8x128xf32> to vector<8x32xf32>
    %161 = math.tanh %160 : vector<8x32xf32>
    %162 = vector.extract_strided_slice %159 {offsets = [0, 0], sizes = [8, 32], strides = [1, 1]} : vector<8x96xf32> to vector<8x32xf32>
    %163 = vector.extract_strided_slice %159 {offsets = [0, 32], sizes = [8, 32], strides = [1, 1]} : vector<8x96xf32> to vector<8x32xf32>
    %164 = vector.extract_strided_slice %159 {offsets = [0, 64], sizes = [8, 32], strides = [1, 1]} : vector<8x96xf32> to vector<8x32xf32>
    %165 = arith.mulf %163, %153 : vector<8x32xf32>
    %166 = arith.mulf %162, %161 : vector<8x32xf32>
    %167 = arith.addf %165, %166 : vector<8x32xf32>
    %168 = math.tanh %167 : vector<8x32xf32>
    %169 = arith.mulf %164, %168 : vector<8x32xf32>
    %c0_90 = arith.constant 0 : index
    %c0_91 = arith.constant 0 : index
    %c0_92 = arith.constant 0 : index
    %170 = vector.load %arg11[%c0_90, %c0_91, %c0_92] : memref<2x8x32xf32, #tpu.memory_space<vmem>>, vector<1x8x32xf32>
    %171 = vector.shape_cast %170 : vector<1x8x32xf32> to vector<8x32xf32>
    %172 = vector.shape_cast %169 : vector<8x32xf32> to vector<1x8x32xf32>
    tpu.vector_store %arg11[%c0_90, %c0_91, %c0_92], %172 {strides = array<i32>} : memref<2x8x32xf32, #tpu.memory_space<vmem>>, vector<1x8x32xf32>,
    %c0_93 = arith.constant 0 : index
    %c0_94 = arith.constant 0 : index
    %c0_95 = arith.constant 0 : index
    %173 = vector.load %arg12[%c0_93, %c0_94, %c0_95] : memref<2x8x32xf32, #tpu.memory_space<vmem>>, vector<1x8x32xf32>
    %174 = vector.shape_cast %173 : vector<1x8x32xf32> to vector<8x32xf32>
    %175 = vector.shape_cast %167 : vector<8x32xf32> to vector<1x8x32xf32>
    tpu.vector_store %arg12[%c0_93, %c0_94, %c0_95], %175 {strides = array<i32>} : memref<2x8x32xf32, #tpu.memory_space<vmem>>, vector<1x8x32xf32>,
    %c1_96 = arith.constant 1 : index
    %c0_97 = arith.constant 0 : index
    %c0_98 = arith.constant 0 : index
    %176 = vector.load %arg11[%c1_96, %c0_97, %c0_98] : memref<2x8x32xf32, #tpu.memory_space<vmem>>, vector<1x8x32xf32>
    %177 = vector.shape_cast %176 : vector<1x8x32xf32> to vector<8x32xf32>
    %178 = tpu.concatenate %169, %177 in 1 : vector<8x32xf32>, vector<8x32xf32> -> vector<8x64xf32>
    %cst_99 = arith.constant dense<0.000000e+00> : vector<8x128xf32>
    %179 = tpu.matmul %178, %13, %cst_99 {dimension_numbers = #tpu.dot_dimension_numbers<[1], [0], [0], [1], [0, 0, 1, 1], [], []>} : vector<8x64xf32>, vector<64x128xf32>, vector<8x128xf32> -> vector<8x128xf32>
    %180 = arith.addf %179, %16 : vector<8x128xf32>
    %c1_100 = arith.constant 1 : index
    %c0_101 = arith.constant 0 : index
    %c0_102 = arith.constant 0 : index
    %181 = vector.load %arg12[%c1_100, %c0_101, %c0_102] : memref<2x8x32xf32, #tpu.memory_space<vmem>>, vector<1x8x32xf32>
    %182 = vector.shape_cast %181 : vector<1x8x32xf32> to vector<8x32xf32>
    %183 = vector.extract_strided_slice %180 {offsets = [0, 0], sizes = [8, 96], strides = [1, 1]} : vector<8x128xf32> to vector<8x96xf32>
    %184 = arith.negf %183 : vector<8x96xf32>
    %185 = math.exp %184 : vector<8x96xf32>
    %cst_103 = arith.constant 1.000000e+00 : f32
    %186 = vector.broadcast %cst_103 : f32 to vector<8x96xf32>
    %187 = arith.addf %186, %185 : vector<8x96xf32>
    %188 = arith.divf %186, %187 : vector<8x96xf32>
    %189 = vector.extract_strided_slice %180 {offsets = [0, 96], sizes = [8, 32], strides = [1, 1]} : vector<8x128xf32> to vector<8x32xf32>
    %190 = math.tanh %189 : vector<8x32xf32>
    %191 = vector.extract_strided_slice %188 {offsets = [0, 0], sizes = [8, 32], strides = [1, 1]} : vector<8x96xf32> to vector<8x32xf32>
    %192 = vector.extract_strided_slice %188 {offsets = [0, 32], sizes = [8, 32], strides = [1, 1]} : vector<8x96xf32> to vector<8x32xf32>
    %193 = vector.extract_strided_slice %188 {offsets = [0, 64], sizes = [8, 32], strides = [1, 1]} : vector<8x96xf32> to vector<8x32xf32>
    %194 = arith.mulf %192, %182 : vector<8x32xf32>
    %195 = arith.mulf %191, %190 : vector<8x32xf32>
    %196 = arith.addf %194, %195 : vector<8x32xf32>
    %197 = math.tanh %196 : vector<8x32xf32>
    %198 = arith.mulf %193, %197 : vector<8x32xf32>
    %c1_104 = arith.constant 1 : index
    %c0_105 = arith.constant 0 : index
    %c0_106 = arith.constant 0 : index
    %199 = vector.load %arg11[%c1_104, %c0_105, %c0_106] : memref<2x8x32xf32, #tpu.memory_space<vmem>>, vector<1x8x32xf32>
    %200 = vector.shape_cast %199 : vector<1x8x32xf32> to vector<8x32xf32>
    %201 = vector.shape_cast %198 : vector<8x32xf32> to vector<1x8x32xf32>
    tpu.vector_store %arg11[%c1_104, %c0_105, %c0_106], %201 {strides = array<i32>} : memref<2x8x32xf32, #tpu.memory_space<vmem>>, vector<1x8x32xf32>,
    %c1_107 = arith.constant 1 : index
    %c0_108 = arith.constant 0 : index
    %c0_109 = arith.constant 0 : index
    %202 = vector.load %arg12[%c1_107, %c0_108, %c0_109] : memref<2x8x32xf32, #tpu.memory_space<vmem>>, vector<1x8x32xf32>
    %203 = vector.shape_cast %202 : vector<1x8x32xf32> to vector<8x32xf32>
    %204 = vector.shape_cast %196 : vector<8x32xf32> to vector<1x8x32xf32>
    tpu.vector_store %arg12[%c1_107, %c0_108, %c0_109], %204 {strides = array<i32>} : memref<2x8x32xf32, #tpu.memory_space<vmem>>, vector<1x8x32xf32>,
    %205 = arith.index_cast %c2_i32 : i32 to index
    %c0_110 = arith.constant 0 : index
    %c0_111 = arith.constant 0 : index
    %206 = vector.load %arg14[%205, %c0_110, %c0_111] : memref<8x8x32xf32, #tpu.memory_space<vmem>>, vector<1x8x32xf32>
    %207 = vector.shape_cast %206 : vector<1x8x32xf32> to vector<8x32xf32>
    %208 = vector.shape_cast %198 : vector<8x32xf32> to vector<1x8x32xf32>
    tpu.vector_store %arg14[%205, %c0_110, %c0_111], %208 {strides = array<i32>} : memref<8x8x32xf32, #tpu.memory_space<vmem>>, vector<1x8x32xf32>,
    %c3_i32 = arith.constant 3 : i32
    %209 = arith.index_cast %c3_i32 : i32 to index
    %c0_112 = arith.constant 0 : index
    %c0_113 = arith.constant 0 : index
    %210 = vector.load %arg13[%209, %c0_112, %c0_113] : memref<8x8x128xf32, #tpu.memory_space<vmem>>, vector<1x8x128xf32>
    %211 = vector.shape_cast %210 : vector<1x8x128xf32> to vector<8x128xf32>
    %c0_114 = arith.constant 0 : index
    %c0_115 = arith.constant 0 : index
    %c0_116 = arith.constant 0 : index
    %212 = vector.load %arg11[%c0_114, %c0_115, %c0_116] : memref<2x8x32xf32, #tpu.memory_space<vmem>>, vector<1x8x32xf32>
    %213 = vector.shape_cast %212 : vector<1x8x32xf32> to vector<8x32xf32>
    %cst_117 = arith.constant dense<0.000000e+00> : vector<8x128xf32>
    %214 = tpu.matmul %213, %12, %cst_117 {dimension_numbers = #tpu.dot_dimension_numbers<[1], [0], [0], [1], [0, 0, 1, 1], [], []>} : vector<8x32xf32>, vector<32x128xf32>, vector<8x128xf32> -> vector<8x128xf32>
    %215 = arith.addf %211, %214 : vector<8x128xf32>
    %c0_118 = arith.constant 0 : index
    %c0_119 = arith.constant 0 : index
    %c0_120 = arith.constant 0 : index
    %216 = vector.load %arg12[%c0_118, %c0_119, %c0_120] : memref<2x8x32xf32, #tpu.memory_space<vmem>>, vector<1x8x32xf32>
    %217 = vector.shape_cast %216 : vector<1x8x32xf32> to vector<8x32xf32>
    %218 = vector.extract_strided_slice %215 {offsets = [0, 0], sizes = [8, 96], strides = [1, 1]} : vector<8x128xf32> to vector<8x96xf32>
    %219 = arith.negf %218 : vector<8x96xf32>
    %220 = math.exp %219 : vector<8x96xf32>
    %cst_121 = arith.constant 1.000000e+00 : f32
    %221 = vector.broadcast %cst_121 : f32 to vector<8x96xf32>
    %222 = arith.addf %221, %220 : vector<8x96xf32>
    %223 = arith.divf %221, %222 : vector<8x96xf32>
    %224 = vector.extract_strided_slice %215 {offsets = [0, 96], sizes = [8, 32], strides = [1, 1]} : vector<8x128xf32> to vector<8x32xf32>
    %225 = math.tanh %224 : vector<8x32xf32>
    %226 = vector.extract_strided_slice %223 {offsets = [0, 0], sizes = [8, 32], strides = [1, 1]} : vector<8x96xf32> to vector<8x32xf32>
    %227 = vector.extract_strided_slice %223 {offsets = [0, 32], sizes = [8, 32], strides = [1, 1]} : vector<8x96xf32> to vector<8x32xf32>
    %228 = vector.extract_strided_slice %223 {offsets = [0, 64], sizes = [8, 32], strides = [1, 1]} : vector<8x96xf32> to vector<8x32xf32>
    %229 = arith.mulf %227, %217 : vector<8x32xf32>
    %230 = arith.mulf %226, %225 : vector<8x32xf32>
    %231 = arith.addf %229, %230 : vector<8x32xf32>
    %232 = math.tanh %231 : vector<8x32xf32>
    %233 = arith.mulf %228, %232 : vector<8x32xf32>
    %c0_122 = arith.constant 0 : index
    %c0_123 = arith.constant 0 : index
    %c0_124 = arith.constant 0 : index
    %234 = vector.load %arg11[%c0_122, %c0_123, %c0_124] : memref<2x8x32xf32, #tpu.memory_space<vmem>>, vector<1x8x32xf32>
    %235 = vector.shape_cast %234 : vector<1x8x32xf32> to vector<8x32xf32>
    %236 = vector.shape_cast %233 : vector<8x32xf32> to vector<1x8x32xf32>
    tpu.vector_store %arg11[%c0_122, %c0_123, %c0_124], %236 {strides = array<i32>} : memref<2x8x32xf32, #tpu.memory_space<vmem>>, vector<1x8x32xf32>,
    %c0_125 = arith.constant 0 : index
    %c0_126 = arith.constant 0 : index
    %c0_127 = arith.constant 0 : index
    %237 = vector.load %arg12[%c0_125, %c0_126, %c0_127] : memref<2x8x32xf32, #tpu.memory_space<vmem>>, vector<1x8x32xf32>
    %238 = vector.shape_cast %237 : vector<1x8x32xf32> to vector<8x32xf32>
    %239 = vector.shape_cast %231 : vector<8x32xf32> to vector<1x8x32xf32>
    tpu.vector_store %arg12[%c0_125, %c0_126, %c0_127], %239 {strides = array<i32>} : memref<2x8x32xf32, #tpu.memory_space<vmem>>, vector<1x8x32xf32>,
    %c1_128 = arith.constant 1 : index
    %c0_129 = arith.constant 0 : index
    %c0_130 = arith.constant 0 : index
    %240 = vector.load %arg11[%c1_128, %c0_129, %c0_130] : memref<2x8x32xf32, #tpu.memory_space<vmem>>, vector<1x8x32xf32>
    %241 = vector.shape_cast %240 : vector<1x8x32xf32> to vector<8x32xf32>
    %242 = tpu.concatenate %233, %241 in 1 : vector<8x32xf32>, vector<8x32xf32> -> vector<8x64xf32>
    %cst_131 = arith.constant dense<0.000000e+00> : vector<8x128xf32>
    %243 = tpu.matmul %242, %13, %cst_131 {dimension_numbers = #tpu.dot_dimension_numbers<[1], [0], [0], [1], [0, 0, 1, 1], [], []>} : vector<8x64xf32>, vector<64x128xf32>, vector<8x128xf32> -> vector<8x128xf32>
    %244 = arith.addf %243, %16 : vector<8x128xf32>
    %c1_132 = arith.constant 1 : index
    %c0_133 = arith.constant 0 : index
    %c0_134 = arith.constant 0 : index
    %245 = vector.load %arg12[%c1_132, %c0_133, %c0_134] : memref<2x8x32xf32, #tpu.memory_space<vmem>>, vector<1x8x32xf32>
    %246 = vector.shape_cast %245 : vector<1x8x32xf32> to vector<8x32xf32>
    %247 = vector.extract_strided_slice %244 {offsets = [0, 0], sizes = [8, 96], strides = [1, 1]} : vector<8x128xf32> to vector<8x96xf32>
    %248 = arith.negf %247 : vector<8x96xf32>
    %249 = math.exp %248 : vector<8x96xf32>
    %cst_135 = arith.constant 1.000000e+00 : f32
    %250 = vector.broadcast %cst_135 : f32 to vector<8x96xf32>
    %251 = arith.addf %250, %249 : vector<8x96xf32>
    %252 = arith.divf %250, %251 : vector<8x96xf32>
    %253 = vector.extract_strided_slice %244 {offsets = [0, 96], sizes = [8, 32], strides = [1, 1]} : vector<8x128xf32> to vector<8x32xf32>
    %254 = math.tanh %253 : vector<8x32xf32>
    %255 = vector.extract_strided_slice %252 {offsets = [0, 0], sizes = [8, 32], strides = [1, 1]} : vector<8x96xf32> to vector<8x32xf32>
    %256 = vector.extract_strided_slice %252 {offsets = [0, 32], sizes = [8, 32], strides = [1, 1]} : vector<8x96xf32> to vector<8x32xf32>
    %257 = vector.extract_strided_slice %252 {offsets = [0, 64], sizes = [8, 32], strides = [1, 1]} : vector<8x96xf32> to vector<8x32xf32>
    %258 = arith.mulf %256, %246 : vector<8x32xf32>
    %259 = arith.mulf %255, %254 : vector<8x32xf32>
    %260 = arith.addf %258, %259 : vector<8x32xf32>
    %261 = math.tanh %260 : vector<8x32xf32>
    %262 = arith.mulf %257, %261 : vector<8x32xf32>
    %c1_136 = arith.constant 1 : index
    %c0_137 = arith.constant 0 : index
    %c0_138 = arith.constant 0 : index
    %263 = vector.load %arg11[%c1_136, %c0_137, %c0_138] : memref<2x8x32xf32, #tpu.memory_space<vmem>>, vector<1x8x32xf32>
    %264 = vector.shape_cast %263 : vector<1x8x32xf32> to vector<8x32xf32>
    %265 = vector.shape_cast %262 : vector<8x32xf32> to vector<1x8x32xf32>
    tpu.vector_store %arg11[%c1_136, %c0_137, %c0_138], %265 {strides = array<i32>} : memref<2x8x32xf32, #tpu.memory_space<vmem>>, vector<1x8x32xf32>,
    %c1_139 = arith.constant 1 : index
    %c0_140 = arith.constant 0 : index
    %c0_141 = arith.constant 0 : index
    %266 = vector.load %arg12[%c1_139, %c0_140, %c0_141] : memref<2x8x32xf32, #tpu.memory_space<vmem>>, vector<1x8x32xf32>
    %267 = vector.shape_cast %266 : vector<1x8x32xf32> to vector<8x32xf32>
    %268 = vector.shape_cast %260 : vector<8x32xf32> to vector<1x8x32xf32>
    tpu.vector_store %arg12[%c1_139, %c0_140, %c0_141], %268 {strides = array<i32>} : memref<2x8x32xf32, #tpu.memory_space<vmem>>, vector<1x8x32xf32>,
    %269 = arith.index_cast %c3_i32 : i32 to index
    %c0_142 = arith.constant 0 : index
    %c0_143 = arith.constant 0 : index
    %270 = vector.load %arg14[%269, %c0_142, %c0_143] : memref<8x8x32xf32, #tpu.memory_space<vmem>>, vector<1x8x32xf32>
    %271 = vector.shape_cast %270 : vector<1x8x32xf32> to vector<8x32xf32>
    %272 = vector.shape_cast %262 : vector<8x32xf32> to vector<1x8x32xf32>
    tpu.vector_store %arg14[%269, %c0_142, %c0_143], %272 {strides = array<i32>} : memref<8x8x32xf32, #tpu.memory_space<vmem>>, vector<1x8x32xf32>,
    %c4_i32 = arith.constant 4 : i32
    %273 = arith.index_cast %c4_i32 : i32 to index
    %c0_144 = arith.constant 0 : index
    %c0_145 = arith.constant 0 : index
    %274 = vector.load %arg13[%273, %c0_144, %c0_145] : memref<8x8x128xf32, #tpu.memory_space<vmem>>, vector<1x8x128xf32>
    %275 = vector.shape_cast %274 : vector<1x8x128xf32> to vector<8x128xf32>
    %c0_146 = arith.constant 0 : index
    %c0_147 = arith.constant 0 : index
    %c0_148 = arith.constant 0 : index
    %276 = vector.load %arg11[%c0_146, %c0_147, %c0_148] : memref<2x8x32xf32, #tpu.memory_space<vmem>>, vector<1x8x32xf32>
    %277 = vector.shape_cast %276 : vector<1x8x32xf32> to vector<8x32xf32>
    %cst_149 = arith.constant dense<0.000000e+00> : vector<8x128xf32>
    %278 = tpu.matmul %277, %12, %cst_149 {dimension_numbers = #tpu.dot_dimension_numbers<[1], [0], [0], [1], [0, 0, 1, 1], [], []>} : vector<8x32xf32>, vector<32x128xf32>, vector<8x128xf32> -> vector<8x128xf32>
    %279 = arith.addf %275, %278 : vector<8x128xf32>
    %c0_150 = arith.constant 0 : index
    %c0_151 = arith.constant 0 : index
    %c0_152 = arith.constant 0 : index
    %280 = vector.load %arg12[%c0_150, %c0_151, %c0_152] : memref<2x8x32xf32, #tpu.memory_space<vmem>>, vector<1x8x32xf32>
    %281 = vector.shape_cast %280 : vector<1x8x32xf32> to vector<8x32xf32>
    %282 = vector.extract_strided_slice %279 {offsets = [0, 0], sizes = [8, 96], strides = [1, 1]} : vector<8x128xf32> to vector<8x96xf32>
    %283 = arith.negf %282 : vector<8x96xf32>
    %284 = math.exp %283 : vector<8x96xf32>
    %cst_153 = arith.constant 1.000000e+00 : f32
    %285 = vector.broadcast %cst_153 : f32 to vector<8x96xf32>
    %286 = arith.addf %285, %284 : vector<8x96xf32>
    %287 = arith.divf %285, %286 : vector<8x96xf32>
    %288 = vector.extract_strided_slice %279 {offsets = [0, 96], sizes = [8, 32], strides = [1, 1]} : vector<8x128xf32> to vector<8x32xf32>
    %289 = math.tanh %288 : vector<8x32xf32>
    %290 = vector.extract_strided_slice %287 {offsets = [0, 0], sizes = [8, 32], strides = [1, 1]} : vector<8x96xf32> to vector<8x32xf32>
    %291 = vector.extract_strided_slice %287 {offsets = [0, 32], sizes = [8, 32], strides = [1, 1]} : vector<8x96xf32> to vector<8x32xf32>
    %292 = vector.extract_strided_slice %287 {offsets = [0, 64], sizes = [8, 32], strides = [1, 1]} : vector<8x96xf32> to vector<8x32xf32>
    %293 = arith.mulf %291, %281 : vector<8x32xf32>
    %294 = arith.mulf %290, %289 : vector<8x32xf32>
    %295 = arith.addf %293, %294 : vector<8x32xf32>
    %296 = math.tanh %295 : vector<8x32xf32>
    %297 = arith.mulf %292, %296 : vector<8x32xf32>
    %c0_154 = arith.constant 0 : index
    %c0_155 = arith.constant 0 : index
    %c0_156 = arith.constant 0 : index
    %298 = vector.load %arg11[%c0_154, %c0_155, %c0_156] : memref<2x8x32xf32, #tpu.memory_space<vmem>>, vector<1x8x32xf32>
    %299 = vector.shape_cast %298 : vector<1x8x32xf32> to vector<8x32xf32>
    %300 = vector.shape_cast %297 : vector<8x32xf32> to vector<1x8x32xf32>
    tpu.vector_store %arg11[%c0_154, %c0_155, %c0_156], %300 {strides = array<i32>} : memref<2x8x32xf32, #tpu.memory_space<vmem>>, vector<1x8x32xf32>,
    %c0_157 = arith.constant 0 : index
    %c0_158 = arith.constant 0 : index
    %c0_159 = arith.constant 0 : index
    %301 = vector.load %arg12[%c0_157, %c0_158, %c0_159] : memref<2x8x32xf32, #tpu.memory_space<vmem>>, vector<1x8x32xf32>
    %302 = vector.shape_cast %301 : vector<1x8x32xf32> to vector<8x32xf32>
    %303 = vector.shape_cast %295 : vector<8x32xf32> to vector<1x8x32xf32>
    tpu.vector_store %arg12[%c0_157, %c0_158, %c0_159], %303 {strides = array<i32>} : memref<2x8x32xf32, #tpu.memory_space<vmem>>, vector<1x8x32xf32>,
    %c1_160 = arith.constant 1 : index
    %c0_161 = arith.constant 0 : index
    %c0_162 = arith.constant 0 : index
    %304 = vector.load %arg11[%c1_160, %c0_161, %c0_162] : memref<2x8x32xf32, #tpu.memory_space<vmem>>, vector<1x8x32xf32>
    %305 = vector.shape_cast %304 : vector<1x8x32xf32> to vector<8x32xf32>
    %306 = tpu.concatenate %297, %305 in 1 : vector<8x32xf32>, vector<8x32xf32> -> vector<8x64xf32>
    %cst_163 = arith.constant dense<0.000000e+00> : vector<8x128xf32>
    %307 = tpu.matmul %306, %13, %cst_163 {dimension_numbers = #tpu.dot_dimension_numbers<[1], [0], [0], [1], [0, 0, 1, 1], [], []>} : vector<8x64xf32>, vector<64x128xf32>, vector<8x128xf32> -> vector<8x128xf32>
    %308 = arith.addf %307, %16 : vector<8x128xf32>
    %c1_164 = arith.constant 1 : index
    %c0_165 = arith.constant 0 : index
    %c0_166 = arith.constant 0 : index
    %309 = vector.load %arg12[%c1_164, %c0_165, %c0_166] : memref<2x8x32xf32, #tpu.memory_space<vmem>>, vector<1x8x32xf32>
    %310 = vector.shape_cast %309 : vector<1x8x32xf32> to vector<8x32xf32>
    %311 = vector.extract_strided_slice %308 {offsets = [0, 0], sizes = [8, 96], strides = [1, 1]} : vector<8x128xf32> to vector<8x96xf32>
    %312 = arith.negf %311 : vector<8x96xf32>
    %313 = math.exp %312 : vector<8x96xf32>
    %cst_167 = arith.constant 1.000000e+00 : f32
    %314 = vector.broadcast %cst_167 : f32 to vector<8x96xf32>
    %315 = arith.addf %314, %313 : vector<8x96xf32>
    %316 = arith.divf %314, %315 : vector<8x96xf32>
    %317 = vector.extract_strided_slice %308 {offsets = [0, 96], sizes = [8, 32], strides = [1, 1]} : vector<8x128xf32> to vector<8x32xf32>
    %318 = math.tanh %317 : vector<8x32xf32>
    %319 = vector.extract_strided_slice %316 {offsets = [0, 0], sizes = [8, 32], strides = [1, 1]} : vector<8x96xf32> to vector<8x32xf32>
    %320 = vector.extract_strided_slice %316 {offsets = [0, 32], sizes = [8, 32], strides = [1, 1]} : vector<8x96xf32> to vector<8x32xf32>
    %321 = vector.extract_strided_slice %316 {offsets = [0, 64], sizes = [8, 32], strides = [1, 1]} : vector<8x96xf32> to vector<8x32xf32>
    %322 = arith.mulf %320, %310 : vector<8x32xf32>
    %323 = arith.mulf %319, %318 : vector<8x32xf32>
    %324 = arith.addf %322, %323 : vector<8x32xf32>
    %325 = math.tanh %324 : vector<8x32xf32>
    %326 = arith.mulf %321, %325 : vector<8x32xf32>
    %c1_168 = arith.constant 1 : index
    %c0_169 = arith.constant 0 : index
    %c0_170 = arith.constant 0 : index
    %327 = vector.load %arg11[%c1_168, %c0_169, %c0_170] : memref<2x8x32xf32, #tpu.memory_space<vmem>>, vector<1x8x32xf32>
    %328 = vector.shape_cast %327 : vector<1x8x32xf32> to vector<8x32xf32>
    %329 = vector.shape_cast %326 : vector<8x32xf32> to vector<1x8x32xf32>
    tpu.vector_store %arg11[%c1_168, %c0_169, %c0_170], %329 {strides = array<i32>} : memref<2x8x32xf32, #tpu.memory_space<vmem>>, vector<1x8x32xf32>,
    %c1_171 = arith.constant 1 : index
    %c0_172 = arith.constant 0 : index
    %c0_173 = arith.constant 0 : index
    %330 = vector.load %arg12[%c1_171, %c0_172, %c0_173] : memref<2x8x32xf32, #tpu.memory_space<vmem>>, vector<1x8x32xf32>
    %331 = vector.shape_cast %330 : vector<1x8x32xf32> to vector<8x32xf32>
    %332 = vector.shape_cast %324 : vector<8x32xf32> to vector<1x8x32xf32>
    tpu.vector_store %arg12[%c1_171, %c0_172, %c0_173], %332 {strides = array<i32>} : memref<2x8x32xf32, #tpu.memory_space<vmem>>, vector<1x8x32xf32>,
    %333 = arith.index_cast %c4_i32 : i32 to index
    %c0_174 = arith.constant 0 : index
    %c0_175 = arith.constant 0 : index
    %334 = vector.load %arg14[%333, %c0_174, %c0_175] : memref<8x8x32xf32, #tpu.memory_space<vmem>>, vector<1x8x32xf32>
    %335 = vector.shape_cast %334 : vector<1x8x32xf32> to vector<8x32xf32>
    %336 = vector.shape_cast %326 : vector<8x32xf32> to vector<1x8x32xf32>
    tpu.vector_store %arg14[%333, %c0_174, %c0_175], %336 {strides = array<i32>} : memref<8x8x32xf32, #tpu.memory_space<vmem>>, vector<1x8x32xf32>,
    %c5_i32 = arith.constant 5 : i32
    %337 = arith.index_cast %c5_i32 : i32 to index
    %c0_176 = arith.constant 0 : index
    %c0_177 = arith.constant 0 : index
    %338 = vector.load %arg13[%337, %c0_176, %c0_177] : memref<8x8x128xf32, #tpu.memory_space<vmem>>, vector<1x8x128xf32>
    %339 = vector.shape_cast %338 : vector<1x8x128xf32> to vector<8x128xf32>
    %c0_178 = arith.constant 0 : index
    %c0_179 = arith.constant 0 : index
    %c0_180 = arith.constant 0 : index
    %340 = vector.load %arg11[%c0_178, %c0_179, %c0_180] : memref<2x8x32xf32, #tpu.memory_space<vmem>>, vector<1x8x32xf32>
    %341 = vector.shape_cast %340 : vector<1x8x32xf32> to vector<8x32xf32>
    %cst_181 = arith.constant dense<0.000000e+00> : vector<8x128xf32>
    %342 = tpu.matmul %341, %12, %cst_181 {dimension_numbers = #tpu.dot_dimension_numbers<[1], [0], [0], [1], [0, 0, 1, 1], [], []>} : vector<8x32xf32>, vector<32x128xf32>, vector<8x128xf32> -> vector<8x128xf32>
    %343 = arith.addf %339, %342 : vector<8x128xf32>
    %c0_182 = arith.constant 0 : index
    %c0_183 = arith.constant 0 : index
    %c0_184 = arith.constant 0 : index
    %344 = vector.load %arg12[%c0_182, %c0_183, %c0_184] : memref<2x8x32xf32, #tpu.memory_space<vmem>>, vector<1x8x32xf32>
    %345 = vector.shape_cast %344 : vector<1x8x32xf32> to vector<8x32xf32>
    %346 = vector.extract_strided_slice %343 {offsets = [0, 0], sizes = [8, 96], strides = [1, 1]} : vector<8x128xf32> to vector<8x96xf32>
    %347 = arith.negf %346 : vector<8x96xf32>
    %348 = math.exp %347 : vector<8x96xf32>
    %cst_185 = arith.constant 1.000000e+00 : f32
    %349 = vector.broadcast %cst_185 : f32 to vector<8x96xf32>
    %350 = arith.addf %349, %348 : vector<8x96xf32>
    %351 = arith.divf %349, %350 : vector<8x96xf32>
    %352 = vector.extract_strided_slice %343 {offsets = [0, 96], sizes = [8, 32], strides = [1, 1]} : vector<8x128xf32> to vector<8x32xf32>
    %353 = math.tanh %352 : vector<8x32xf32>
    %354 = vector.extract_strided_slice %351 {offsets = [0, 0], sizes = [8, 32], strides = [1, 1]} : vector<8x96xf32> to vector<8x32xf32>
    %355 = vector.extract_strided_slice %351 {offsets = [0, 32], sizes = [8, 32], strides = [1, 1]} : vector<8x96xf32> to vector<8x32xf32>
    %356 = vector.extract_strided_slice %351 {offsets = [0, 64], sizes = [8, 32], strides = [1, 1]} : vector<8x96xf32> to vector<8x32xf32>
    %357 = arith.mulf %355, %345 : vector<8x32xf32>
    %358 = arith.mulf %354, %353 : vector<8x32xf32>
    %359 = arith.addf %357, %358 : vector<8x32xf32>
    %360 = math.tanh %359 : vector<8x32xf32>
    %361 = arith.mulf %356, %360 : vector<8x32xf32>
    %c0_186 = arith.constant 0 : index
    %c0_187 = arith.constant 0 : index
    %c0_188 = arith.constant 0 : index
    %362 = vector.load %arg11[%c0_186, %c0_187, %c0_188] : memref<2x8x32xf32, #tpu.memory_space<vmem>>, vector<1x8x32xf32>
    %363 = vector.shape_cast %362 : vector<1x8x32xf32> to vector<8x32xf32>
    %364 = vector.shape_cast %361 : vector<8x32xf32> to vector<1x8x32xf32>
    tpu.vector_store %arg11[%c0_186, %c0_187, %c0_188], %364 {strides = array<i32>} : memref<2x8x32xf32, #tpu.memory_space<vmem>>, vector<1x8x32xf32>,
    %c0_189 = arith.constant 0 : index
    %c0_190 = arith.constant 0 : index
    %c0_191 = arith.constant 0 : index
    %365 = vector.load %arg12[%c0_189, %c0_190, %c0_191] : memref<2x8x32xf32, #tpu.memory_space<vmem>>, vector<1x8x32xf32>
    %366 = vector.shape_cast %365 : vector<1x8x32xf32> to vector<8x32xf32>
    %367 = vector.shape_cast %359 : vector<8x32xf32> to vector<1x8x32xf32>
    tpu.vector_store %arg12[%c0_189, %c0_190, %c0_191], %367 {strides = array<i32>} : memref<2x8x32xf32, #tpu.memory_space<vmem>>, vector<1x8x32xf32>,
    %c1_192 = arith.constant 1 : index
    %c0_193 = arith.constant 0 : index
    %c0_194 = arith.constant 0 : index
    %368 = vector.load %arg11[%c1_192, %c0_193, %c0_194] : memref<2x8x32xf32, #tpu.memory_space<vmem>>, vector<1x8x32xf32>
    %369 = vector.shape_cast %368 : vector<1x8x32xf32> to vector<8x32xf32>
    %370 = tpu.concatenate %361, %369 in 1 : vector<8x32xf32>, vector<8x32xf32> -> vector<8x64xf32>
    %cst_195 = arith.constant dense<0.000000e+00> : vector<8x128xf32>
    %371 = tpu.matmul %370, %13, %cst_195 {dimension_numbers = #tpu.dot_dimension_numbers<[1], [0], [0], [1], [0, 0, 1, 1], [], []>} : vector<8x64xf32>, vector<64x128xf32>, vector<8x128xf32> -> vector<8x128xf32>
    %372 = arith.addf %371, %16 : vector<8x128xf32>
    %c1_196 = arith.constant 1 : index
    %c0_197 = arith.constant 0 : index
    %c0_198 = arith.constant 0 : index
    %373 = vector.load %arg12[%c1_196, %c0_197, %c0_198] : memref<2x8x32xf32, #tpu.memory_space<vmem>>, vector<1x8x32xf32>
    %374 = vector.shape_cast %373 : vector<1x8x32xf32> to vector<8x32xf32>
    %375 = vector.extract_strided_slice %372 {offsets = [0, 0], sizes = [8, 96], strides = [1, 1]} : vector<8x128xf32> to vector<8x96xf32>
    %376 = arith.negf %375 : vector<8x96xf32>
    %377 = math.exp %376 : vector<8x96xf32>
    %cst_199 = arith.constant 1.000000e+00 : f32
    %378 = vector.broadcast %cst_199 : f32 to vector<8x96xf32>
    %379 = arith.addf %378, %377 : vector<8x96xf32>
    %380 = arith.divf %378, %379 : vector<8x96xf32>
    %381 = vector.extract_strided_slice %372 {offsets = [0, 96], sizes = [8, 32], strides = [1, 1]} : vector<8x128xf32> to vector<8x32xf32>
    %382 = math.tanh %381 : vector<8x32xf32>
    %383 = vector.extract_strided_slice %380 {offsets = [0, 0], sizes = [8, 32], strides = [1, 1]} : vector<8x96xf32> to vector<8x32xf32>
    %384 = vector.extract_strided_slice %380 {offsets = [0, 32], sizes = [8, 32], strides = [1, 1]} : vector<8x96xf32> to vector<8x32xf32>
    %385 = vector.extract_strided_slice %380 {offsets = [0, 64], sizes = [8, 32], strides = [1, 1]} : vector<8x96xf32> to vector<8x32xf32>
    %386 = arith.mulf %384, %374 : vector<8x32xf32>
    %387 = arith.mulf %383, %382 : vector<8x32xf32>
    %388 = arith.addf %386, %387 : vector<8x32xf32>
    %389 = math.tanh %388 : vector<8x32xf32>
    %390 = arith.mulf %385, %389 : vector<8x32xf32>
    %c1_200 = arith.constant 1 : index
    %c0_201 = arith.constant 0 : index
    %c0_202 = arith.constant 0 : index
    %391 = vector.load %arg11[%c1_200, %c0_201, %c0_202] : memref<2x8x32xf32, #tpu.memory_space<vmem>>, vector<1x8x32xf32>
    %392 = vector.shape_cast %391 : vector<1x8x32xf32> to vector<8x32xf32>
    %393 = vector.shape_cast %390 : vector<8x32xf32> to vector<1x8x32xf32>
    tpu.vector_store %arg11[%c1_200, %c0_201, %c0_202], %393 {strides = array<i32>} : memref<2x8x32xf32, #tpu.memory_space<vmem>>, vector<1x8x32xf32>,
    %c1_203 = arith.constant 1 : index
    %c0_204 = arith.constant 0 : index
    %c0_205 = arith.constant 0 : index
    %394 = vector.load %arg12[%c1_203, %c0_204, %c0_205] : memref<2x8x32xf32, #tpu.memory_space<vmem>>, vector<1x8x32xf32>
    %395 = vector.shape_cast %394 : vector<1x8x32xf32> to vector<8x32xf32>
    %396 = vector.shape_cast %388 : vector<8x32xf32> to vector<1x8x32xf32>
    tpu.vector_store %arg12[%c1_203, %c0_204, %c0_205], %396 {strides = array<i32>} : memref<2x8x32xf32, #tpu.memory_space<vmem>>, vector<1x8x32xf32>,
    %397 = arith.index_cast %c5_i32 : i32 to index
    %c0_206 = arith.constant 0 : index
    %c0_207 = arith.constant 0 : index
    %398 = vector.load %arg14[%397, %c0_206, %c0_207] : memref<8x8x32xf32, #tpu.memory_space<vmem>>, vector<1x8x32xf32>
    %399 = vector.shape_cast %398 : vector<1x8x32xf32> to vector<8x32xf32>
    %400 = vector.shape_cast %390 : vector<8x32xf32> to vector<1x8x32xf32>
    tpu.vector_store %arg14[%397, %c0_206, %c0_207], %400 {strides = array<i32>} : memref<8x8x32xf32, #tpu.memory_space<vmem>>, vector<1x8x32xf32>,
    %c6_i32 = arith.constant 6 : i32
    %401 = arith.index_cast %c6_i32 : i32 to index
    %c0_208 = arith.constant 0 : index
    %c0_209 = arith.constant 0 : index
    %402 = vector.load %arg13[%401, %c0_208, %c0_209] : memref<8x8x128xf32, #tpu.memory_space<vmem>>, vector<1x8x128xf32>
    %403 = vector.shape_cast %402 : vector<1x8x128xf32> to vector<8x128xf32>
    %c0_210 = arith.constant 0 : index
    %c0_211 = arith.constant 0 : index
    %c0_212 = arith.constant 0 : index
    %404 = vector.load %arg11[%c0_210, %c0_211, %c0_212] : memref<2x8x32xf32, #tpu.memory_space<vmem>>, vector<1x8x32xf32>
    %405 = vector.shape_cast %404 : vector<1x8x32xf32> to vector<8x32xf32>
    %cst_213 = arith.constant dense<0.000000e+00> : vector<8x128xf32>
    %406 = tpu.matmul %405, %12, %cst_213 {dimension_numbers = #tpu.dot_dimension_numbers<[1], [0], [0], [1], [0, 0, 1, 1], [], []>} : vector<8x32xf32>, vector<32x128xf32>, vector<8x128xf32> -> vector<8x128xf32>
    %407 = arith.addf %403, %406 : vector<8x128xf32>
    %c0_214 = arith.constant 0 : index
    %c0_215 = arith.constant 0 : index
    %c0_216 = arith.constant 0 : index
    %408 = vector.load %arg12[%c0_214, %c0_215, %c0_216] : memref<2x8x32xf32, #tpu.memory_space<vmem>>, vector<1x8x32xf32>
    %409 = vector.shape_cast %408 : vector<1x8x32xf32> to vector<8x32xf32>
    %410 = vector.extract_strided_slice %407 {offsets = [0, 0], sizes = [8, 96], strides = [1, 1]} : vector<8x128xf32> to vector<8x96xf32>
    %411 = arith.negf %410 : vector<8x96xf32>
    %412 = math.exp %411 : vector<8x96xf32>
    %cst_217 = arith.constant 1.000000e+00 : f32
    %413 = vector.broadcast %cst_217 : f32 to vector<8x96xf32>
    %414 = arith.addf %413, %412 : vector<8x96xf32>
    %415 = arith.divf %413, %414 : vector<8x96xf32>
    %416 = vector.extract_strided_slice %407 {offsets = [0, 96], sizes = [8, 32], strides = [1, 1]} : vector<8x128xf32> to vector<8x32xf32>
    %417 = math.tanh %416 : vector<8x32xf32>
    %418 = vector.extract_strided_slice %415 {offsets = [0, 0], sizes = [8, 32], strides = [1, 1]} : vector<8x96xf32> to vector<8x32xf32>
    %419 = vector.extract_strided_slice %415 {offsets = [0, 32], sizes = [8, 32], strides = [1, 1]} : vector<8x96xf32> to vector<8x32xf32>
    %420 = vector.extract_strided_slice %415 {offsets = [0, 64], sizes = [8, 32], strides = [1, 1]} : vector<8x96xf32> to vector<8x32xf32>
    %421 = arith.mulf %419, %409 : vector<8x32xf32>
    %422 = arith.mulf %418, %417 : vector<8x32xf32>
    %423 = arith.addf %421, %422 : vector<8x32xf32>
    %424 = math.tanh %423 : vector<8x32xf32>
    %425 = arith.mulf %420, %424 : vector<8x32xf32>
    %c0_218 = arith.constant 0 : index
    %c0_219 = arith.constant 0 : index
    %c0_220 = arith.constant 0 : index
    %426 = vector.load %arg11[%c0_218, %c0_219, %c0_220] : memref<2x8x32xf32, #tpu.memory_space<vmem>>, vector<1x8x32xf32>
    %427 = vector.shape_cast %426 : vector<1x8x32xf32> to vector<8x32xf32>
    %428 = vector.shape_cast %425 : vector<8x32xf32> to vector<1x8x32xf32>
    tpu.vector_store %arg11[%c0_218, %c0_219, %c0_220], %428 {strides = array<i32>} : memref<2x8x32xf32, #tpu.memory_space<vmem>>, vector<1x8x32xf32>,
    %c0_221 = arith.constant 0 : index
    %c0_222 = arith.constant 0 : index
    %c0_223 = arith.constant 0 : index
    %429 = vector.load %arg12[%c0_221, %c0_222, %c0_223] : memref<2x8x32xf32, #tpu.memory_space<vmem>>, vector<1x8x32xf32>
    %430 = vector.shape_cast %429 : vector<1x8x32xf32> to vector<8x32xf32>
    %431 = vector.shape_cast %423 : vector<8x32xf32> to vector<1x8x32xf32>
    tpu.vector_store %arg12[%c0_221, %c0_222, %c0_223], %431 {strides = array<i32>} : memref<2x8x32xf32, #tpu.memory_space<vmem>>, vector<1x8x32xf32>,
    %c1_224 = arith.constant 1 : index
    %c0_225 = arith.constant 0 : index
    %c0_226 = arith.constant 0 : index
    %432 = vector.load %arg11[%c1_224, %c0_225, %c0_226] : memref<2x8x32xf32, #tpu.memory_space<vmem>>, vector<1x8x32xf32>
    %433 = vector.shape_cast %432 : vector<1x8x32xf32> to vector<8x32xf32>
    %434 = tpu.concatenate %425, %433 in 1 : vector<8x32xf32>, vector<8x32xf32> -> vector<8x64xf32>
    %cst_227 = arith.constant dense<0.000000e+00> : vector<8x128xf32>
    %435 = tpu.matmul %434, %13, %cst_227 {dimension_numbers = #tpu.dot_dimension_numbers<[1], [0], [0], [1], [0, 0, 1, 1], [], []>} : vector<8x64xf32>, vector<64x128xf32>, vector<8x128xf32> -> vector<8x128xf32>
    %436 = arith.addf %435, %16 : vector<8x128xf32>
    %c1_228 = arith.constant 1 : index
    %c0_229 = arith.constant 0 : index
    %c0_230 = arith.constant 0 : index
    %437 = vector.load %arg12[%c1_228, %c0_229, %c0_230] : memref<2x8x32xf32, #tpu.memory_space<vmem>>, vector<1x8x32xf32>
    %438 = vector.shape_cast %437 : vector<1x8x32xf32> to vector<8x32xf32>
    %439 = vector.extract_strided_slice %436 {offsets = [0, 0], sizes = [8, 96], strides = [1, 1]} : vector<8x128xf32> to vector<8x96xf32>
    %440 = arith.negf %439 : vector<8x96xf32>
    %441 = math.exp %440 : vector<8x96xf32>
    %cst_231 = arith.constant 1.000000e+00 : f32
    %442 = vector.broadcast %cst_231 : f32 to vector<8x96xf32>
    %443 = arith.addf %442, %441 : vector<8x96xf32>
    %444 = arith.divf %442, %443 : vector<8x96xf32>
    %445 = vector.extract_strided_slice %436 {offsets = [0, 96], sizes = [8, 32], strides = [1, 1]} : vector<8x128xf32> to vector<8x32xf32>
    %446 = math.tanh %445 : vector<8x32xf32>
    %447 = vector.extract_strided_slice %444 {offsets = [0, 0], sizes = [8, 32], strides = [1, 1]} : vector<8x96xf32> to vector<8x32xf32>
    %448 = vector.extract_strided_slice %444 {offsets = [0, 32], sizes = [8, 32], strides = [1, 1]} : vector<8x96xf32> to vector<8x32xf32>
    %449 = vector.extract_strided_slice %444 {offsets = [0, 64], sizes = [8, 32], strides = [1, 1]} : vector<8x96xf32> to vector<8x32xf32>
    %450 = arith.mulf %448, %438 : vector<8x32xf32>
    %451 = arith.mulf %447, %446 : vector<8x32xf32>
    %452 = arith.addf %450, %451 : vector<8x32xf32>
    %453 = math.tanh %452 : vector<8x32xf32>
    %454 = arith.mulf %449, %453 : vector<8x32xf32>
    %c1_232 = arith.constant 1 : index
    %c0_233 = arith.constant 0 : index
    %c0_234 = arith.constant 0 : index
    %455 = vector.load %arg11[%c1_232, %c0_233, %c0_234] : memref<2x8x32xf32, #tpu.memory_space<vmem>>, vector<1x8x32xf32>
    %456 = vector.shape_cast %455 : vector<1x8x32xf32> to vector<8x32xf32>
    %457 = vector.shape_cast %454 : vector<8x32xf32> to vector<1x8x32xf32>
    tpu.vector_store %arg11[%c1_232, %c0_233, %c0_234], %457 {strides = array<i32>} : memref<2x8x32xf32, #tpu.memory_space<vmem>>, vector<1x8x32xf32>,
    %c1_235 = arith.constant 1 : index
    %c0_236 = arith.constant 0 : index
    %c0_237 = arith.constant 0 : index
    %458 = vector.load %arg12[%c1_235, %c0_236, %c0_237] : memref<2x8x32xf32, #tpu.memory_space<vmem>>, vector<1x8x32xf32>
    %459 = vector.shape_cast %458 : vector<1x8x32xf32> to vector<8x32xf32>
    %460 = vector.shape_cast %452 : vector<8x32xf32> to vector<1x8x32xf32>
    tpu.vector_store %arg12[%c1_235, %c0_236, %c0_237], %460 {strides = array<i32>} : memref<2x8x32xf32, #tpu.memory_space<vmem>>, vector<1x8x32xf32>,
    %461 = arith.index_cast %c6_i32 : i32 to index
    %c0_238 = arith.constant 0 : index
    %c0_239 = arith.constant 0 : index
    %462 = vector.load %arg14[%461, %c0_238, %c0_239] : memref<8x8x32xf32, #tpu.memory_space<vmem>>, vector<1x8x32xf32>
    %463 = vector.shape_cast %462 : vector<1x8x32xf32> to vector<8x32xf32>
    %464 = vector.shape_cast %454 : vector<8x32xf32> to vector<1x8x32xf32>
    tpu.vector_store %arg14[%461, %c0_238, %c0_239], %464 {strides = array<i32>} : memref<8x8x32xf32, #tpu.memory_space<vmem>>, vector<1x8x32xf32>,
    %c7_i32 = arith.constant 7 : i32
    %465 = arith.index_cast %c7_i32 : i32 to index
    %c0_240 = arith.constant 0 : index
    %c0_241 = arith.constant 0 : index
    %466 = vector.load %arg13[%465, %c0_240, %c0_241] : memref<8x8x128xf32, #tpu.memory_space<vmem>>, vector<1x8x128xf32>
    %467 = vector.shape_cast %466 : vector<1x8x128xf32> to vector<8x128xf32>
    %c0_242 = arith.constant 0 : index
    %c0_243 = arith.constant 0 : index
    %c0_244 = arith.constant 0 : index
    %468 = vector.load %arg11[%c0_242, %c0_243, %c0_244] : memref<2x8x32xf32, #tpu.memory_space<vmem>>, vector<1x8x32xf32>
    %469 = vector.shape_cast %468 : vector<1x8x32xf32> to vector<8x32xf32>
    %cst_245 = arith.constant dense<0.000000e+00> : vector<8x128xf32>
    %470 = tpu.matmul %469, %12, %cst_245 {dimension_numbers = #tpu.dot_dimension_numbers<[1], [0], [0], [1], [0, 0, 1, 1], [], []>} : vector<8x32xf32>, vector<32x128xf32>, vector<8x128xf32> -> vector<8x128xf32>
    %471 = arith.addf %467, %470 : vector<8x128xf32>
    %c0_246 = arith.constant 0 : index
    %c0_247 = arith.constant 0 : index
    %c0_248 = arith.constant 0 : index
    %472 = vector.load %arg12[%c0_246, %c0_247, %c0_248] : memref<2x8x32xf32, #tpu.memory_space<vmem>>, vector<1x8x32xf32>
    %473 = vector.shape_cast %472 : vector<1x8x32xf32> to vector<8x32xf32>
    %474 = vector.extract_strided_slice %471 {offsets = [0, 0], sizes = [8, 96], strides = [1, 1]} : vector<8x128xf32> to vector<8x96xf32>
    %475 = arith.negf %474 : vector<8x96xf32>
    %476 = math.exp %475 : vector<8x96xf32>
    %cst_249 = arith.constant 1.000000e+00 : f32
    %477 = vector.broadcast %cst_249 : f32 to vector<8x96xf32>
    %478 = arith.addf %477, %476 : vector<8x96xf32>
    %479 = arith.divf %477, %478 : vector<8x96xf32>
    %480 = vector.extract_strided_slice %471 {offsets = [0, 96], sizes = [8, 32], strides = [1, 1]} : vector<8x128xf32> to vector<8x32xf32>
    %481 = math.tanh %480 : vector<8x32xf32>
    %482 = vector.extract_strided_slice %479 {offsets = [0, 0], sizes = [8, 32], strides = [1, 1]} : vector<8x96xf32> to vector<8x32xf32>
    %483 = vector.extract_strided_slice %479 {offsets = [0, 32], sizes = [8, 32], strides = [1, 1]} : vector<8x96xf32> to vector<8x32xf32>
    %484 = vector.extract_strided_slice %479 {offsets = [0, 64], sizes = [8, 32], strides = [1, 1]} : vector<8x96xf32> to vector<8x32xf32>
    %485 = arith.mulf %483, %473 : vector<8x32xf32>
    %486 = arith.mulf %482, %481 : vector<8x32xf32>
    %487 = arith.addf %485, %486 : vector<8x32xf32>
    %488 = math.tanh %487 : vector<8x32xf32>
    %489 = arith.mulf %484, %488 : vector<8x32xf32>
    %c0_250 = arith.constant 0 : index
    %c0_251 = arith.constant 0 : index
    %c0_252 = arith.constant 0 : index
    %490 = vector.load %arg11[%c0_250, %c0_251, %c0_252] : memref<2x8x32xf32, #tpu.memory_space<vmem>>, vector<1x8x32xf32>
    %491 = vector.shape_cast %490 : vector<1x8x32xf32> to vector<8x32xf32>
    %492 = vector.shape_cast %489 : vector<8x32xf32> to vector<1x8x32xf32>
    tpu.vector_store %arg11[%c0_250, %c0_251, %c0_252], %492 {strides = array<i32>} : memref<2x8x32xf32, #tpu.memory_space<vmem>>, vector<1x8x32xf32>,
    %c0_253 = arith.constant 0 : index
    %c0_254 = arith.constant 0 : index
    %c0_255 = arith.constant 0 : index
    %493 = vector.load %arg12[%c0_253, %c0_254, %c0_255] : memref<2x8x32xf32, #tpu.memory_space<vmem>>, vector<1x8x32xf32>
    %494 = vector.shape_cast %493 : vector<1x8x32xf32> to vector<8x32xf32>
    %495 = vector.shape_cast %487 : vector<8x32xf32> to vector<1x8x32xf32>
    tpu.vector_store %arg12[%c0_253, %c0_254, %c0_255], %495 {strides = array<i32>} : memref<2x8x32xf32, #tpu.memory_space<vmem>>, vector<1x8x32xf32>,
    %c1_256 = arith.constant 1 : index
    %c0_257 = arith.constant 0 : index
    %c0_258 = arith.constant 0 : index
    %496 = vector.load %arg11[%c1_256, %c0_257, %c0_258] : memref<2x8x32xf32, #tpu.memory_space<vmem>>, vector<1x8x32xf32>
    %497 = vector.shape_cast %496 : vector<1x8x32xf32> to vector<8x32xf32>
    %498 = tpu.concatenate %489, %497 in 1 : vector<8x32xf32>, vector<8x32xf32> -> vector<8x64xf32>
    %cst_259 = arith.constant dense<0.000000e+00> : vector<8x128xf32>
    %499 = tpu.matmul %498, %13, %cst_259 {dimension_numbers = #tpu.dot_dimension_numbers<[1], [0], [0], [1], [0, 0, 1, 1], [], []>} : vector<8x64xf32>, vector<64x128xf32>, vector<8x128xf32> -> vector<8x128xf32>
    %500 = arith.addf %499, %16 : vector<8x128xf32>
    %c1_260 = arith.constant 1 : index
    %c0_261 = arith.constant 0 : index
    %c0_262 = arith.constant 0 : index
    %501 = vector.load %arg12[%c1_260, %c0_261, %c0_262] : memref<2x8x32xf32, #tpu.memory_space<vmem>>, vector<1x8x32xf32>
    %502 = vector.shape_cast %501 : vector<1x8x32xf32> to vector<8x32xf32>
    %503 = vector.extract_strided_slice %500 {offsets = [0, 0], sizes = [8, 96], strides = [1, 1]} : vector<8x128xf32> to vector<8x96xf32>
    %504 = arith.negf %503 : vector<8x96xf32>
    %505 = math.exp %504 : vector<8x96xf32>
    %cst_263 = arith.constant 1.000000e+00 : f32
    %506 = vector.broadcast %cst_263 : f32 to vector<8x96xf32>
    %507 = arith.addf %506, %505 : vector<8x96xf32>
    %508 = arith.divf %506, %507 : vector<8x96xf32>
    %509 = vector.extract_strided_slice %500 {offsets = [0, 96], sizes = [8, 32], strides = [1, 1]} : vector<8x128xf32> to vector<8x32xf32>
    %510 = math.tanh %509 : vector<8x32xf32>
    %511 = vector.extract_strided_slice %508 {offsets = [0, 0], sizes = [8, 32], strides = [1, 1]} : vector<8x96xf32> to vector<8x32xf32>
    %512 = vector.extract_strided_slice %508 {offsets = [0, 32], sizes = [8, 32], strides = [1, 1]} : vector<8x96xf32> to vector<8x32xf32>
    %513 = vector.extract_strided_slice %508 {offsets = [0, 64], sizes = [8, 32], strides = [1, 1]} : vector<8x96xf32> to vector<8x32xf32>
    %514 = arith.mulf %512, %502 : vector<8x32xf32>
    %515 = arith.mulf %511, %510 : vector<8x32xf32>
    %516 = arith.addf %514, %515 : vector<8x32xf32>
    %517 = math.tanh %516 : vector<8x32xf32>
    %518 = arith.mulf %513, %517 : vector<8x32xf32>
    %c1_264 = arith.constant 1 : index
    %c0_265 = arith.constant 0 : index
    %c0_266 = arith.constant 0 : index
    %519 = vector.load %arg11[%c1_264, %c0_265, %c0_266] : memref<2x8x32xf32, #tpu.memory_space<vmem>>, vector<1x8x32xf32>
    %520 = vector.shape_cast %519 : vector<1x8x32xf32> to vector<8x32xf32>
    %521 = vector.shape_cast %518 : vector<8x32xf32> to vector<1x8x32xf32>
    tpu.vector_store %arg11[%c1_264, %c0_265, %c0_266], %521 {strides = array<i32>} : memref<2x8x32xf32, #tpu.memory_space<vmem>>, vector<1x8x32xf32>,
    %c1_267 = arith.constant 1 : index
    %c0_268 = arith.constant 0 : index
    %c0_269 = arith.constant 0 : index
    %522 = vector.load %arg12[%c1_267, %c0_268, %c0_269] : memref<2x8x32xf32, #tpu.memory_space<vmem>>, vector<1x8x32xf32>
    %523 = vector.shape_cast %522 : vector<1x8x32xf32> to vector<8x32xf32>
    %524 = vector.shape_cast %516 : vector<8x32xf32> to vector<1x8x32xf32>
    tpu.vector_store %arg12[%c1_267, %c0_268, %c0_269], %524 {strides = array<i32>} : memref<2x8x32xf32, #tpu.memory_space<vmem>>, vector<1x8x32xf32>,
    %525 = arith.index_cast %c7_i32 : i32 to index
    %c0_270 = arith.constant 0 : index
    %c0_271 = arith.constant 0 : index
    %526 = vector.load %arg14[%525, %c0_270, %c0_271] : memref<8x8x32xf32, #tpu.memory_space<vmem>>, vector<1x8x32xf32>
    %527 = vector.shape_cast %526 : vector<1x8x32xf32> to vector<8x32xf32>
    %528 = vector.shape_cast %518 : vector<8x32xf32> to vector<1x8x32xf32>
    tpu.vector_store %arg14[%525, %c0_270, %c0_271], %528 {strides = array<i32>} : memref<8x8x32xf32, #tpu.memory_space<vmem>>, vector<1x8x32xf32>,
    %c8_i32 = arith.constant 8 : i32
    %c0_272 = arith.constant 0 : index
    %c0_273 = arith.constant 0 : index
    %c0_274 = arith.constant 0 : index
    %529 = vector.load %arg14[%c0_272, %c0_273, %c0_274] : memref<8x8x32xf32, #tpu.memory_space<vmem>>, vector<8x8x32xf32>
    %530 = vector.shape_cast %529 : vector<8x8x32xf32> to vector<64x32xf32>
    %c0_275 = arith.constant 0 : index
    %c0_276 = arith.constant 0 : index
    %531 = vector.load %arg8[%c0_275, %c0_276] : memref<16x32xf32, #tpu.memory_space<vmem>>, vector<16x32xf32>
    %cst_277 = arith.constant dense<0.000000e+00> : vector<16x64xf32>
    %532 = tpu.matmul %531, %530, %cst_277 {dimension_numbers = #tpu.dot_dimension_numbers<[1], [1], [0], [0], [0, 0, 1, 0], [], []>} : vector<16x32xf32>, vector<64x32xf32>, vector<16x64xf32> -> vector<16x64xf32>
    %c0_278 = arith.constant 0 : index
    %c0_279 = arith.constant 0 : index
    %533 = vector.load %arg9[%c0_278, %c0_279] : memref<16x1xf32, #tpu.memory_space<vmem>>, vector<16x1xf32>
    %534 = vector.broadcast %533 : vector<16x1xf32> to vector<16x64xf32>
    %535 = arith.addf %532, %534 : vector<16x64xf32>
    %c0_280 = arith.constant 0 : index
    %c0_281 = arith.constant 0 : index
    %c0_282 = arith.constant 0 : index
    %536 = vector.load %arg10[%c0_280, %c0_281, %c0_282] : memref<1x16x64xf32, #tpu.memory_space<vmem>>, vector<1x16x64xf32>
    %537 = vector.shape_cast %536 : vector<1x16x64xf32> to vector<16x64xf32>
    %538 = vector.shape_cast %535 : vector<16x64xf32> to vector<1x16x64xf32>
    tpu.vector_store %arg10[%c0_280, %c0_281, %c0_282], %538 {strides = array<i32>} : memref<1x16x64xf32, #tpu.memory_space<vmem>>, vector<1x16x64xf32>,
    return
  }
  func.func @transform_0(%arg0: i32, %arg1: i32) -> (i32, i32, i32) {
    %c0_i32 = arith.constant 0 : i32
    %c0_i32_0 = arith.constant 0 : i32
    return %arg1, %arg0, %c0_i32 : i32, i32, i32
  }
  func.func @transform_1(%arg0: i32, %arg1: i32) -> (i32, i32) {
    %c0_i32 = arith.constant 0 : i32
    %c0_i32_0 = arith.constant 0 : i32
    %c0_i32_1 = arith.constant 0 : i32
    return %c0_i32, %c0_i32_0 : i32, i32
  }
  func.func @transform_2(%arg0: i32, %arg1: i32) -> (i32, i32) {
    %c0_i32 = arith.constant 0 : i32
    %c0_i32_0 = arith.constant 0 : i32
    %c0_i32_1 = arith.constant 0 : i32
    return %c0_i32, %c0_i32_0 : i32, i32
  }
  func.func @transform_3(%arg0: i32, %arg1: i32) -> (i32, i32) {
    %c0_i32 = arith.constant 0 : i32
    %c0_i32_0 = arith.constant 0 : i32
    %c0_i32_1 = arith.constant 0 : i32
    return %c0_i32, %c0_i32_0 : i32, i32
  }
  func.func @transform_4(%arg0: i32, %arg1: i32) -> (i32, i32) {
    %c0_i32 = arith.constant 0 : i32
    %c0_i32_0 = arith.constant 0 : i32
    %c0_i32_1 = arith.constant 0 : i32
    return %c0_i32, %c0_i32_0 : i32, i32
  }
  func.func @transform_5(%arg0: i32, %arg1: i32) -> (i32, i32) {
    %c0_i32 = arith.constant 0 : i32
    %c0_i32_0 = arith.constant 0 : i32
    %c0_i32_1 = arith.constant 0 : i32
    return %c0_i32, %c0_i32_0 : i32, i32
  }
  func.func @transform_6(%arg0: i32, %arg1: i32) -> (i32, i32) {
    %c0_i32 = arith.constant 0 : i32
    %c0_i32_0 = arith.constant 0 : i32
    %c0_i32_1 = arith.constant 0 : i32
    return %c0_i32, %c0_i32_0 : i32, i32
  }
  func.func @transform_7(%arg0: i32, %arg1: i32) -> (i32, i32) {
    %c0_i32 = arith.constant 0 : i32
    %c0_i32_0 = arith.constant 0 : i32
    %c0_i32_1 = arith.constant 0 : i32
    return %c0_i32, %c0_i32_0 : i32, i32
  }
  func.func @transform_8(%arg0: i32, %arg1: i32) -> (i32, i32, i32) {
    %c0_i32 = arith.constant 0 : i32
    %c0_i32_0 = arith.constant 0 : i32
    return %arg0, %c0_i32, %arg1 : i32, i32, i32
  }
}

</mosaic_0001>

<llo_original>
// kernel: tpu_custom_call.1
$region0: #{tpu_custom_call.1}
  #allocation0 [shape = 'u32[]', space=smem, size = 0x4, offset = 0x4, fixed_abs, tag = 'smem constant byte address 0x4 - core index']
  #allocation1 [shape = 'u32[144,128]{1,0:T(1,128)}', space=vmem, size = 0x12000, scoped, tag = 'internal scratch']
  #allocation2 [shape = 'f32[2,8,32]{2,1,0:T(8,128)}', space=vmem, size = 0x2000, scoped, tag = 'scratch operand']
  #allocation3 [shape = 'f32[2,8,32]{2,1,0:T(8,128)}', space=vmem, size = 0x2000, scoped, tag = 'scratch operand']
  #allocation4 [shape = 'f32[8,8,128]{2,1,0:T(8,128)}', space=vmem, size = 0x8000, scoped, tag = 'scratch operand']
  #allocation5 [shape = 'f32[8,8,32]{2,1,0:T(8,128)}', space=vmem, size = 0x8000, scoped, tag = 'scratch operand']
  %s0 = inlined_call_operand.hbm [shape: f32[8,8,16], index: 0, kind: input, shape index: {}]
  %s1 = inlined_call_operand.vmem [shape: f32[16,128], index: 1, kind: input, shape index: {}]
  %s2 = inlined_call_operand.hbm [shape: f32[32,128], index: 2, kind: input, shape index: {}]
  %s3 = inlined_call_operand.hbm [shape: f32[1,128], index: 3, kind: input, shape index: {}]
  %s4 = inlined_call_operand.hbm [shape: f32[64,128], index: 4, kind: input, shape index: {}]
  %s5 = inlined_call_operand.vmem [shape: f32[1,128], index: 5, kind: input, shape index: {}]
  %s6 = inlined_call_operand.vmem [shape: f32[16,32], index: 6, kind: input, shape index: {}]
  %s7 = inlined_call_operand.vmem [shape: f32[16,1], index: 7, kind: input, shape index: {}]
  %s8 = inlined_call_operand.hbm [shape: f32[1,16,64], index: 8, kind: output, shape index: {}]
  %s9 = sld [smem:[#allocation0]]
  $region62: #{tpu_custom_call.1} parent=0
    _
  %s11 = ssub.s32 1, %s9
  %s12 = scalar_select 0, %s11, %s9
  $region1: #{tpu_custom_call.1} parent=0
    #allocation6 [shape = 'u8[32768]{0}', space=vmem, size = 0x8000, scoped, tag = 'input window, operand 0, single buffered']
    #allocation7 [shape = 's32[1]{0}', space=sflag, size = 0x4, scoped, tag = 'scoped memory for tpu_custom_call.1']
    #allocation8 [shape = 's32[1]{0}', space=sflag, size = 0x4, scoped, tag = 'scoped memory for tpu_custom_call.1']
    #allocation9 [shape = 'u8[16384]{0}', space=vmem, size = 0x4000, scoped, tag = 'input window, operand 2, single buffered']
    #allocation10 [shape = 's32[1]{0}', space=sflag, size = 0x4, scoped, tag = 'scoped memory for tpu_custom_call.1']
    #allocation11 [shape = 'u8[512]{0}', space=vmem, size = 0x400, scoped, tag = 'input window, operand 3, single buffered']
    #allocation12 [shape = 'u8[32768]{0}', space=vmem, size = 0x8000, scoped, tag = 'input window, operand 4, single buffered']
    #allocation13 [shape = 's32[1]{0}', space=sflag, size = 0x4, scoped, tag = 'scoped memory for tpu_custom_call.1']
    #allocation14 [shape = 'u8[8192]{0}', space=vmem, size = 0x2000, scoped, tag = 'output window, operand 0, single buffered']
    %13 = vsyncpa [#allocation7], 0
    %14 = vsyncpa [#allocation10], 0
    %15 = vsyncpa [#allocation13], 0
    %16 = vsyncpa [#allocation8], 0
    // Predicated region
    $region2: #{tpu_custom_call.1} parent=1 // pred_check
      _
    $region3: #{tpu_custom_call.1} parent=1 // pred_check_branch
      %18 = sbr.rel (0) target = $region5
    $region4: #{tpu_custom_call.1} parent=1 // pred_region
      %s20 = ssub.s32 1024, 1024
      %21 = vsyncadd [#allocation7], %s20
      %s22 = sshll.u32 [#allocation6], 4
      %s23 = int_to_ptr.vmem [resolvable:$true] %s22
      %28 = dma.hbm_to_vmem [thread:$0]  %s0, 1024, %s23, [#allocation7], 128, 128, 8
    $region5: #{tpu_custom_call.1} parent=1 // pred_fallthru
      _
    // Predicated region
    $region6: #{tpu_custom_call.1} parent=1 // pred_check
      _
    $region7: #{tpu_custom_call.1} parent=1 // pred_check_branch
      %30 = sbr.rel (0) target = $region9
    $region8: #{tpu_custom_call.1} parent=1 // pred_region
      _
    $region9: #{tpu_custom_call.1} parent=1 // pred_fallthru
      _
    // Predicated region
    $region10: #{tpu_custom_call.1} parent=1 // pred_check
      _
    $region11: #{tpu_custom_call.1} parent=1 // pred_check_branch
      %32 = sbr.rel (0) target = $region13
    $region12: #{tpu_custom_call.1} parent=1 // pred_region
      %s34 = ssub.s32 512, 512
      %35 = vsyncadd [#allocation10], %s34
      %s36 = sshll.u32 [#allocation9], 4
      %s37 = int_to_ptr.vmem [resolvable:$true] %s36
      %42 = dma.hbm_to_vmem [thread:$0]  %s2, 512, %s37, [#allocation10], 128, 128, 8
    $region13: #{tpu_custom_call.1} parent=1 // pred_fallthru
      _
    // Predicated region
    $region14: #{tpu_custom_call.1} parent=1 // pred_check
      _
    $region15: #{tpu_custom_call.1} parent=1 // pred_check_branch
      %44 = sbr.rel (0) target = $region17
    $region16: #{tpu_custom_call.1} parent=1 // pred_region
      %s46 = ssub.s32 16, 16
      %47 = vsyncadd [#allocation10], %s46
      %s49 = sshll.u32 [#allocation11], 4
      %s50 = int_to_ptr.vmem [resolvable:$true] %s49
      %52 = dma.hbm_to_vmem [thread:$0]  %s3, 16, %s50, [#allocation10]
    $region17: #{tpu_custom_call.1} parent=1 // pred_fallthru
      _
    // Predicated region
    $region18: #{tpu_custom_call.1} parent=1 // pred_check
      _
    $region19: #{tpu_custom_call.1} parent=1 // pred_check_branch
      %54 = sbr.rel (0) target = $region21
    $region20: #{tpu_custom_call.1} parent=1 // pred_region
      %s56 = ssub.s32 1024, 1024
      %57 = vsyncadd [#allocation13], %s56
      %s58 = sshll.u32 [#allocation12], 4
      %s59 = int_to_ptr.vmem [resolvable:$true] %s58
      %64 = dma.hbm_to_vmem [thread:$0]  %s4, 1024, %s59, [#allocation13], 128, 128, 8
    $region21: #{tpu_custom_call.1} parent=1 // pred_fallthru
      _
    // Predicated region
    $region22: #{tpu_custom_call.1} parent=1 // pred_check
      _
    $region23: #{tpu_custom_call.1} parent=1 // pred_check_branch
      %66 = sbr.rel (0) target = $region25
    $region24: #{tpu_custom_call.1} parent=1 // pred_region
      _
    $region25: #{tpu_custom_call.1} parent=1 // pred_fallthru
      _
    // Predicated region
    $region26: #{tpu_custom_call.1} parent=1 // pred_check
      _
    $region27: #{tpu_custom_call.1} parent=1 // pred_check_branch
      %68 = sbr.rel (0) target = $region29
    $region28: #{tpu_custom_call.1} parent=1 // pred_region
      _
    $region29: #{tpu_custom_call.1} parent=1 // pred_fallthru
      _
    // Predicated region
    $region30: #{tpu_custom_call.1} parent=1 // pred_check
      _
    $region31: #{tpu_custom_call.1} parent=1 // pred_check_branch
      %70 = sbr.rel (0) target = $region33
    $region32: #{tpu_custom_call.1} parent=1 // pred_region
      _
    $region33: #{tpu_custom_call.1} parent=1 // pred_fallthru
      _
    // Predicated region
    $region34: #{tpu_custom_call.1} parent=1 // pred_check
      _
    $region35: #{tpu_custom_call.1} parent=1 // pred_check_branch
      %72 = sbr.rel (0) target = $region37
    $region36: #{tpu_custom_call.1} parent=1 // pred_region
      %73 = dma.done [#allocation7], 1024
    $region37: #{tpu_custom_call.1} parent=1 // pred_fallthru
      _
    // Predicated region
    $region38: #{tpu_custom_call.1} parent=1 // pred_check
      _
    $region39: #{tpu_custom_call.1} parent=1 // pred_check_branch
      %75 = sbr.rel (0) target = $region41
    $region40: #{tpu_custom_call.1} parent=1 // pred_region
      %76 = dma.done [#allocation10], 512
    $region41: #{tpu_custom_call.1} parent=1 // pred_fallthru
      _
    // Predicated region
    $region42: #{tpu_custom_call.1} parent=1 // pred_check
      _
    $region43: #{tpu_custom_call.1} parent=1 // pred_check_branch
      %78 = sbr.rel (0) target = $region45
    $region44: #{tpu_custom_call.1} parent=1 // pred_region
      %79 = dma.done [#allocation10], 16
    $region45: #{tpu_custom_call.1} parent=1 // pred_fallthru
      _
    // Predicated region
    $region46: #{tpu_custom_call.1} parent=1 // pred_check
      _
    $region47: #{tpu_custom_call.1} parent=1 // pred_check_branch
      %81 = sbr.rel (0) target = $region49
    $region48: #{tpu_custom_call.1} parent=1 // pred_region
      %82 = dma.done [#allocation13], 1024
    $region49: #{tpu_custom_call.1} parent=1 // pred_fallthru
      _
    %p83 = scmp.eq.s32.totalorder 0, 0
    // Predicated region
    $region50: #{tpu_custom_call.1} parent=1 // pred_check
      %p84 = pneg %p83
    $region51: #{tpu_custom_call.1} parent=1 // pred_check_branch
      %86 = sbr.rel (%p84) target = $region53
    $region52: #{tpu_custom_call.1} parent=1 // pred_region
      %vm87 = vcmask 261120
      %88 = vst.msk [vmem:[#allocation2] sm:$0xff] %vm87, 0.0
      %89 = vst.msk [vmem:[#allocation2 + $0x8] sm:$0xff] %vm87, 0.0
      %90 = vst.msk [vmem:[#allocation3] sm:$0xff] %vm87, 0.0
      %91 = vst.msk [vmem:[#allocation3 + $0x8] sm:$0xff] %vm87, 0.0
    $region53: #{tpu_custom_call.1} parent=1 // pred_fallthru
      _
    %v92 = vld [vmem:[#allocation6] sm:$0xff]
    %v93 = vld [vmem:[#allocation6 + $0x8] sm:$0xff]
    %v94 = vld [vmem:[#allocation6 + $0x10] sm:$0xff]
    %v95 = vld [vmem:[#allocation6 + $0x18] sm:$0xff]
    %v96 = vld [vmem:[#allocation6 + $0x20] sm:$0xff]
    %v97 = vld [vmem:[#allocation6 + $0x28] sm:$0xff]
    %v98 = vld [vmem:[#allocation6 + $0x30] sm:$0xff]
    %v99 = vld [vmem:[#allocation6 + $0x38] sm:$0xff]
    %v100 = vld [vmem:[%s1] sm:$0xff]
    %v101 = vld [vmem:[%s1 + $0x8] sm:$0xff]
    %v102 = vld [vmem:[#allocation11] sm:$0x1]
    %v104 = vlaneseq
    %v105 = vshrl.u32 %v104, 7
    %v106 = vsub.s32 0, %v105
    %v107 = vrot.slane %v102, %v106
    %vm109 = vcmask 130048
    %v111 = vsel %vm109, %v92, 0
    %v114 = vsel %vm109, %v93, 0
    %v117 = vsel %vm109, %v94, 0
    %v120 = vsel %vm109, %v95, 0
    %v123 = vsel %vm109, %v96, 0
    %v126 = vsel %vm109, %v97, 0
    %v129 = vsel %vm109, %v98, 0
    %v132 = vsel %vm109, %v99, 0
    %134 = vmatprep.subr.mxu0 0.0
    %135 = vmatpush1.msra.mxu0 %v100
    %136 = vmatprep.subr.mxu0 0.0
    %137 = vmatpush1.msra.mxu0 %v101
    %138 = vmatprep.subr.mxu0 0.0
    %139 = vmatpush1.msra.mxu0 0.0
    %140 = vmatprep.subr.mxu0 0.0
    %141 = vmatpush1.msra.mxu0 0.0
    %142 = vmatprep.subr.mxu0 0.0
    %143 = vmatpush1.msra.mxu0 0.0
    %144 = vmatprep.subr.mxu0 0.0
    %145 = vmatpush1.msra.mxu0 0.0
    %146 = vmatprep.subr.mxu0 0.0
    %147 = vmatpush1.msra.mxu0 0.0
    %148 = vmatprep.subr.mxu0 0.0
    %149 = vmatpush1.msra.mxu0 0.0
    %150 = vmatprep.subr.mxu0 0.0
    %151 = vmatpush1.msra.mxu0 0.0
    %152 = vmatprep.subr.mxu0 0.0
    %153 = vmatpush1.msra.mxu0 0.0
    %154 = vmatprep.subr.mxu0 0.0
    %155 = vmatpush1.msra.mxu0 0.0
    %156 = vmatprep.subr.mxu0 0.0
    %157 = vmatpush1.msra.mxu0 0.0
    %158 = vmatprep.subr.mxu0 0.0
    %159 = vmatpush1.msra.mxu0 0.0
    %160 = vmatprep.subr.mxu0 0.0
    %161 = vmatpush1.msra.mxu0 0.0
    %162 = vmatprep.subr.mxu0 0.0
    %163 = vmatpush1.msra.mxu0 0.0
    %164 = vmatprep.subr.mxu0 0.0
    %165 = vmatpush1.msra.mxu0 0.0
    %166 = vmatprep.subr.mxu0 0.0
    %167 = vmatpush1.msra.mxu0 0.0
    %168 = vmatprep.subr.mxu0 0.0
    %169 = vmatpush1.msra.mxu0 0.0
    %170 = vmatprep.subr.mxu0 0.0
    %171 = vmatpush1.msra.mxu0 0.0
    %172 = vmatprep.subr.mxu0 0.0
    %173 = vmatpush1.msra.mxu0 0.0
    %174 = vmatprep.subr.mxu0 0.0
    %175 = vmatpush1.msra.mxu0 0.0
    %176 = vmatprep.subr.mxu0 0.0
    %177 = vmatpush1.msra.mxu0 0.0
    %178 = vmatprep.subr.mxu0 0.0
    %179 = vmatpush1.msra.mxu0 0.0
    %180 = vmatprep.subr.mxu0 0.0
    %181 = vmatpush1.msra.mxu0 0.0
    %182 = vmatprep.subr.mxu0 0.0
    %183 = vmatpush1.msra.mxu0 0.0
    %184 = vmatprep.subr.mxu0 0.0
    %185 = vmatpush1.msra.mxu0 0.0
    %186 = vmatprep.subr.mxu0 0.0
    %187 = vmatpush1.msra.mxu0 0.0
    %188 = vmatprep.subr.mxu0 0.0
    %189 = vmatpush1.msra.mxu0 0.0
    %190 = vmatprep.subr.mxu0 0.0
    %191 = vmatpush1.msra.mxu0 0.0
    %192 = vmatprep.subr.mxu0 0.0
    %193 = vmatpush1.msra.mxu0 0.0
    %194 = vmatprep.subr.mxu0 0.0
    %195 = vmatpush1.msra.mxu0 0.0
    %196 = vmatprep.subr.mxu0 0.0
    %197 = vmatpush1.msra.mxu0 0.0
    %198 = vmatprep.mubr.f32.mxu0 0.0
    %199 = vmatmul.mubr.f32.gmra.mrb[0].mxu0 %v111
    %v200 = vpop.f32.mrb[0].mxu0
    %v201 = vadd.f32 %v107, %v200
    %v202 = vpop.f32.mrb[0].mxu0
    %203 = vmatprep.mubr.f32.mxu0 0.0
    %204 = vmatmul.mubr.f32.gmra.mrb[0].mxu0 %v114
    %v205 = vpop.f32.mrb[0].mxu0
    %v206 = vadd.f32 %v107, %v205
    %v207 = vpop.f32.mrb[0].mxu0
    %208 = vmatprep.mubr.f32.mxu0 0.0
    %209 = vmatmul.mubr.f32.gmra.mrb[0].mxu0 %v117
    %v210 = vpop.f32.mrb[0].mxu0
    %v211 = vadd.f32 %v107, %v210
    %v212 = vpop.f32.mrb[0].mxu0
    %213 = vmatprep.mubr.f32.mxu0 0.0
    %214 = vmatmul.mubr.f32.gmra.mrb[0].mxu0 %v120
    %v215 = vpop.f32.mrb[0].mxu0
    %v216 = vadd.f32 %v107, %v215
    %v217 = vpop.f32.mrb[0].mxu0
    %218 = vmatprep.mubr.f32.mxu0 0.0
    %219 = vmatmul.mubr.f32.gmra.mrb[0].mxu0 %v123
    %v220 = vpop.f32.mrb[0].mxu0
    %v221 = vadd.f32 %v107, %v220
    %v222 = vpop.f32.mrb[0].mxu0
    %223 = vmatprep.mubr.f32.mxu0 0.0
    %224 = vmatmul.mubr.f32.gmra.mrb[0].mxu0 %v126
    %v225 = vpop.f32.mrb[0].mxu0
    %v226 = vadd.f32 %v107, %v225
    %v227 = vpop.f32.mrb[0].mxu0
    %228 = vmatprep.mubr.f32.mxu0 0.0
    %229 = vmatmul.mubr.f32.gmra.mrb[0].mxu0 %v129
    %v230 = vpop.f32.mrb[0].mxu0
    %v231 = vadd.f32 %v107, %v230
    %v232 = vpop.f32.mrb[0].mxu0
    %233 = vmatprep.mubr.f32.mxu0 0.0
    %234 = vmatmul.mubr.f32.gmra.mrb[0].mxu0 %v132
    %v235 = vpop.f32.mrb[0].mxu0
    %v236 = vadd.f32 %v107, %v235
    %v237 = vpop.f32.mrb[0].mxu0
    %238 = vdwg.mxu0
    %239 = vst [vmem:[#allocation4] sm:$0xff] %v201
    %240 = vst [vmem:[#allocation4 + $0x8] sm:$0xff] %v206
    %241 = vst [vmem:[#allocation4 + $0x10] sm:$0xff] %v211
    %242 = vst [vmem:[#allocation4 + $0x18] sm:$0xff] %v216
    %243 = vst [vmem:[#allocation4 + $0x20] sm:$0xff] %v221
    %244 = vst [vmem:[#allocation4 + $0x28] sm:$0xff] %v226
    %245 = vst [vmem:[#allocation4 + $0x30] sm:$0xff] %v231
    %246 = vst [vmem:[#allocation4 + $0x38] sm:$0xff] %v236
    %v247 = vld [vmem:[#allocation9] sm:$0xff]
    %v248 = vld [vmem:[#allocation9 + $0x8] sm:$0xff]
    %v249 = vld [vmem:[#allocation9 + $0x10] sm:$0xff]
    %v250 = vld [vmem:[#allocation9 + $0x18] sm:$0xff]
    %v251 = vld [vmem:[#allocation12] sm:$0xff]
    %v252 = vld [vmem:[#allocation12 + $0x8] sm:$0xff]
    %v253 = vld [vmem:[#allocation12 + $0x10] sm:$0xff]
    %v254 = vld [vmem:[#allocation12 + $0x18] sm:$0xff]
    %v255 = vld [vmem:[#allocation12 + $0x20] sm:$0xff]
    %v256 = vld [vmem:[#allocation12 + $0x28] sm:$0xff]
    %v257 = vld [vmem:[#allocation12 + $0x30] sm:$0xff]
    %v258 = vld [vmem:[#allocation12 + $0x38] sm:$0xff]
    %v259 = vld [vmem:[%s5] sm:$0x1]
    %v261 = vlaneseq
    %v262 = vshrl.u32 %v261, 7
    %v263 = vsub.s32 0, %v262
    %v264 = vrot.slane %v259, %v263
    %v266 = vld [vmem:[#allocation4] sm:$0xff]
    %v267 = vld [vmem:[#allocation2] sm:$0xff]
    %vm268 = vcmask 261120
    %v270 = vsel %vm268, %v267, 0
    %272 = vmatprep.subr.mxu0 0.0
    %273 = vmatpush1.msra.mxu0 %v247
    %274 = vmatprep.subr.mxu0 0.0
    %275 = vmatpush1.msra.mxu0 %v248
    %276 = vmatprep.subr.mxu0 0.0
    %277 = vmatpush1.msra.mxu0 %v249
    %278 = vmatprep.subr.mxu0 0.0
    %279 = vmatpush1.msra.mxu0 %v250
    %280 = vmatprep.subr.mxu0 0.0
    %281 = vmatpush1.msra.mxu0 0.0
    %282 = vmatprep.subr.mxu0 0.0
    %283 = vmatpush1.msra.mxu0 0.0
    %284 = vmatprep.subr.mxu0 0.0
    %285 = vmatpush1.msra.mxu0 0.0
    %286 = vmatprep.subr.mxu0 0.0
    %287 = vmatpush1.msra.mxu0 0.0
    %288 = vmatprep.subr.mxu0 0.0
    %289 = vmatpush1.msra.mxu0 0.0
    %290 = vmatprep.subr.mxu0 0.0
    %291 = vmatpush1.msra.mxu0 0.0
    %292 = vmatprep.subr.mxu0 0.0
    %293 = vmatpush1.msra.mxu0 0.0
    %294 = vmatprep.subr.mxu0 0.0
    %295 = vmatpush1.msra.mxu0 0.0
    %296 = vmatprep.subr.mxu0 0.0
    %297 = vmatpush1.msra.mxu0 0.0
    %298 = vmatprep.subr.mxu0 0.0
    %299 = vmatpush1.msra.mxu0 0.0
    %300 = vmatprep.subr.mxu0 0.0
    %301 = vmatpush1.msra.mxu0 0.0
    %302 = vmatprep.subr.mxu0 0.0
    %303 = vmatpush1.msra.mxu0 0.0
    %304 = vmatprep.subr.mxu0 0.0
    %305 = vmatpush1.msra.mxu0 0.0
    %306 = vmatprep.subr.mxu0 0.0
    %307 = vmatpush1.msra.mxu0 0.0
    %308 = vmatprep.subr.mxu0 0.0
    %309 = vmatpush1.msra.mxu0 0.0
    %310 = vmatprep.subr.mxu0 0.0
    %311 = vmatpush1.msra.mxu0 0.0
    %312 = vmatprep.subr.mxu0 0.0
    %313 = vmatpush1.msra.mxu0 0.0
    %314 = vmatprep.subr.mxu0 0.0
    %315 = vmatpush1.msra.mxu0 0.0
    %316 = vmatprep.subr.mxu0 0.0
    %317 = vmatpush1.msra.mxu0 0.0
    %318 = vmatprep.subr.mxu0 0.0
    %319 = vmatpush1.msra.mxu0 0.0
    %320 = vmatprep.subr.mxu0 0.0
    %321 = vmatpush1.msra.mxu0 0.0
    %322 = vmatprep.subr.mxu0 0.0
    %323 = vmatpush1.msra.mxu0 0.0
    %324 = vmatprep.subr.mxu0 0.0
    %325 = vmatpush1.msra.mxu0 0.0
    %326 = vmatprep.subr.mxu0 0.0
    %327 = vmatpush1.msra.mxu0 0.0
    %328 = vmatprep.subr.mxu0 0.0
    %329 = vmatpush1.msra.mxu0 0.0
    %330 = vmatprep.subr.mxu0 0.0
    %331 = vmatpush1.msra.mxu0 0.0
    %332 = vmatprep.subr.mxu0 0.0
    %333 = vmatpush1.msra.mxu0 0.0
    %334 = vmatprep.subr.mxu0 0.0
    %335 = vmatpush1.msra.mxu0 0.0
    %336 = vmatprep.mubr.f32.mxu0 0.0
    %337 = vmatmul.mubr.f32.gmra.mrb[0].mxu0 %v270
    %v338 = vpop.f32.mrb[0].mxu0
    %v339 = vadd.f32 0.0, %v338
    %v340 = vpop.f32.mrb[0].mxu0
    %341 = vdwg.mxu0
    %v342 = vadd.f32 %v266, %v339
    %v343 = vld [vmem:[#allocation3] sm:$0xff]
    %v344 = vxor.u32 %v342, 2147483648
    %v345 = vmul.f32 %v344, 1.442695
    %v346 = vpow.pop %v345
    %v347 = vadd.f32 %v346, 1.0
    %v348 = vrcp.pop %v347
    %v349 = vmul.f32 1.0, %v348
    %v350 = vtanh.pop %v342
    %352 = vrot.lane.b32.xlu0 %v343, 32
    %v353 = vpop.permute.xlu0 %352
    %v355 = vmul.f32 %v349, %v353
    %357 = vrot.lane.b32.xlu0 %v350, 32
    %v358 = vpop.permute.xlu0 %357
    %v360 = vmul.f32 %v349, %v358
    %362 = vrot.lane.b32.xlu0 %v360, 32
    %v363 = vpop.permute.xlu0 %362
    %v365 = vadd.f32 %v355, %v363
    %v366 = vtanh.pop %v365
    %368 = vrot.lane.b32.xlu0 %v366, 32
    %v369 = vpop.permute.xlu0 %368
    %v371 = vmul.f32 %v349, %v369
    %373 = vrot.lane.b32.xlu0 %v371, 64
    %v374 = vpop.permute.xlu0 %373
    %376 = vst.msk [vmem:[#allocation2] sm:$0xff] %vm268, %v374
    %378 = vrot.lane.b32.xlu0 %v365, 96
    %v379 = vpop.permute.xlu0 %378
    %381 = vst.msk [vmem:[#allocation3] sm:$0xff] %vm268, %v379
    %s382 = scalar_lea.vmem [#allocation2], 8
    %v383 = vld [vmem:[%s382] sm:$0xff]
    %385 = vrot.lane.b32.xlu0 %v383, 32
    %v386 = vpop.permute.xlu0 %385
    %v388 = vsel %vm268, %v374, %v386
    %vm389 = vcmask 523264
    %v391 = vsel %vm389, %v388, 0
    %393 = vmatprep.subr.mxu0 0.0
    %394 = vmatpush1.msra.mxu0 %v251
    %395 = vmatprep.subr.mxu0 0.0
    %396 = vmatpush1.msra.mxu0 %v252
    %397 = vmatprep.subr.mxu0 0.0
    %398 = vmatpush1.msra.mxu0 %v253
    %399 = vmatprep.subr.mxu0 0.0
    %400 = vmatpush1.msra.mxu0 %v254
    %401 = vmatprep.subr.mxu0 0.0
    %402 = vmatpush1.msra.mxu0 %v255
    %403 = vmatprep.subr.mxu0 0.0
    %404 = vmatpush1.msra.mxu0 %v256
    %405 = vmatprep.subr.mxu0 0.0
    %406 = vmatpush1.msra.mxu0 %v257
    %407 = vmatprep.subr.mxu0 0.0
    %408 = vmatpush1.msra.mxu0 %v258
    %409 = vmatprep.subr.mxu0 0.0
    %410 = vmatpush1.msra.mxu0 0.0
    %411 = vmatprep.subr.mxu0 0.0
    %412 = vmatpush1.msra.mxu0 0.0
    %413 = vmatprep.subr.mxu0 0.0
    %414 = vmatpush1.msra.mxu0 0.0
    %415 = vmatprep.subr.mxu0 0.0
    %416 = vmatpush1.msra.mxu0 0.0
    %417 = vmatprep.subr.mxu0 0.0
    %418 = vmatpush1.msra.mxu0 0.0
    %419 = vmatprep.subr.mxu0 0.0
    %420 = vmatpush1.msra.mxu0 0.0
    %421 = vmatprep.subr.mxu0 0.0
    %422 = vmatpush1.msra.mxu0 0.0
    %423 = vmatprep.subr.mxu0 0.0
    %424 = vmatpush1.msra.mxu0 0.0
    %425 = vmatprep.subr.mxu0 0.0
    %426 = vmatpush1.msra.mxu0 0.0
    %427 = vmatprep.subr.mxu0 0.0
    %428 = vmatpush1.msra.mxu0 0.0
    %429 = vmatprep.subr.mxu0 0.0
    %430 = vmatpush1.msra.mxu0 0.0
    %431 = vmatprep.subr.mxu0 0.0
    %432 = vmatpush1.msra.mxu0 0.0
    %433 = vmatprep.subr.mxu0 0.0
    %434 = vmatpush1.msra.mxu0 0.0
    %435 = vmatprep.subr.mxu0 0.0
    %436 = vmatpush1.msra.mxu0 0.0
    %437 = vmatprep.subr.mxu0 0.0
    %438 = vmatpush1.msra.mxu0 0.0
    %439 = vmatprep.subr.mxu0 0.0
    %440 = vmatpush1.msra.mxu0 0.0
    %441 = vmatprep.subr.mxu0 0.0
    %442 = vmatpush1.msra.mxu0 0.0
    %443 = vmatprep.subr.mxu0 0.0
    %444 = vmatpush1.msra.mxu0 0.0
    %445 = vmatprep.subr.mxu0 0.0
    %446 = vmatpush1.msra.mxu0 0.0
    %447 = vmatprep.subr.mxu0 0.0
    %448 = vmatpush1.msra.mxu0 0.0
    %449 = vmatprep.subr.mxu0 0.0
    %450 = vmatpush1.msra.mxu0 0.0
    %451 = vmatprep.subr.mxu0 0.0
    %452 = vmatpush1.msra.mxu0 0.0
    %453 = vmatprep.subr.mxu0 0.0
    %454 = vmatpush1.msra.mxu0 0.0
    %455 = vmatprep.subr.mxu0 0.0
    %456 = vmatpush1.msra.mxu0 0.0
    %457 = vmatprep.mubr.f32.mxu0 0.0
    %458 = vmatmul.mubr.f32.gmra.mrb[0].mxu0 %v391
    %v459 = vpop.f32.mrb[0].mxu0
    %v460 = vadd.f32 %v264, %v459
    %v461 = vpop.f32.mrb[0].mxu0
    %462 = vdwg.mxu0
    %s463 = scalar_lea.vmem [#allocation3], 8
    %v464 = vld [vmem:[%s463] sm:$0xff]
    %v465 = vxor.u32 %v460, 2147483648
    %v466 = vmul.f32 %v465, 1.442695
    %v467 = vpow.pop %v466
    %v468 = vadd.f32 %v467, 1.0
    %v469 = vrcp.pop %v468
    %v470 = vmul.f32 1.0, %v469
    %v471 = vtanh.pop %v460
    %473 = vrot.lane.b32.xlu0 %v464, 32
    %v474 = vpop.permute.xlu0 %473
    %v476 = vmul.f32 %v470, %v474
    %478 = vrot.lane.b32.xlu0 %v471, 32
    %v479 = vpop.permute.xlu0 %478
    %v481 = vmul.f32 %v470, %v479
    %483 = vrot.lane.b32.xlu0 %v481, 32
    %v484 = vpop.permute.xlu0 %483
    %v486 = vadd.f32 %v476, %v484
    %v487 = vtanh.pop %v486
    %489 = vrot.lane.b32.xlu0 %v487, 32
    %v490 = vpop.permute.xlu0 %489
    %v492 = vmul.f32 %v470, %v490
    %494 = vrot.lane.b32.xlu0 %v492, 64
    %v495 = vpop.permute.xlu0 %494
    %497 = vst.msk [vmem:[%s382] sm:$0xff] %vm268, %v495
    %499 = vrot.lane.b32.xlu0 %v486, 96
    %v500 = vpop.permute.xlu0 %499
    %502 = vst.msk [vmem:[%s463] sm:$0xff] %vm268, %v500
    %503 = vst.msk [vmem:[#allocation5] sm:$0xff] %vm268, %v495
    %s504 = scalar_lea.vmem [#allocation4], 8
    %v505 = vld [vmem:[%s504] sm:$0xff]
    %v506 = vld [vmem:[#allocation2] sm:$0xff]
    %v508 = vsel %vm268, %v506, 0
    %510 = vmatprep.subr.mxu0 0.0
    %511 = vmatpush1.msra.mxu0 %v247
    %512 = vmatprep.subr.mxu0 0.0
    %513 = vmatpush1.msra.mxu0 %v248
    %514 = vmatprep.subr.mxu0 0.0
    %515 = vmatpush1.msra.mxu0 %v249
    %516 = vmatprep.subr.mxu0 0.0
    %517 = vmatpush1.msra.mxu0 %v250
    %518 = vmatprep.subr.mxu0 0.0
    %519 = vmatpush1.msra.mxu0 0.0
    %520 = vmatprep.subr.mxu0 0.0
    %521 = vmatpush1.msra.mxu0 0.0
    %522 = vmatprep.subr.mxu0 0.0
    %523 = vmatpush1.msra.mxu0 0.0
    %524 = vmatprep.subr.mxu0 0.0
    %525 = vmatpush1.msra.mxu0 0.0
    %526 = vmatprep.subr.mxu0 0.0
    %527 = vmatpush1.msra.mxu0 0.0
    %528 = vmatprep.subr.mxu0 0.0
    %529 = vmatpush1.msra.mxu0 0.0
    %530 = vmatprep.subr.mxu0 0.0
    %531 = vmatpush1.msra.mxu0 0.0
    %532 = vmatprep.subr.mxu0 0.0
    %533 = vmatpush1.msra.mxu0 0.0
    %534 = vmatprep.subr.mxu0 0.0
    %535 = vmatpush1.msra.mxu0 0.0
    %536 = vmatprep.subr.mxu0 0.0
    %537 = vmatpush1.msra.mxu0 0.0
    %538 = vmatprep.subr.mxu0 0.0
    %539 = vmatpush1.msra.mxu0 0.0
    %540 = vmatprep.subr.mxu0 0.0
    %541 = vmatpush1.msra.mxu0 0.0
    %542 = vmatprep.subr.mxu0 0.0
    %543 = vmatpush1.msra.mxu0 0.0
    %544 = vmatprep.subr.mxu0 0.0
    %545 = vmatpush1.msra.mxu0 0.0
    %546 = vmatprep.subr.mxu0 0.0
    %547 = vmatpush1.msra.mxu0 0.0
    %548 = vmatprep.subr.mxu0 0.0
    %549 = vmatpush1.msra.mxu0 0.0
    %550 = vmatprep.subr.mxu0 0.0
    %551 = vmatpush1.msra.mxu0 0.0
    %552 = vmatprep.subr.mxu0 0.0
    %553 = vmatpush1.msra.mxu0 0.0
    %554 = vmatprep.subr.mxu0 0.0
    %555 = vmatpush1.msra.mxu0 0.0
    %556 = vmatprep.subr.mxu0 0.0
    %557 = vmatpush1.msra.mxu0 0.0
    %558 = vmatprep.subr.mxu0 0.0
    %559 = vmatpush1.msra.mxu0 0.0
    %560 = vmatprep.subr.mxu0 0.0
    %561 = vmatpush1.msra.mxu0 0.0
    %562 = vmatprep.subr.mxu0 0.0
    %563 = vmatpush1.msra.mxu0 0.0
    %564 = vmatprep.subr.mxu0 0.0
    %565 = vmatpush1.msra.mxu0 0.0
    %566 = vmatprep.subr.mxu0 0.0
    %567 = vmatpush1.msra.mxu0 0.0
    %568 = vmatprep.subr.mxu0 0.0
    %569 = vmatpush1.msra.mxu0 0.0
    %570 = vmatprep.subr.mxu0 0.0
    %571 = vmatpush1.msra.mxu0 0.0
    %572 = vmatprep.subr.mxu0 0.0
    %573 = vmatpush1.msra.mxu0 0.0
    %574 = vmatprep.mubr.f32.mxu0 0.0
    %575 = vmatmul.mubr.f32.gmra.mrb[0].mxu0 %v508
    %v576 = vpop.f32.mrb[0].mxu0
    %v577 = vadd.f32 0.0, %v576
    %v578 = vpop.f32.mrb[0].mxu0
    %579 = vdwg.mxu0
    %v580 = vadd.f32 %v505, %v577
    %v581 = vld [vmem:[#allocation3] sm:$0xff]
    %v582 = vxor.u32 %v580, 2147483648
    %v583 = vmul.f32 %v582, 1.442695
    %v584 = vpow.pop %v583
    %v585 = vadd.f32 %v584, 1.0
    %v586 = vrcp.pop %v585
    %v587 = vmul.f32 1.0, %v586
    %v588 = vtanh.pop %v580
    %590 = vrot.lane.b32.xlu0 %v581, 32
    %v591 = vpop.permute.xlu0 %590
    %v593 = vmul.f32 %v587, %v591
    %595 = vrot.lane.b32.xlu0 %v588, 32
    %v596 = vpop.permute.xlu0 %595
    %v598 = vmul.f32 %v587, %v596
    %600 = vrot.lane.b32.xlu0 %v598, 32
    %v601 = vpop.permute.xlu0 %600
    %v603 = vadd.f32 %v593, %v601
    %v604 = vtanh.pop %v603
    %606 = vrot.lane.b32.xlu0 %v604, 32
    %v607 = vpop.permute.xlu0 %606
    %v609 = vmul.f32 %v587, %v607
    %611 = vrot.lane.b32.xlu0 %v609, 64
    %v612 = vpop.permute.xlu0 %611
    %614 = vst.msk [vmem:[#allocation2] sm:$0xff] %vm268, %v612
    %616 = vrot.lane.b32.xlu0 %v603, 96
    %v617 = vpop.permute.xlu0 %616
    %619 = vst.msk [vmem:[#allocation3] sm:$0xff] %vm268, %v617
    %v620 = vld [vmem:[%s382] sm:$0xff]
    %622 = vrot.lane.b32.xlu0 %v620, 32
    %v623 = vpop.permute.xlu0 %622
    %v625 = vsel %vm268, %v612, %v623
    %v627 = vsel %vm389, %v625, 0
    %629 = vmatprep.subr.mxu0 0.0
    %630 = vmatpush1.msra.mxu0 %v251
    %631 = vmatprep.subr.mxu0 0.0
    %632 = vmatpush1.msra.mxu0 %v252
    %633 = vmatprep.subr.mxu0 0.0
    %634 = vmatpush1.msra.mxu0 %v253
    %635 = vmatprep.subr.mxu0 0.0
    %636 = vmatpush1.msra.mxu0 %v254
    %637 = vmatprep.subr.mxu0 0.0
    %638 = vmatpush1.msra.mxu0 %v255
    %639 = vmatprep.subr.mxu0 0.0
    %640 = vmatpush1.msra.mxu0 %v256
    %641 = vmatprep.subr.mxu0 0.0
    %642 = vmatpush1.msra.mxu0 %v257
    %643 = vmatprep.subr.mxu0 0.0
    %644 = vmatpush1.msra.mxu0 %v258
    %645 = vmatprep.subr.mxu0 0.0
    %646 = vmatpush1.msra.mxu0 0.0
    %647 = vmatprep.subr.mxu0 0.0
    %648 = vmatpush1.msra.mxu0 0.0
    %649 = vmatprep.subr.mxu0 0.0
    %650 = vmatpush1.msra.mxu0 0.0
    %651 = vmatprep.subr.mxu0 0.0
    %652 = vmatpush1.msra.mxu0 0.0
    %653 = vmatprep.subr.mxu0 0.0
    %654 = vmatpush1.msra.mxu0 0.0
    %655 = vmatprep.subr.mxu0 0.0
    %656 = vmatpush1.msra.mxu0 0.0
    %657 = vmatprep.subr.mxu0 0.0
    %658 = vmatpush1.msra.mxu0 0.0
    %659 = vmatprep.subr.mxu0 0.0
    %660 = vmatpush1.msra.mxu0 0.0
    %661 = vmatprep.subr.mxu0 0.0
    %662 = vmatpush1.msra.mxu0 0.0
    %663 = vmatprep.subr.mxu0 0.0
    %664 = vmatpush1.msra.mxu0 0.0
    %665 = vmatprep.subr.mxu0 0.0
    %666 = vmatpush1.msra.mxu0 0.0
    %667 = vmatprep.subr.mxu0 0.0
    %668 = vmatpush1.msra.mxu0 0.0
    %669 = vmatprep.subr.mxu0 0.0
    %670 = vmatpush1.msra.mxu0 0.0
    %671 = vmatprep.subr.mxu0 0.0
    %672 = vmatpush1.msra.mxu0 0.0
    %673 = vmatprep.subr.mxu0 0.0
    %674 = vmatpush1.msra.mxu0 0.0
    %675 = vmatprep.subr.mxu0 0.0
    %676 = vmatpush1.msra.mxu0 0.0
    %677 = vmatprep.subr.mxu0 0.0
    %678 = vmatpush1.msra.mxu0 0.0
    %679 = vmatprep.subr.mxu0 0.0
    %680 = vmatpush1.msra.mxu0 0.0
    %681 = vmatprep.subr.mxu0 0.0
    %682 = vmatpush1.msra.mxu0 0.0
    %683 = vmatprep.subr.mxu0 0.0
    %684 = vmatpush1.msra.mxu0 0.0
    %685 = vmatprep.subr.mxu0 0.0
    %686 = vmatpush1.msra.mxu0 0.0
    %687 = vmatprep.subr.mxu0 0.0
    %688 = vmatpush1.msra.mxu0 0.0
    %689 = vmatprep.subr.mxu0 0.0
    %690 = vmatpush1.msra.mxu0 0.0
    %691 = vmatprep.subr.mxu0 0.0
    %692 = vmatpush1.msra.mxu0 0.0
    %693 = vmatprep.mubr.f32.mxu0 0.0
    %694 = vmatmul.mubr.f32.gmra.mrb[0].mxu0 %v627
    %v695 = vpop.f32.mrb[0].mxu0
    %v696 = vadd.f32 %v264, %v695
    %v697 = vpop.f32.mrb[0].mxu0
    %698 = vdwg.mxu0
    %v699 = vld [vmem:[%s463] sm:$0xff]
    %v700 = vxor.u32 %v696, 2147483648
    %v701 = vmul.f32 %v700, 1.442695
    %v702 = vpow.pop %v701
    %v703 = vadd.f32 %v702, 1.0
    %v704 = vrcp.pop %v703
    %v705 = vmul.f32 1.0, %v704
    %v706 = vtanh.pop %v696
    %708 = vrot.lane.b32.xlu0 %v699, 32
    %v709 = vpop.permute.xlu0 %708
    %v711 = vmul.f32 %v705, %v709
    %713 = vrot.lane.b32.xlu0 %v706, 32
    %v714 = vpop.permute.xlu0 %713
    %v716 = vmul.f32 %v705, %v714
    %718 = vrot.lane.b32.xlu0 %v716, 32
    %v719 = vpop.permute.xlu0 %718
    %v721 = vadd.f32 %v711, %v719
    %v722 = vtanh.pop %v721
    %724 = vrot.lane.b32.xlu0 %v722, 32
    %v725 = vpop.permute.xlu0 %724
    %v727 = vmul.f32 %v705, %v725
    %729 = vrot.lane.b32.xlu0 %v727, 64
    %v730 = vpop.permute.xlu0 %729
    %732 = vst.msk [vmem:[%s382] sm:$0xff] %vm268, %v730
    %734 = vrot.lane.b32.xlu0 %v721, 96
    %v735 = vpop.permute.xlu0 %734
    %737 = vst.msk [vmem:[%s463] sm:$0xff] %vm268, %v735
    %s738 = scalar_lea.vmem [#allocation5], 8
    %739 = vst.msk [vmem:[%s738] sm:$0xff] %vm268, %v730
    %s740 = scalar_lea.vmem [#allocation4], 16
    %v741 = vld [vmem:[%s740] sm:$0xff]
    %v742 = vld [vmem:[#allocation2] sm:$0xff]
    %v744 = vsel %vm268, %v742, 0
    %746 = vmatprep.subr.mxu0 0.0
    %747 = vmatpush1.msra.mxu0 %v247
    %748 = vmatprep.subr.mxu0 0.0
    %749 = vmatpush1.msra.mxu0 %v248
    %750 = vmatprep.subr.mxu0 0.0
    %751 = vmatpush1.msra.mxu0 %v249
    %752 = vmatprep.subr.mxu0 0.0
    %753 = vmatpush1.msra.mxu0 %v250
    %754 = vmatprep.subr.mxu0 0.0
    %755 = vmatpush1.msra.mxu0 0.0
    %756 = vmatprep.subr.mxu0 0.0
    %757 = vmatpush1.msra.mxu0 0.0
    %758 = vmatprep.subr.mxu0 0.0
    %759 = vmatpush1.msra.mxu0 0.0
    %760 = vmatprep.subr.mxu0 0.0
    %761 = vmatpush1.msra.mxu0 0.0
    %762 = vmatprep.subr.mxu0 0.0
    %763 = vmatpush1.msra.mxu0 0.0
    %764 = vmatprep.subr.mxu0 0.0
    %765 = vmatpush1.msra.mxu0 0.0
    %766 = vmatprep.subr.mxu0 0.0
    %767 = vmatpush1.msra.mxu0 0.0
    %768 = vmatprep.subr.mxu0 0.0
    %769 = vmatpush1.msra.mxu0 0.0
    %770 = vmatprep.subr.mxu0 0.0
    %771 = vmatpush1.msra.mxu0 0.0
    %772 = vmatprep.subr.mxu0 0.0
    %773 = vmatpush1.msra.mxu0 0.0
    %774 = vmatprep.subr.mxu0 0.0
    %775 = vmatpush1.msra.mxu0 0.0
    %776 = vmatprep.subr.mxu0 0.0
    %777 = vmatpush1.msra.mxu0 0.0
    %778 = vmatprep.subr.mxu0 0.0
    %779 = vmatpush1.msra.mxu0 0.0
    %780 = vmatprep.subr.mxu0 0.0
    %781 = vmatpush1.msra.mxu0 0.0
    %782 = vmatprep.subr.mxu0 0.0
    %783 = vmatpush1.msra.mxu0 0.0
    %784 = vmatprep.subr.mxu0 0.0
    %785 = vmatpush1.msra.mxu0 0.0
    %786 = vmatprep.subr.mxu0 0.0
    %787 = vmatpush1.msra.mxu0 0.0
    %788 = vmatprep.subr.mxu0 0.0
    %789 = vmatpush1.msra.mxu0 0.0
    %790 = vmatprep.subr.mxu0 0.0
    %791 = vmatpush1.msra.mxu0 0.0
    %792 = vmatprep.subr.mxu0 0.0
    %793 = vmatpush1.msra.mxu0 0.0
    %794 = vmatprep.subr.mxu0 0.0
    %795 = vmatpush1.msra.mxu0 0.0
    %796 = vmatprep.subr.mxu0 0.0
    %797 = vmatpush1.msra.mxu0 0.0
    %798 = vmatprep.subr.mxu0 0.0
    %799 = vmatpush1.msra.mxu0 0.0
    %800 = vmatprep.subr.mxu0 0.0
    %801 = vmatpush1.msra.mxu0 0.0
    %802 = vmatprep.subr.mxu0 0.0
    %803 = vmatpush1.msra.mxu0 0.0
    %804 = vmatprep.subr.mxu0 0.0
    %805 = vmatpush1.msra.mxu0 0.0
    %806 = vmatprep.subr.mxu0 0.0
    %807 = vmatpush1.msra.mxu0 0.0
    %808 = vmatprep.subr.mxu0 0.0
    %809 = vmatpush1.msra.mxu0 0.0
    %810 = vmatprep.mubr.f32.mxu0 0.0
    %811 = vmatmul.mubr.f32.gmra.mrb[0].mxu0 %v744
    %v812 = vpop.f32.mrb[0].mxu0
    %v813 = vadd.f32 0.0, %v812
    %v814 = vpop.f32.mrb[0].mxu0
    %815 = vdwg.mxu0
    %v816 = vadd.f32 %v741, %v813
    %v817 = vld [vmem:[#allocation3] sm:$0xff]
    %v818 = vxor.u32 %v816, 2147483648
    %v819 = vmul.f32 %v818, 1.442695
    %v820 = vpow.pop %v819
    %v821 = vadd.f32 %v820, 1.0
    %v822 = vrcp.pop %v821
    %v823 = vmul.f32 1.0, %v822
    %v824 = vtanh.pop %v816
    %826 = vrot.lane.b32.xlu0 %v817, 32
    %v827 = vpop.permute.xlu0 %826
    %v829 = vmul.f32 %v823, %v827
    %831 = vrot.lane.b32.xlu0 %v824, 32
    %v832 = vpop.permute.xlu0 %831
    %v834 = vmul.f32 %v823, %v832
    %836 = vrot.lane.b32.xlu0 %v834, 32
    %v837 = vpop.permute.xlu0 %836
    %v839 = vadd.f32 %v829, %v837
    %v840 = vtanh.pop %v839
    %842 = vrot.lane.b32.xlu0 %v840, 32
    %v843 = vpop.permute.xlu0 %842
    %v845 = vmul.f32 %v823, %v843
    %847 = vrot.lane.b32.xlu0 %v845, 64
    %v848 = vpop.permute.xlu0 %847
    %850 = vst.msk [vmem:[#allocation2] sm:$0xff] %vm268, %v848
    %852 = vrot.lane.b32.xlu0 %v839, 96
    %v853 = vpop.permute.xlu0 %852
    %855 = vst.msk [vmem:[#allocation3] sm:$0xff] %vm268, %v853
    %v856 = vld [vmem:[%s382] sm:$0xff]
    %858 = vrot.lane.b32.xlu0 %v856, 32
    %v859 = vpop.permute.xlu0 %858
    %v861 = vsel %vm268, %v848, %v859
    %v863 = vsel %vm389, %v861, 0
    %865 = vmatprep.subr.mxu0 0.0
    %866 = vmatpush1.msra.mxu0 %v251
    %867 = vmatprep.subr.mxu0 0.0
    %868 = vmatpush1.msra.mxu0 %v252
    %869 = vmatprep.subr.mxu0 0.0
    %870 = vmatpush1.msra.mxu0 %v253
    %871 = vmatprep.subr.mxu0 0.0
    %872 = vmatpush1.msra.mxu0 %v254
    %873 = vmatprep.subr.mxu0 0.0
    %874 = vmatpush1.msra.mxu0 %v255
    %875 = vmatprep.subr.mxu0 0.0
    %876 = vmatpush1.msra.mxu0 %v256
    %877 = vmatprep.subr.mxu0 0.0
    %878 = vmatpush1.msra.mxu0 %v257
    %879 = vmatprep.subr.mxu0 0.0
    %880 = vmatpush1.msra.mxu0 %v258
    %881 = vmatprep.subr.mxu0 0.0
    %882 = vmatpush1.msra.mxu0 0.0
    %883 = vmatprep.subr.mxu0 0.0
    %884 = vmatpush1.msra.mxu0 0.0
    %885 = vmatprep.subr.mxu0 0.0
    %886 = vmatpush1.msra.mxu0 0.0
    %887 = vmatprep.subr.mxu0 0.0
    %888 = vmatpush1.msra.mxu0 0.0
    %889 = vmatprep.subr.mxu0 0.0
    %890 = vmatpush1.msra.mxu0 0.0
    %891 = vmatprep.subr.mxu0 0.0
    %892 = vmatpush1.msra.mxu0 0.0
    %893 = vmatprep.subr.mxu0 0.0
    %894 = vmatpush1.msra.mxu0 0.0
    %895 = vmatprep.subr.mxu0 0.0
    %896 = vmatpush1.msra.mxu0 0.0
    %897 = vmatprep.subr.mxu0 0.0
    %898 = vmatpush1.msra.mxu0 0.0
    %899 = vmatprep.subr.mxu0 0.0
    %900 = vmatpush1.msra.mxu0 0.0
    %901 = vmatprep.subr.mxu0 0.0
    %902 = vmatpush1.msra.mxu0 0.0
    %903 = vmatprep.subr.mxu0 0.0
    %904 = vmatpush1.msra.mxu0 0.0
    %905 = vmatprep.subr.mxu0 0.0
    %906 = vmatpush1.msra.mxu0 0.0
    %907 = vmatprep.subr.mxu0 0.0
    %908 = vmatpush1.msra.mxu0 0.0
    %909 = vmatprep.subr.mxu0 0.0
    %910 = vmatpush1.msra.mxu0 0.0
    %911 = vmatprep.subr.mxu0 0.0
    %912 = vmatpush1.msra.mxu0 0.0
    %913 = vmatprep.subr.mxu0 0.0
    %914 = vmatpush1.msra.mxu0 0.0
    %915 = vmatprep.subr.mxu0 0.0
    %916 = vmatpush1.msra.mxu0 0.0
    %917 = vmatprep.subr.mxu0 0.0
    %918 = vmatpush1.msra.mxu0 0.0
    %919 = vmatprep.subr.mxu0 0.0
    %920 = vmatpush1.msra.mxu0 0.0
    %921 = vmatprep.subr.mxu0 0.0
    %922 = vmatpush1.msra.mxu0 0.0
    %923 = vmatprep.subr.mxu0 0.0
    %924 = vmatpush1.msra.mxu0 0.0
    %925 = vmatprep.subr.mxu0 0.0
    %926 = vmatpush1.msra.mxu0 0.0
    %927 = vmatprep.subr.mxu0 0.0
    %928 = vmatpush1.msra.mxu0 0.0
    %929 = vmatprep.mubr.f32.mxu0 0.0
    %930 = vmatmul.mubr.f32.gmra.mrb[0].mxu0 %v863
    %v931 = vpop.f32.mrb[0].mxu0
    %v932 = vadd.f32 %v264, %v931
    %v933 = vpop.f32.mrb[0].mxu0
    %934 = vdwg.mxu0
    %v935 = vld [vmem:[%s463] sm:$0xff]
    %v936 = vxor.u32 %v932, 2147483648
    %v937 = vmul.f32 %v936, 1.442695
    %v938 = vpow.pop %v937
    %v939 = vadd.f32 %v938, 1.0
    %v940 = vrcp.pop %v939
    %v941 = vmul.f32 1.0, %v940
    %v942 = vtanh.pop %v932
    %944 = vrot.lane.b32.xlu0 %v935, 32
    %v945 = vpop.permute.xlu0 %944
    %v947 = vmul.f32 %v941, %v945
    %949 = vrot.lane.b32.xlu0 %v942, 32
    %v950 = vpop.permute.xlu0 %949
    %v952 = vmul.f32 %v941, %v950
    %954 = vrot.lane.b32.xlu0 %v952, 32
    %v955 = vpop.permute.xlu0 %954
    %v957 = vadd.f32 %v947, %v955
    %v958 = vtanh.pop %v957
    %960 = vrot.lane.b32.xlu0 %v958, 32
    %v961 = vpop.permute.xlu0 %960
    %v963 = vmul.f32 %v941, %v961
    %965 = vrot.lane.b32.xlu0 %v963, 64
    %v966 = vpop.permute.xlu0 %965
    %968 = vst.msk [vmem:[%s382] sm:$0xff] %vm268, %v966
    %970 = vrot.lane.b32.xlu0 %v957, 96
    %v971 = vpop.permute.xlu0 %970
    %973 = vst.msk [vmem:[%s463] sm:$0xff] %vm268, %v971
    %s974 = scalar_lea.vmem [#allocation5], 16
    %975 = vst.msk [vmem:[%s974] sm:$0xff] %vm268, %v966
    %s976 = scalar_lea.vmem [#allocation4], 24
    %v977 = vld [vmem:[%s976] sm:$0xff]
    %v978 = vld [vmem:[#allocation2] sm:$0xff]
    %v980 = vsel %vm268, %v978, 0
    %982 = vmatprep.subr.mxu0 0.0
    %983 = vmatpush1.msra.mxu0 %v247
    %984 = vmatprep.subr.mxu0 0.0
    %985 = vmatpush1.msra.mxu0 %v248
    %986 = vmatprep.subr.mxu0 0.0
    %987 = vmatpush1.msra.mxu0 %v249
    %988 = vmatprep.subr.mxu0 0.0
    %989 = vmatpush1.msra.mxu0 %v250
    %990 = vmatprep.subr.mxu0 0.0
    %991 = vmatpush1.msra.mxu0 0.0
    %992 = vmatprep.subr.mxu0 0.0
    %993 = vmatpush1.msra.mxu0 0.0
    %994 = vmatprep.subr.mxu0 0.0
    %995 = vmatpush1.msra.mxu0 0.0
    %996 = vmatprep.subr.mxu0 0.0
    %997 = vmatpush1.msra.mxu0 0.0
    %998 = vmatprep.subr.mxu0 0.0
    %999 = vmatpush1.msra.mxu0 0.0
    %1000 = vmatprep.subr.mxu0 0.0
    %1001 = vmatpush1.msra.mxu0 0.0
    %1002 = vmatprep.subr.mxu0 0.0
    %1003 = vmatpush1.msra.mxu0 0.0
    %1004 = vmatprep.subr.mxu0 0.0
    %1005 = vmatpush1.msra.mxu0 0.0
    %1006 = vmatprep.subr.mxu0 0.0
    %1007 = vmatpush1.msra.mxu0 0.0
    %1008 = vmatprep.subr.mxu0 0.0
    %1009 = vmatpush1.msra.mxu0 0.0
    %1010 = vmatprep.subr.mxu0 0.0
    %1011 = vmatpush1.msra.mxu0 0.0
    %1012 = vmatprep.subr.mxu0 0.0
    %1013 = vmatpush1.msra.mxu0 0.0
    %1014 = vmatprep.subr.mxu0 0.0
    %1015 = vmatpush1.msra.mxu0 0.0
    %1016 = vmatprep.subr.mxu0 0.0
    %1017 = vmatpush1.msra.mxu0 0.0
    %1018 = vmatprep.subr.mxu0 0.0
    %1019 = vmatpush1.msra.mxu0 0.0
    %1020 = vmatprep.subr.mxu0 0.0
    %1021 = vmatpush1.msra.mxu0 0.0
    %1022 = vmatprep.subr.mxu0 0.0
    %1023 = vmatpush1.msra.mxu0 0.0
    %1024 = vmatprep.subr.mxu0 0.0
    %1025 = vmatpush1.msra.mxu0 0.0
    %1026 = vmatprep.subr.mxu0 0.0
    %1027 = vmatpush1.msra.mxu0 0.0
    %1028 = vmatprep.subr.mxu0 0.0
    %1029 = vmatpush1.msra.mxu0 0.0
    %1030 = vmatprep.subr.mxu0 0.0
    %1031 = vmatpush1.msra.mxu0 0.0
    %1032 = vmatprep.subr.mxu0 0.0
    %1033 = vmatpush1.msra.mxu0 0.0
    %1034 = vmatprep.subr.mxu0 0.0
    %1035 = vmatpush1.msra.mxu0 0.0
    %1036 = vmatprep.subr.mxu0 0.0
    %1037 = vmatpush1.msra.mxu0 0.0
    %1038 = vmatprep.subr.mxu0 0.0
    %1039 = vmatpush1.msra.mxu0 0.0
    %1040 = vmatprep.subr.mxu0 0.0
    %1041 = vmatpush1.msra.mxu0 0.0
    %1042 = vmatprep.subr.mxu0 0.0
    %1043 = vmatpush1.msra.mxu0 0.0
    %1044 = vmatprep.subr.mxu0 0.0
    %1045 = vmatpush1.msra.mxu0 0.0
    %1046 = vmatprep.mubr.f32.mxu0 0.0
    %1047 = vmatmul.mubr.f32.gmra.mrb[0].mxu0 %v980
    %v1048 = vpop.f32.mrb[0].mxu0
    %v1049 = vadd.f32 0.0, %v1048
    %v1050 = vpop.f32.mrb[0].mxu0
    %1051 = vdwg.mxu0
    %v1052 = vadd.f32 %v977, %v1049
    %v1053 = vld [vmem:[#allocation3] sm:$0xff]
    %v1054 = vxor.u32 %v1052, 2147483648
    %v1055 = vmul.f32 %v1054, 1.442695
    %v1056 = vpow.pop %v1055
    %v1057 = vadd.f32 %v1056, 1.0
    %v1058 = vrcp.pop %v1057
    %v1059 = vmul.f32 1.0, %v1058
    %v1060 = vtanh.pop %v1052
    %1062 = vrot.lane.b32.xlu0 %v1053, 32
    %v1063 = vpop.permute.xlu0 %1062
    %v1065 = vmul.f32 %v1059, %v1063
    %1067 = vrot.lane.b32.xlu0 %v1060, 32
    %v1068 = vpop.permute.xlu0 %1067
    %v1070 = vmul.f32 %v1059, %v1068
    %1072 = vrot.lane.b32.xlu0 %v1070, 32
    %v1073 = vpop.permute.xlu0 %1072
    %v1075 = vadd.f32 %v1065, %v1073
    %v1076 = vtanh.pop %v1075
    %1078 = vrot.lane.b32.xlu0 %v1076, 32
    %v1079 = vpop.permute.xlu0 %1078
    %v1081 = vmul.f32 %v1059, %v1079
    %1083 = vrot.lane.b32.xlu0 %v1081, 64
    %v1084 = vpop.permute.xlu0 %1083
    %1086 = vst.msk [vmem:[#allocation2] sm:$0xff] %vm268, %v1084
    %1088 = vrot.lane.b32.xlu0 %v1075, 96
    %v1089 = vpop.permute.xlu0 %1088
    %1091 = vst.msk [vmem:[#allocation3] sm:$0xff] %vm268, %v1089
    %v1092 = vld [vmem:[%s382] sm:$0xff]
    %1094 = vrot.lane.b32.xlu0 %v1092, 32
    %v1095 = vpop.permute.xlu0 %1094
    %v1097 = vsel %vm268, %v1084, %v1095
    %v1099 = vsel %vm389, %v1097, 0
    %1101 = vmatprep.subr.mxu0 0.0
    %1102 = vmatpush1.msra.mxu0 %v251
    %1103 = vmatprep.subr.mxu0 0.0
    %1104 = vmatpush1.msra.mxu0 %v252
    %1105 = vmatprep.subr.mxu0 0.0
    %1106 = vmatpush1.msra.mxu0 %v253
    %1107 = vmatprep.subr.mxu0 0.0
    %1108 = vmatpush1.msra.mxu0 %v254
    %1109 = vmatprep.subr.mxu0 0.0
    %1110 = vmatpush1.msra.mxu0 %v255
    %1111 = vmatprep.subr.mxu0 0.0
    %1112 = vmatpush1.msra.mxu0 %v256
    %1113 = vmatprep.subr.mxu0 0.0
    %1114 = vmatpush1.msra.mxu0 %v257
    %1115 = vmatprep.subr.mxu0 0.0
    %1116 = vmatpush1.msra.mxu0 %v258
    %1117 = vmatprep.subr.mxu0 0.0
    %1118 = vmatpush1.msra.mxu0 0.0
    %1119 = vmatprep.subr.mxu0 0.0
    %1120 = vmatpush1.msra.mxu0 0.0
    %1121 = vmatprep.subr.mxu0 0.0
    %1122 = vmatpush1.msra.mxu0 0.0
    %1123 = vmatprep.subr.mxu0 0.0
    %1124 = vmatpush1.msra.mxu0 0.0
    %1125 = vmatprep.subr.mxu0 0.0
    %1126 = vmatpush1.msra.mxu0 0.0
    %1127 = vmatprep.subr.mxu0 0.0
    %1128 = vmatpush1.msra.mxu0 0.0
    %1129 = vmatprep.subr.mxu0 0.0
    %1130 = vmatpush1.msra.mxu0 0.0
    %1131 = vmatprep.subr.mxu0 0.0
    %1132 = vmatpush1.msra.mxu0 0.0
    %1133 = vmatprep.subr.mxu0 0.0
    %1134 = vmatpush1.msra.mxu0 0.0
    %1135 = vmatprep.subr.mxu0 0.0
    %1136 = vmatpush1.msra.mxu0 0.0
    %1137 = vmatprep.subr.mxu0 0.0
    %1138 = vmatpush1.msra.mxu0 0.0
    %1139 = vmatprep.subr.mxu0 0.0
    %1140 = vmatpush1.msra.mxu0 0.0
    %1141 = vmatprep.subr.mxu0 0.0
    %1142 = vmatpush1.msra.mxu0 0.0
    %1143 = vmatprep.subr.mxu0 0.0
    %1144 = vmatpush1.msra.mxu0 0.0
    %1145 = vmatprep.subr.mxu0 0.0
    %1146 = vmatpush1.msra.mxu0 0.0
    %1147 = vmatprep.subr.mxu0 0.0
    %1148 = vmatpush1.msra.mxu0 0.0
    %1149 = vmatprep.subr.mxu0 0.0
    %1150 = vmatpush1.msra.mxu0 0.0
    %1151 = vmatprep.subr.mxu0 0.0
    %1152 = vmatpush1.msra.mxu0 0.0
    %1153 = vmatprep.subr.mxu0 0.0
    %1154 = vmatpush1.msra.mxu0 0.0
    %1155 = vmatprep.subr.mxu0 0.0
    %1156 = vmatpush1.msra.mxu0 0.0
    %1157 = vmatprep.subr.mxu0 0.0
    %1158 = vmatpush1.msra.mxu0 0.0
    %1159 = vmatprep.subr.mxu0 0.0
    %1160 = vmatpush1.msra.mxu0 0.0
    %1161 = vmatprep.subr.mxu0 0.0
    %1162 = vmatpush1.msra.mxu0 0.0
    %1163 = vmatprep.subr.mxu0 0.0
    %1164 = vmatpush1.msra.mxu0 0.0
    %1165 = vmatprep.mubr.f32.mxu0 0.0
    %1166 = vmatmul.mubr.f32.gmra.mrb[0].mxu0 %v1099
    %v1167 = vpop.f32.mrb[0].mxu0
    %v1168 = vadd.f32 %v264, %v1167
    %v1169 = vpop.f32.mrb[0].mxu0
    %1170 = vdwg.mxu0
    %v1171 = vld [vmem:[%s463] sm:$0xff]
    %v1172 = vxor.u32 %v1168, 2147483648
    %v1173 = vmul.f32 %v1172, 1.442695
    %v1174 = vpow.pop %v1173
    %v1175 = vadd.f32 %v1174, 1.0
    %v1176 = vrcp.pop %v1175
    %v1177 = vmul.f32 1.0, %v1176
    %v1178 = vtanh.pop %v1168
    %1180 = vrot.lane.b32.xlu0 %v1171, 32
    %v1181 = vpop.permute.xlu0 %1180
    %v1183 = vmul.f32 %v1177, %v1181
    %1185 = vrot.lane.b32.xlu0 %v1178, 32
    %v1186 = vpop.permute.xlu0 %1185
    %v1188 = vmul.f32 %v1177, %v1186
    %1190 = vrot.lane.b32.xlu0 %v1188, 32
    %v1191 = vpop.permute.xlu0 %1190
    %v1193 = vadd.f32 %v1183, %v1191
    %v1194 = vtanh.pop %v1193
    %1196 = vrot.lane.b32.xlu0 %v1194, 32
    %v1197 = vpop.permute.xlu0 %1196
    %v1199 = vmul.f32 %v1177, %v1197
    %1201 = vrot.lane.b32.xlu0 %v1199, 64
    %v1202 = vpop.permute.xlu0 %1201
    %1204 = vst.msk [vmem:[%s382] sm:$0xff] %vm268, %v1202
    %1206 = vrot.lane.b32.xlu0 %v1193, 96
    %v1207 = vpop.permute.xlu0 %1206
    %1209 = vst.msk [vmem:[%s463] sm:$0xff] %vm268, %v1207
    %s1210 = scalar_lea.vmem [#allocation5], 24
    %1211 = vst.msk [vmem:[%s1210] sm:$0xff] %vm268, %v1202
    %s1212 = scalar_lea.vmem [#allocation4], 32
    %v1213 = vld [vmem:[%s1212] sm:$0xff]
    %v1214 = vld [vmem:[#allocation2] sm:$0xff]
    %v1216 = vsel %vm268, %v1214, 0
    %1218 = vmatprep.subr.mxu0 0.0
    %1219 = vmatpush1.msra.mxu0 %v247
    %1220 = vmatprep.subr.mxu0 0.0
    %1221 = vmatpush1.msra.mxu0 %v248
    %1222 = vmatprep.subr.mxu0 0.0
    %1223 = vmatpush1.msra.mxu0 %v249
    %1224 = vmatprep.subr.mxu0 0.0
    %1225 = vmatpush1.msra.mxu0 %v250
    %1226 = vmatprep.subr.mxu0 0.0
    %1227 = vmatpush1.msra.mxu0 0.0
    %1228 = vmatprep.subr.mxu0 0.0
    %1229 = vmatpush1.msra.mxu0 0.0
    %1230 = vmatprep.subr.mxu0 0.0
    %1231 = vmatpush1.msra.mxu0 0.0
    %1232 = vmatprep.subr.mxu0 0.0
    %1233 = vmatpush1.msra.mxu0 0.0
    %1234 = vmatprep.subr.mxu0 0.0
    %1235 = vmatpush1.msra.mxu0 0.0
    %1236 = vmatprep.subr.mxu0 0.0
    %1237 = vmatpush1.msra.mxu0 0.0
    %1238 = vmatprep.subr.mxu0 0.0
    %1239 = vmatpush1.msra.mxu0 0.0
    %1240 = vmatprep.subr.mxu0 0.0
    %1241 = vmatpush1.msra.mxu0 0.0
    %1242 = vmatprep.subr.mxu0 0.0
    %1243 = vmatpush1.msra.mxu0 0.0
    %1244 = vmatprep.subr.mxu0 0.0
    %1245 = vmatpush1.msra.mxu0 0.0
    %1246 = vmatprep.subr.mxu0 0.0
    %1247 = vmatpush1.msra.mxu0 0.0
    %1248 = vmatprep.subr.mxu0 0.0
    %1249 = vmatpush1.msra.mxu0 0.0
    %1250 = vmatprep.subr.mxu0 0.0
    %1251 = vmatpush1.msra.mxu0 0.0
    %1252 = vmatprep.subr.mxu0 0.0
    %1253 = vmatpush1.msra.mxu0 0.0
    %1254 = vmatprep.subr.mxu0 0.0
    %1255 = vmatpush1.msra.mxu0 0.0
    %1256 = vmatprep.subr.mxu0 0.0
    %1257 = vmatpush1.msra.mxu0 0.0
    %1258 = vmatprep.subr.mxu0 0.0
    %1259 = vmatpush1.msra.mxu0 0.0
    %1260 = vmatprep.subr.mxu0 0.0
    %1261 = vmatpush1.msra.mxu0 0.0
    %1262 = vmatprep.subr.mxu0 0.0
    %1263 = vmatpush1.msra.mxu0 0.0
    %1264 = vmatprep.subr.mxu0 0.0
    %1265 = vmatpush1.msra.mxu0 0.0
    %1266 = vmatprep.subr.mxu0 0.0
    %1267 = vmatpush1.msra.mxu0 0.0
    %1268 = vmatprep.subr.mxu0 0.0
    %1269 = vmatpush1.msra.mxu0 0.0
    %1270 = vmatprep.subr.mxu0 0.0
    %1271 = vmatpush1.msra.mxu0 0.0
    %1272 = vmatprep.subr.mxu0 0.0
    %1273 = vmatpush1.msra.mxu0 0.0
    %1274 = vmatprep.subr.mxu0 0.0
    %1275 = vmatpush1.msra.mxu0 0.0
    %1276 = vmatprep.subr.mxu0 0.0
    %1277 = vmatpush1.msra.mxu0 0.0
    %1278 = vmatprep.subr.mxu0 0.0
    %1279 = vmatpush1.msra.mxu0 0.0
    %1280 = vmatprep.subr.mxu0 0.0
    %1281 = vmatpush1.msra.mxu0 0.0
    %1282 = vmatprep.mubr.f32.mxu0 0.0
    %1283 = vmatmul.mubr.f32.gmra.mrb[0].mxu0 %v1216
    %v1284 = vpop.f32.mrb[0].mxu0
    %v1285 = vadd.f32 0.0, %v1284
    %v1286 = vpop.f32.mrb[0].mxu0
    %1287 = vdwg.mxu0
    %v1288 = vadd.f32 %v1213, %v1285
    %v1289 = vld [vmem:[#allocation3] sm:$0xff]
    %v1290 = vxor.u32 %v1288, 2147483648
    %v1291 = vmul.f32 %v1290, 1.442695
    %v1292 = vpow.pop %v1291
    %v1293 = vadd.f32 %v1292, 1.0
    %v1294 = vrcp.pop %v1293
    %v1295 = vmul.f32 1.0, %v1294
    %v1296 = vtanh.pop %v1288
    %1298 = vrot.lane.b32.xlu0 %v1289, 32
    %v1299 = vpop.permute.xlu0 %1298
    %v1301 = vmul.f32 %v1295, %v1299
    %1303 = vrot.lane.b32.xlu0 %v1296, 32
    %v1304 = vpop.permute.xlu0 %1303
    %v1306 = vmul.f32 %v1295, %v1304
    %1308 = vrot.lane.b32.xlu0 %v1306, 32
    %v1309 = vpop.permute.xlu0 %1308
    %v1311 = vadd.f32 %v1301, %v1309
    %v1312 = vtanh.pop %v1311
    %1314 = vrot.lane.b32.xlu0 %v1312, 32
    %v1315 = vpop.permute.xlu0 %1314
    %v1317 = vmul.f32 %v1295, %v1315
    %1319 = vrot.lane.b32.xlu0 %v1317, 64
    %v1320 = vpop.permute.xlu0 %1319
    %1322 = vst.msk [vmem:[#allocation2] sm:$0xff] %vm268, %v1320
    %1324 = vrot.lane.b32.xlu0 %v1311, 96
    %v1325 = vpop.permute.xlu0 %1324
    %1327 = vst.msk [vmem:[#allocation3] sm:$0xff] %vm268, %v1325
    %v1328 = vld [vmem:[%s382] sm:$0xff]
    %1330 = vrot.lane.b32.xlu0 %v1328, 32
    %v1331 = vpop.permute.xlu0 %1330
    %v1333 = vsel %vm268, %v1320, %v1331
    %v1335 = vsel %vm389, %v1333, 0
    %1337 = vmatprep.subr.mxu0 0.0
    %1338 = vmatpush1.msra.mxu0 %v251
    %1339 = vmatprep.subr.mxu0 0.0
    %1340 = vmatpush1.msra.mxu0 %v252
    %1341 = vmatprep.subr.mxu0 0.0
    %1342 = vmatpush1.msra.mxu0 %v253
    %1343 = vmatprep.subr.mxu0 0.0
    %1344 = vmatpush1.msra.mxu0 %v254
    %1345 = vmatprep.subr.mxu0 0.0
    %1346 = vmatpush1.msra.mxu0 %v255
    %1347 = vmatprep.subr.mxu0 0.0
    %1348 = vmatpush1.msra.mxu0 %v256
    %1349 = vmatprep.subr.mxu0 0.0
    %1350 = vmatpush1.msra.mxu0 %v257
    %1351 = vmatprep.subr.mxu0 0.0
    %1352 = vmatpush1.msra.mxu0 %v258
    %1353 = vmatprep.subr.mxu0 0.0
    %1354 = vmatpush1.msra.mxu0 0.0
    %1355 = vmatprep.subr.mxu0 0.0
    %1356 = vmatpush1.msra.mxu0 0.0
    %1357 = vmatprep.subr.mxu0 0.0
    %1358 = vmatpush1.msra.mxu0 0.0
    %1359 = vmatprep.subr.mxu0 0.0
    %1360 = vmatpush1.msra.mxu0 0.0
    %1361 = vmatprep.subr.mxu0 0.0
    %1362 = vmatpush1.msra.mxu0 0.0
    %1363 = vmatprep.subr.mxu0 0.0
    %1364 = vmatpush1.msra.mxu0 0.0
    %1365 = vmatprep.subr.mxu0 0.0
    %1366 = vmatpush1.msra.mxu0 0.0
    %1367 = vmatprep.subr.mxu0 0.0
    %1368 = vmatpush1.msra.mxu0 0.0
    %1369 = vmatprep.subr.mxu0 0.0
    %1370 = vmatpush1.msra.mxu0 0.0
    %1371 = vmatprep.subr.mxu0 0.0
    %1372 = vmatpush1.msra.mxu0 0.0
    %1373 = vmatprep.subr.mxu0 0.0
    %1374 = vmatpush1.msra.mxu0 0.0
    %1375 = vmatprep.subr.mxu0 0.0
    %1376 = vmatpush1.msra.mxu0 0.0
    %1377 = vmatprep.subr.mxu0 0.0
    %1378 = vmatpush1.msra.mxu0 0.0
    %1379 = vmatprep.subr.mxu0 0.0
    %1380 = vmatpush1.msra.mxu0 0.0
    %1381 = vmatprep.subr.mxu0 0.0
    %1382 = vmatpush1.msra.mxu0 0.0
    %1383 = vmatprep.subr.mxu0 0.0
    %1384 = vmatpush1.msra.mxu0 0.0
    %1385 = vmatprep.subr.mxu0 0.0
    %1386 = vmatpush1.msra.mxu0 0.0
    %1387 = vmatprep.subr.mxu0 0.0
    %1388 = vmatpush1.msra.mxu0 0.0
    %1389 = vmatprep.subr.mxu0 0.0
    %1390 = vmatpush1.msra.mxu0 0.0
    %1391 = vmatprep.subr.mxu0 0.0
    %1392 = vmatpush1.msra.mxu0 0.0
    %1393 = vmatprep.subr.mxu0 0.0
    %1394 = vmatpush1.msra.mxu0 0.0
    %1395 = vmatprep.subr.mxu0 0.0
    %1396 = vmatpush1.msra.mxu0 0.0
    %1397 = vmatprep.subr.mxu0 0.0
    %1398 = vmatpush1.msra.mxu0 0.0
    %1399 = vmatprep.subr.mxu0 0.0
    %1400 = vmatpush1.msra.mxu0 0.0
    %1401 = vmatprep.mubr.f32.mxu0 0.0
    %1402 = vmatmul.mubr.f32.gmra.mrb[0].mxu0 %v1335
    %v1403 = vpop.f32.mrb[0].mxu0
    %v1404 = vadd.f32 %v264, %v1403
    %v1405 = vpop.f32.mrb[0].mxu0
    %1406 = vdwg.mxu0
    %v1407 = vld [vmem:[%s463] sm:$0xff]
    %v1408 = vxor.u32 %v1404, 2147483648
    %v1409 = vmul.f32 %v1408, 1.442695
    %v1410 = vpow.pop %v1409
    %v1411 = vadd.f32 %v1410, 1.0
    %v1412 = vrcp.pop %v1411
    %v1413 = vmul.f32 1.0, %v1412
    %v1414 = vtanh.pop %v1404
    %1416 = vrot.lane.b32.xlu0 %v1407, 32
    %v1417 = vpop.permute.xlu0 %1416
    %v1419 = vmul.f32 %v1413, %v1417
    %1421 = vrot.lane.b32.xlu0 %v1414, 32
    %v1422 = vpop.permute.xlu0 %1421
    %v1424 = vmul.f32 %v1413, %v1422
    %1426 = vrot.lane.b32.xlu0 %v1424, 32
    %v1427 = vpop.permute.xlu0 %1426
    %v1429 = vadd.f32 %v1419, %v1427
    %v1430 = vtanh.pop %v1429
    %1432 = vrot.lane.b32.xlu0 %v1430, 32
    %v1433 = vpop.permute.xlu0 %1432
    %v1435 = vmul.f32 %v1413, %v1433
    %1437 = vrot.lane.b32.xlu0 %v1435, 64
    %v1438 = vpop.permute.xlu0 %1437
    %1440 = vst.msk [vmem:[%s382] sm:$0xff] %vm268, %v1438
    %1442 = vrot.lane.b32.xlu0 %v1429, 96
    %v1443 = vpop.permute.xlu0 %1442
    %1445 = vst.msk [vmem:[%s463] sm:$0xff] %vm268, %v1443
    %s1446 = scalar_lea.vmem [#allocation5], 32
    %1447 = vst.msk [vmem:[%s1446] sm:$0xff] %vm268, %v1438
    %s1448 = scalar_lea.vmem [#allocation4], 40
    %v1449 = vld [vmem:[%s1448] sm:$0xff]
    %v1450 = vld [vmem:[#allocation2] sm:$0xff]
    %v1452 = vsel %vm268, %v1450, 0
    %1454 = vmatprep.subr.mxu0 0.0
    %1455 = vmatpush1.msra.mxu0 %v247
    %1456 = vmatprep.subr.mxu0 0.0
    %1457 = vmatpush1.msra.mxu0 %v248
    %1458 = vmatprep.subr.mxu0 0.0
    %1459 = vmatpush1.msra.mxu0 %v249
    %1460 = vmatprep.subr.mxu0 0.0
    %1461 = vmatpush1.msra.mxu0 %v250
    %1462 = vmatprep.subr.mxu0 0.0
    %1463 = vmatpush1.msra.mxu0 0.0
    %1464 = vmatprep.subr.mxu0 0.0
    %1465 = vmatpush1.msra.mxu0 0.0
    %1466 = vmatprep.subr.mxu0 0.0
    %1467 = vmatpush1.msra.mxu0 0.0
    %1468 = vmatprep.subr.mxu0 0.0
    %1469 = vmatpush1.msra.mxu0 0.0
    %1470 = vmatprep.subr.mxu0 0.0
    %1471 = vmatpush1.msra.mxu0 0.0
    %1472 = vmatprep.subr.mxu0 0.0
    %1473 = vmatpush1.msra.mxu0 0.0
    %1474 = vmatprep.subr.mxu0 0.0
    %1475 = vmatpush1.msra.mxu0 0.0
    %1476 = vmatprep.subr.mxu0 0.0
    %1477 = vmatpush1.msra.mxu0 0.0
    %1478 = vmatprep.subr.mxu0 0.0
    %1479 = vmatpush1.msra.mxu0 0.0
    %1480 = vmatprep.subr.mxu0 0.0
    %1481 = vmatpush1.msra.mxu0 0.0
    %1482 = vmatprep.subr.mxu0 0.0
    %1483 = vmatpush1.msra.mxu0 0.0
    %1484 = vmatprep.subr.mxu0 0.0
    %1485 = vmatpush1.msra.mxu0 0.0
    %1486 = vmatprep.subr.mxu0 0.0
    %1487 = vmatpush1.msra.mxu0 0.0
    %1488 = vmatprep.subr.mxu0 0.0
    %1489 = vmatpush1.msra.mxu0 0.0
    %1490 = vmatprep.subr.mxu0 0.0
    %1491 = vmatpush1.msra.mxu0 0.0
    %1492 = vmatprep.subr.mxu0 0.0
    %1493 = vmatpush1.msra.mxu0 0.0
    %1494 = vmatprep.subr.mxu0 0.0
    %1495 = vmatpush1.msra.mxu0 0.0
    %1496 = vmatprep.subr.mxu0 0.0
    %1497 = vmatpush1.msra.mxu0 0.0
    %1498 = vmatprep.subr.mxu0 0.0
    %1499 = vmatpush1.msra.mxu0 0.0
    %1500 = vmatprep.subr.mxu0 0.0
    %1501 = vmatpush1.msra.mxu0 0.0
    %1502 = vmatprep.subr.mxu0 0.0
    %1503 = vmatpush1.msra.mxu0 0.0
    %1504 = vmatprep.subr.mxu0 0.0
    %1505 = vmatpush1.msra.mxu0 0.0
    %1506 = vmatprep.subr.mxu0 0.0
    %1507 = vmatpush1.msra.mxu0 0.0
    %1508 = vmatprep.subr.mxu0 0.0
    %1509 = vmatpush1.msra.mxu0 0.0
    %1510 = vmatprep.subr.mxu0 0.0
    %1511 = vmatpush1.msra.mxu0 0.0
    %1512 = vmatprep.subr.mxu0 0.0
    %1513 = vmatpush1.msra.mxu0 0.0
    %1514 = vmatprep.subr.mxu0 0.0
    %1515 = vmatpush1.msra.mxu0 0.0
    %1516 = vmatprep.subr.mxu0 0.0
    %1517 = vmatpush1.msra.mxu0 0.0
    %1518 = vmatprep.mubr.f32.mxu0 0.0
    %1519 = vmatmul.mubr.f32.gmra.mrb[0].mxu0 %v1452
    %v1520 = vpop.f32.mrb[0].mxu0
    %v1521 = vadd.f32 0.0, %v1520
    %v1522 = vpop.f32.mrb[0].mxu0
    %1523 = vdwg.mxu0
    %v1524 = vadd.f32 %v1449, %v1521
    %v1525 = vld [vmem:[#allocation3] sm:$0xff]
    %v1526 = vxor.u32 %v1524, 2147483648
    %v1527 = vmul.f32 %v1526, 1.442695
    %v1528 = vpow.pop %v1527
    %v1529 = vadd.f32 %v1528, 1.0
    %v1530 = vrcp.pop %v1529
    %v1531 = vmul.f32 1.0, %v1530
    %v1532 = vtanh.pop %v1524
    %1534 = vrot.lane.b32.xlu0 %v1525, 32
    %v1535 = vpop.permute.xlu0 %1534
    %v1537 = vmul.f32 %v1531, %v1535
    %1539 = vrot.lane.b32.xlu0 %v1532, 32
    %v1540 = vpop.permute.xlu0 %1539
    %v1542 = vmul.f32 %v1531, %v1540
    %1544 = vrot.lane.b32.xlu0 %v1542, 32
    %v1545 = vpop.permute.xlu0 %1544
    %v1547 = vadd.f32 %v1537, %v1545
    %v1548 = vtanh.pop %v1547
    %1550 = vrot.lane.b32.xlu0 %v1548, 32
    %v1551 = vpop.permute.xlu0 %1550
    %v1553 = vmul.f32 %v1531, %v1551
    %1555 = vrot.lane.b32.xlu0 %v1553, 64
    %v1556 = vpop.permute.xlu0 %1555
    %1558 = vst.msk [vmem:[#allocation2] sm:$0xff] %vm268, %v1556
    %1560 = vrot.lane.b32.xlu0 %v1547, 96
    %v1561 = vpop.permute.xlu0 %1560
    %1563 = vst.msk [vmem:[#allocation3] sm:$0xff] %vm268, %v1561
    %v1564 = vld [vmem:[%s382] sm:$0xff]
    %1566 = vrot.lane.b32.xlu0 %v1564, 32
    %v1567 = vpop.permute.xlu0 %1566
    %v1569 = vsel %vm268, %v1556, %v1567
    %v1571 = vsel %vm389, %v1569, 0
    %1573 = vmatprep.subr.mxu0 0.0
    %1574 = vmatpush1.msra.mxu0 %v251
    %1575 = vmatprep.subr.mxu0 0.0
    %1576 = vmatpush1.msra.mxu0 %v252
    %1577 = vmatprep.subr.mxu0 0.0
    %1578 = vmatpush1.msra.mxu0 %v253
    %1579 = vmatprep.subr.mxu0 0.0
    %1580 = vmatpush1.msra.mxu0 %v254
    %1581 = vmatprep.subr.mxu0 0.0
    %1582 = vmatpush1.msra.mxu0 %v255
    %1583 = vmatprep.subr.mxu0 0.0
    %1584 = vmatpush1.msra.mxu0 %v256
    %1585 = vmatprep.subr.mxu0 0.0
    %1586 = vmatpush1.msra.mxu0 %v257
    %1587 = vmatprep.subr.mxu0 0.0
    %1588 = vmatpush1.msra.mxu0 %v258
    %1589 = vmatprep.subr.mxu0 0.0
    %1590 = vmatpush1.msra.mxu0 0.0
    %1591 = vmatprep.subr.mxu0 0.0
    %1592 = vmatpush1.msra.mxu0 0.0
    %1593 = vmatprep.subr.mxu0 0.0
    %1594 = vmatpush1.msra.mxu0 0.0
    %1595 = vmatprep.subr.mxu0 0.0
    %1596 = vmatpush1.msra.mxu0 0.0
    %1597 = vmatprep.subr.mxu0 0.0
    %1598 = vmatpush1.msra.mxu0 0.0
    %1599 = vmatprep.subr.mxu0 0.0
    %1600 = vmatpush1.msra.mxu0 0.0
    %1601 = vmatprep.subr.mxu0 0.0
    %1602 = vmatpush1.msra.mxu0 0.0
    %1603 = vmatprep.subr.mxu0 0.0
    %1604 = vmatpush1.msra.mxu0 0.0
    %1605 = vmatprep.subr.mxu0 0.0
    %1606 = vmatpush1.msra.mxu0 0.0
    %1607 = vmatprep.subr.mxu0 0.0
    %1608 = vmatpush1.msra.mxu0 0.0
    %1609 = vmatprep.subr.mxu0 0.0
    %1610 = vmatpush1.msra.mxu0 0.0
    %1611 = vmatprep.subr.mxu0 0.0
    %1612 = vmatpush1.msra.mxu0 0.0
    %1613 = vmatprep.subr.mxu0 0.0
    %1614 = vmatpush1.msra.mxu0 0.0
    %1615 = vmatprep.subr.mxu0 0.0
    %1616 = vmatpush1.msra.mxu0 0.0
    %1617 = vmatprep.subr.mxu0 0.0
    %1618 = vmatpush1.msra.mxu0 0.0
    %1619 = vmatprep.subr.mxu0 0.0
    %1620 = vmatpush1.msra.mxu0 0.0
    %1621 = vmatprep.subr.mxu0 0.0
    %1622 = vmatpush1.msra.mxu0 0.0
    %1623 = vmatprep.subr.mxu0 0.0
    %1624 = vmatpush1.msra.mxu0 0.0
    %1625 = vmatprep.subr.mxu0 0.0
    %1626 = vmatpush1.msra.mxu0 0.0
    %1627 = vmatprep.subr.mxu0 0.0
    %1628 = vmatpush1.msra.mxu0 0.0
    %1629 = vmatprep.subr.mxu0 0.0
    %1630 = vmatpush1.msra.mxu0 0.0
    %1631 = vmatprep.subr.mxu0 0.0
    %1632 = vmatpush1.msra.mxu0 0.0
    %1633 = vmatprep.subr.mxu0 0.0
    %1634 = vmatpush1.msra.mxu0 0.0
    %1635 = vmatprep.subr.mxu0 0.0
    %1636 = vmatpush1.msra.mxu0 0.0
    %1637 = vmatprep.mubr.f32.mxu0 0.0
    %1638 = vmatmul.mubr.f32.gmra.mrb[0].mxu0 %v1571
    %v1639 = vpop.f32.mrb[0].mxu0
    %v1640 = vadd.f32 %v264, %v1639
    %v1641 = vpop.f32.mrb[0].mxu0
    %1642 = vdwg.mxu0
    %v1643 = vld [vmem:[%s463] sm:$0xff]
    %v1644 = vxor.u32 %v1640, 2147483648
    %v1645 = vmul.f32 %v1644, 1.442695
    %v1646 = vpow.pop %v1645
    %v1647 = vadd.f32 %v1646, 1.0
    %v1648 = vrcp.pop %v1647
    %v1649 = vmul.f32 1.0, %v1648
    %v1650 = vtanh.pop %v1640
    %1652 = vrot.lane.b32.xlu0 %v1643, 32
    %v1653 = vpop.permute.xlu0 %1652
    %v1655 = vmul.f32 %v1649, %v1653
    %1657 = vrot.lane.b32.xlu0 %v1650, 32
    %v1658 = vpop.permute.xlu0 %1657
    %v1660 = vmul.f32 %v1649, %v1658
    %1662 = vrot.lane.b32.xlu0 %v1660, 32
    %v1663 = vpop.permute.xlu0 %1662
    %v1665 = vadd.f32 %v1655, %v1663
    %v1666 = vtanh.pop %v1665
    %1668 = vrot.lane.b32.xlu0 %v1666, 32
    %v1669 = vpop.permute.xlu0 %1668
    %v1671 = vmul.f32 %v1649, %v1669
    %1673 = vrot.lane.b32.xlu0 %v1671, 64
    %v1674 = vpop.permute.xlu0 %1673
    %1676 = vst.msk [vmem:[%s382] sm:$0xff] %vm268, %v1674
    %1678 = vrot.lane.b32.xlu0 %v1665, 96
    %v1679 = vpop.permute.xlu0 %1678
    %1681 = vst.msk [vmem:[%s463] sm:$0xff] %vm268, %v1679
    %s1682 = scalar_lea.vmem [#allocation5], 40
    %1683 = vst.msk [vmem:[%s1682] sm:$0xff] %vm268, %v1674
    %s1684 = scalar_lea.vmem [#allocation4], 48
    %v1685 = vld [vmem:[%s1684] sm:$0xff]
    %v1686 = vld [vmem:[#allocation2] sm:$0xff]
    %v1688 = vsel %vm268, %v1686, 0
    %1690 = vmatprep.subr.mxu0 0.0
    %1691 = vmatpush1.msra.mxu0 %v247
    %1692 = vmatprep.subr.mxu0 0.0
    %1693 = vmatpush1.msra.mxu0 %v248
    %1694 = vmatprep.subr.mxu0 0.0
    %1695 = vmatpush1.msra.mxu0 %v249
    %1696 = vmatprep.subr.mxu0 0.0
    %1697 = vmatpush1.msra.mxu0 %v250
    %1698 = vmatprep.subr.mxu0 0.0
    %1699 = vmatpush1.msra.mxu0 0.0
    %1700 = vmatprep.subr.mxu0 0.0
    %1701 = vmatpush1.msra.mxu0 0.0
    %1702 = vmatprep.subr.mxu0 0.0
    %1703 = vmatpush1.msra.mxu0 0.0
    %1704 = vmatprep.subr.mxu0 0.0
    %1705 = vmatpush1.msra.mxu0 0.0
    %1706 = vmatprep.subr.mxu0 0.0
    %1707 = vmatpush1.msra.mxu0 0.0
    %1708 = vmatprep.subr.mxu0 0.0
    %1709 = vmatpush1.msra.mxu0 0.0
    %1710 = vmatprep.subr.mxu0 0.0
    %1711 = vmatpush1.msra.mxu0 0.0
    %1712 = vmatprep.subr.mxu0 0.0
    %1713 = vmatpush1.msra.mxu0 0.0
    %1714 = vmatprep.subr.mxu0 0.0
    %1715 = vmatpush1.msra.mxu0 0.0
    %1716 = vmatprep.subr.mxu0 0.0
    %1717 = vmatpush1.msra.mxu0 0.0
    %1718 = vmatprep.subr.mxu0 0.0
    %1719 = vmatpush1.msra.mxu0 0.0
    %1720 = vmatprep.subr.mxu0 0.0
    %1721 = vmatpush1.msra.mxu0 0.0
    %1722 = vmatprep.subr.mxu0 0.0
    %1723 = vmatpush1.msra.mxu0 0.0
    %1724 = vmatprep.subr.mxu0 0.0
    %1725 = vmatpush1.msra.mxu0 0.0
    %1726 = vmatprep.subr.mxu0 0.0
    %1727 = vmatpush1.msra.mxu0 0.0
    %1728 = vmatprep.subr.mxu0 0.0
    %1729 = vmatpush1.msra.mxu0 0.0
    %1730 = vmatprep.subr.mxu0 0.0
    %1731 = vmatpush1.msra.mxu0 0.0
    %1732 = vmatprep.subr.mxu0 0.0
    %1733 = vmatpush1.msra.mxu0 0.0
    %1734 = vmatprep.subr.mxu0 0.0
    %1735 = vmatpush1.msra.mxu0 0.0
    %1736 = vmatprep.subr.mxu0 0.0
    %1737 = vmatpush1.msra.mxu0 0.0
    %1738 = vmatprep.subr.mxu0 0.0
    %1739 = vmatpush1.msra.mxu0 0.0
    %1740 = vmatprep.subr.mxu0 0.0
    %1741 = vmatpush1.msra.mxu0 0.0
    %1742 = vmatprep.subr.mxu0 0.0
    %1743 = vmatpush1.msra.mxu0 0.0
    %1744 = vmatprep.subr.mxu0 0.0
    %1745 = vmatpush1.msra.mxu0 0.0
    %1746 = vmatprep.subr.mxu0 0.0
    %1747 = vmatpush1.msra.mxu0 0.0
    %1748 = vmatprep.subr.mxu0 0.0
    %1749 = vmatpush1.msra.mxu0 0.0
    %1750 = vmatprep.subr.mxu0 0.0
    %1751 = vmatpush1.msra.mxu0 0.0
    %1752 = vmatprep.subr.mxu0 0.0
    %1753 = vmatpush1.msra.mxu0 0.0
    %1754 = vmatprep.mubr.f32.mxu0 0.0
    %1755 = vmatmul.mubr.f32.gmra.mrb[0].mxu0 %v1688
    %v1756 = vpop.f32.mrb[0].mxu0
    %v1757 = vadd.f32 0.0, %v1756
    %v1758 = vpop.f32.mrb[0].mxu0
    %1759 = vdwg.mxu0
    %v1760 = vadd.f32 %v1685, %v1757
    %v1761 = vld [vmem:[#allocation3] sm:$0xff]
    %v1762 = vxor.u32 %v1760, 2147483648
    %v1763 = vmul.f32 %v1762, 1.442695
    %v1764 = vpow.pop %v1763
    %v1765 = vadd.f32 %v1764, 1.0
    %v1766 = vrcp.pop %v1765
    %v1767 = vmul.f32 1.0, %v1766
    %v1768 = vtanh.pop %v1760
    %1770 = vrot.lane.b32.xlu0 %v1761, 32
    %v1771 = vpop.permute.xlu0 %1770
    %v1773 = vmul.f32 %v1767, %v1771
    %1775 = vrot.lane.b32.xlu0 %v1768, 32
    %v1776 = vpop.permute.xlu0 %1775
    %v1778 = vmul.f32 %v1767, %v1776
    %1780 = vrot.lane.b32.xlu0 %v1778, 32
    %v1781 = vpop.permute.xlu0 %1780
    %v1783 = vadd.f32 %v1773, %v1781
    %v1784 = vtanh.pop %v1783
    %1786 = vrot.lane.b32.xlu0 %v1784, 32
    %v1787 = vpop.permute.xlu0 %1786
    %v1789 = vmul.f32 %v1767, %v1787
    %1791 = vrot.lane.b32.xlu0 %v1789, 64
    %v1792 = vpop.permute.xlu0 %1791
    %1794 = vst.msk [vmem:[#allocation2] sm:$0xff] %vm268, %v1792
    %1796 = vrot.lane.b32.xlu0 %v1783, 96
    %v1797 = vpop.permute.xlu0 %1796
    %1799 = vst.msk [vmem:[#allocation3] sm:$0xff] %vm268, %v1797
    %v1800 = vld [vmem:[%s382] sm:$0xff]
    %1802 = vrot.lane.b32.xlu0 %v1800, 32
    %v1803 = vpop.permute.xlu0 %1802
    %v1805 = vsel %vm268, %v1792, %v1803
    %v1807 = vsel %vm389, %v1805, 0
    %1809 = vmatprep.subr.mxu0 0.0
    %1810 = vmatpush1.msra.mxu0 %v251
    %1811 = vmatprep.subr.mxu0 0.0
    %1812 = vmatpush1.msra.mxu0 %v252
    %1813 = vmatprep.subr.mxu0 0.0
    %1814 = vmatpush1.msra.mxu0 %v253
    %1815 = vmatprep.subr.mxu0 0.0
    %1816 = vmatpush1.msra.mxu0 %v254
    %1817 = vmatprep.subr.mxu0 0.0
    %1818 = vmatpush1.msra.mxu0 %v255
    %1819 = vmatprep.subr.mxu0 0.0
    %1820 = vmatpush1.msra.mxu0 %v256
    %1821 = vmatprep.subr.mxu0 0.0
    %1822 = vmatpush1.msra.mxu0 %v257
    %1823 = vmatprep.subr.mxu0 0.0
    %1824 = vmatpush1.msra.mxu0 %v258
    %1825 = vmatprep.subr.mxu0 0.0
    %1826 = vmatpush1.msra.mxu0 0.0
    %1827 = vmatprep.subr.mxu0 0.0
    %1828 = vmatpush1.msra.mxu0 0.0
    %1829 = vmatprep.subr.mxu0 0.0
    %1830 = vmatpush1.msra.mxu0 0.0
    %1831 = vmatprep.subr.mxu0 0.0
    %1832 = vmatpush1.msra.mxu0 0.0
    %1833 = vmatprep.subr.mxu0 0.0
    %1834 = vmatpush1.msra.mxu0 0.0
    %1835 = vmatprep.subr.mxu0 0.0
    %1836 = vmatpush1.msra.mxu0 0.0
    %1837 = vmatprep.subr.mxu0 0.0
    %1838 = vmatpush1.msra.mxu0 0.0
    %1839 = vmatprep.subr.mxu0 0.0
    %1840 = vmatpush1.msra.mxu0 0.0
    %1841 = vmatprep.subr.mxu0 0.0
    %1842 = vmatpush1.msra.mxu0 0.0
    %1843 = vmatprep.subr.mxu0 0.0
    %1844 = vmatpush1.msra.mxu0 0.0
    %1845 = vmatprep.subr.mxu0 0.0
    %1846 = vmatpush1.msra.mxu0 0.0
    %1847 = vmatprep.subr.mxu0 0.0
    %1848 = vmatpush1.msra.mxu0 0.0
    %1849 = vmatprep.subr.mxu0 0.0
    %1850 = vmatpush1.msra.mxu0 0.0
    %1851 = vmatprep.subr.mxu0 0.0
    %1852 = vmatpush1.msra.mxu0 0.0
    %1853 = vmatprep.subr.mxu0 0.0
    %1854 = vmatpush1.msra.mxu0 0.0
    %1855 = vmatprep.subr.mxu0 0.0
    %1856 = vmatpush1.msra.mxu0 0.0
    %1857 = vmatprep.subr.mxu0 0.0
    %1858 = vmatpush1.msra.mxu0 0.0
    %1859 = vmatprep.subr.mxu0 0.0
    %1860 = vmatpush1.msra.mxu0 0.0
    %1861 = vmatprep.subr.mxu0 0.0
    %1862 = vmatpush1.msra.mxu0 0.0
    %1863 = vmatprep.subr.mxu0 0.0
    %1864 = vmatpush1.msra.mxu0 0.0
    %1865 = vmatprep.subr.mxu0 0.0
    %1866 = vmatpush1.msra.mxu0 0.0
    %1867 = vmatprep.subr.mxu0 0.0
    %1868 = vmatpush1.msra.mxu0 0.0
    %1869 = vmatprep.subr.mxu0 0.0
    %1870 = vmatpush1.msra.mxu0 0.0
    %1871 = vmatprep.subr.mxu0 0.0
    %1872 = vmatpush1.msra.mxu0 0.0
    %1873 = vmatprep.mubr.f32.mxu0 0.0
    %1874 = vmatmul.mubr.f32.gmra.mrb[0].mxu0 %v1807
    %v1875 = vpop.f32.mrb[0].mxu0
    %v1876 = vadd.f32 %v264, %v1875
    %v1877 = vpop.f32.mrb[0].mxu0
    %1878 = vdwg.mxu0
    %v1879 = vld [vmem:[%s463] sm:$0xff]
    %v1880 = vxor.u32 %v1876, 2147483648
    %v1881 = vmul.f32 %v1880, 1.442695
    %v1882 = vpow.pop %v1881
    %v1883 = vadd.f32 %v1882, 1.0
    %v1884 = vrcp.pop %v1883
    %v1885 = vmul.f32 1.0, %v1884
    %v1886 = vtanh.pop %v1876
    %1888 = vrot.lane.b32.xlu0 %v1879, 32
    %v1889 = vpop.permute.xlu0 %1888
    %v1891 = vmul.f32 %v1885, %v1889
    %1893 = vrot.lane.b32.xlu0 %v1886, 32
    %v1894 = vpop.permute.xlu0 %1893
    %v1896 = vmul.f32 %v1885, %v1894
    %1898 = vrot.lane.b32.xlu0 %v1896, 32
    %v1899 = vpop.permute.xlu0 %1898
    %v1901 = vadd.f32 %v1891, %v1899
    %v1902 = vtanh.pop %v1901
    %1904 = vrot.lane.b32.xlu0 %v1902, 32
    %v1905 = vpop.permute.xlu0 %1904
    %v1907 = vmul.f32 %v1885, %v1905
    %1909 = vrot.lane.b32.xlu0 %v1907, 64
    %v1910 = vpop.permute.xlu0 %1909
    %1912 = vst.msk [vmem:[%s382] sm:$0xff] %vm268, %v1910
    %1914 = vrot.lane.b32.xlu0 %v1901, 96
    %v1915 = vpop.permute.xlu0 %1914
    %1917 = vst.msk [vmem:[%s463] sm:$0xff] %vm268, %v1915
    %s1918 = scalar_lea.vmem [#allocation5], 48
    %1919 = vst.msk [vmem:[%s1918] sm:$0xff] %vm268, %v1910
    %s1920 = scalar_lea.vmem [#allocation4], 56
    %v1921 = vld [vmem:[%s1920] sm:$0xff]
    %v1922 = vld [vmem:[#allocation2] sm:$0xff]
    %v1924 = vsel %vm268, %v1922, 0
    %1926 = vmatprep.subr.mxu0 0.0
    %1927 = vmatpush1.msra.mxu0 %v247
    %1928 = vmatprep.subr.mxu0 0.0
    %1929 = vmatpush1.msra.mxu0 %v248
    %1930 = vmatprep.subr.mxu0 0.0
    %1931 = vmatpush1.msra.mxu0 %v249
    %1932 = vmatprep.subr.mxu0 0.0
    %1933 = vmatpush1.msra.mxu0 %v250
    %1934 = vmatprep.subr.mxu0 0.0
    %1935 = vmatpush1.msra.mxu0 0.0
    %1936 = vmatprep.subr.mxu0 0.0
    %1937 = vmatpush1.msra.mxu0 0.0
    %1938 = vmatprep.subr.mxu0 0.0
    %1939 = vmatpush1.msra.mxu0 0.0
    %1940 = vmatprep.subr.mxu0 0.0
    %1941 = vmatpush1.msra.mxu0 0.0
    %1942 = vmatprep.subr.mxu0 0.0
    %1943 = vmatpush1.msra.mxu0 0.0
    %1944 = vmatprep.subr.mxu0 0.0
    %1945 = vmatpush1.msra.mxu0 0.0
    %1946 = vmatprep.subr.mxu0 0.0
    %1947 = vmatpush1.msra.mxu0 0.0
    %1948 = vmatprep.subr.mxu0 0.0
    %1949 = vmatpush1.msra.mxu0 0.0
    %1950 = vmatprep.subr.mxu0 0.0
    %1951 = vmatpush1.msra.mxu0 0.0
    %1952 = vmatprep.subr.mxu0 0.0
    %1953 = vmatpush1.msra.mxu0 0.0
    %1954 = vmatprep.subr.mxu0 0.0
    %1955 = vmatpush1.msra.mxu0 0.0
    %1956 = vmatprep.subr.mxu0 0.0
    %1957 = vmatpush1.msra.mxu0 0.0
    %1958 = vmatprep.subr.mxu0 0.0
    %1959 = vmatpush1.msra.mxu0 0.0
    %1960 = vmatprep.subr.mxu0 0.0
    %1961 = vmatpush1.msra.mxu0 0.0
    %1962 = vmatprep.subr.mxu0 0.0
    %1963 = vmatpush1.msra.mxu0 0.0
    %1964 = vmatprep.subr.mxu0 0.0
    %1965 = vmatpush1.msra.mxu0 0.0
    %1966 = vmatprep.subr.mxu0 0.0
    %1967 = vmatpush1.msra.mxu0 0.0
    %1968 = vmatprep.subr.mxu0 0.0
    %1969 = vmatpush1.msra.mxu0 0.0
    %1970 = vmatprep.subr.mxu0 0.0
    %1971 = vmatpush1.msra.mxu0 0.0
    %1972 = vmatprep.subr.mxu0 0.0
    %1973 = vmatpush1.msra.mxu0 0.0
    %1974 = vmatprep.subr.mxu0 0.0
    %1975 = vmatpush1.msra.mxu0 0.0
    %1976 = vmatprep.subr.mxu0 0.0
    %1977 = vmatpush1.msra.mxu0 0.0
    %1978 = vmatprep.subr.mxu0 0.0
    %1979 = vmatpush1.msra.mxu0 0.0
    %1980 = vmatprep.subr.mxu0 0.0
    %1981 = vmatpush1.msra.mxu0 0.0
    %1982 = vmatprep.subr.mxu0 0.0
    %1983 = vmatpush1.msra.mxu0 0.0
    %1984 = vmatprep.subr.mxu0 0.0
    %1985 = vmatpush1.msra.mxu0 0.0
    %1986 = vmatprep.subr.mxu0 0.0
    %1987 = vmatpush1.msra.mxu0 0.0
    %1988 = vmatprep.subr.mxu0 0.0
    %1989 = vmatpush1.msra.mxu0 0.0
    %1990 = vmatprep.mubr.f32.mxu0 0.0
    %1991 = vmatmul.mubr.f32.gmra.mrb[0].mxu0 %v1924
    %v1992 = vpop.f32.mrb[0].mxu0
    %v1993 = vadd.f32 0.0, %v1992
    %v1994 = vpop.f32.mrb[0].mxu0
    %1995 = vdwg.mxu0
    %v1996 = vadd.f32 %v1921, %v1993
    %v1997 = vld [vmem:[#allocation3] sm:$0xff]
    %v1998 = vxor.u32 %v1996, 2147483648
    %v1999 = vmul.f32 %v1998, 1.442695
    %v2000 = vpow.pop %v1999
    %v2001 = vadd.f32 %v2000, 1.0
    %v2002 = vrcp.pop %v2001
    %v2003 = vmul.f32 1.0, %v2002
    %v2004 = vtanh.pop %v1996
    %2006 = vrot.lane.b32.xlu0 %v1997, 32
    %v2007 = vpop.permute.xlu0 %2006
    %v2009 = vmul.f32 %v2003, %v2007
    %2011 = vrot.lane.b32.xlu0 %v2004, 32
    %v2012 = vpop.permute.xlu0 %2011
    %v2014 = vmul.f32 %v2003, %v2012
    %2016 = vrot.lane.b32.xlu0 %v2014, 32
    %v2017 = vpop.permute.xlu0 %2016
    %v2019 = vadd.f32 %v2009, %v2017
    %v2020 = vtanh.pop %v2019
    %2022 = vrot.lane.b32.xlu0 %v2020, 32
    %v2023 = vpop.permute.xlu0 %2022
    %v2025 = vmul.f32 %v2003, %v2023
    %2027 = vrot.lane.b32.xlu0 %v2025, 64
    %v2028 = vpop.permute.xlu0 %2027
    %2030 = vst.msk [vmem:[#allocation2] sm:$0xff] %vm268, %v2028
    %2032 = vrot.lane.b32.xlu0 %v2019, 96
    %v2033 = vpop.permute.xlu0 %2032
    %2035 = vst.msk [vmem:[#allocation3] sm:$0xff] %vm268, %v2033
    %v2036 = vld [vmem:[%s382] sm:$0xff]
    %2038 = vrot.lane.b32.xlu0 %v2036, 32
    %v2039 = vpop.permute.xlu0 %2038
    %v2041 = vsel %vm268, %v2028, %v2039
    %v2043 = vsel %vm389, %v2041, 0
    %2045 = vmatprep.subr.mxu0 0.0
    %2046 = vmatpush1.msra.mxu0 %v251
    %2047 = vmatprep.subr.mxu0 0.0
    %2048 = vmatpush1.msra.mxu0 %v252
    %2049 = vmatprep.subr.mxu0 0.0
    %2050 = vmatpush1.msra.mxu0 %v253
    %2051 = vmatprep.subr.mxu0 0.0
    %2052 = vmatpush1.msra.mxu0 %v254
    %2053 = vmatprep.subr.mxu0 0.0
    %2054 = vmatpush1.msra.mxu0 %v255
    %2055 = vmatprep.subr.mxu0 0.0
    %2056 = vmatpush1.msra.mxu0 %v256
    %2057 = vmatprep.subr.mxu0 0.0
    %2058 = vmatpush1.msra.mxu0 %v257
    %2059 = vmatprep.subr.mxu0 0.0
    %2060 = vmatpush1.msra.mxu0 %v258
    %2061 = vmatprep.subr.mxu0 0.0
    %2062 = vmatpush1.msra.mxu0 0.0
    %2063 = vmatprep.subr.mxu0 0.0
    %2064 = vmatpush1.msra.mxu0 0.0
    %2065 = vmatprep.subr.mxu0 0.0
    %2066 = vmatpush1.msra.mxu0 0.0
    %2067 = vmatprep.subr.mxu0 0.0
    %2068 = vmatpush1.msra.mxu0 0.0
    %2069 = vmatprep.subr.mxu0 0.0
    %2070 = vmatpush1.msra.mxu0 0.0
    %2071 = vmatprep.subr.mxu0 0.0
    %2072 = vmatpush1.msra.mxu0 0.0
    %2073 = vmatprep.subr.mxu0 0.0
    %2074 = vmatpush1.msra.mxu0 0.0
    %2075 = vmatprep.subr.mxu0 0.0
    %2076 = vmatpush1.msra.mxu0 0.0
    %2077 = vmatprep.subr.mxu0 0.0
    %2078 = vmatpush1.msra.mxu0 0.0
    %2079 = vmatprep.subr.mxu0 0.0
    %2080 = vmatpush1.msra.mxu0 0.0
    %2081 = vmatprep.subr.mxu0 0.0
    %2082 = vmatpush1.msra.mxu0 0.0
    %2083 = vmatprep.subr.mxu0 0.0
    %2084 = vmatpush1.msra.mxu0 0.0
    %2085 = vmatprep.subr.mxu0 0.0
    %2086 = vmatpush1.msra.mxu0 0.0
    %2087 = vmatprep.subr.mxu0 0.0
    %2088 = vmatpush1.msra.mxu0 0.0
    %2089 = vmatprep.subr.mxu0 0.0
    %2090 = vmatpush1.msra.mxu0 0.0
    %2091 = vmatprep.subr.mxu0 0.0
    %2092 = vmatpush1.msra.mxu0 0.0
    %2093 = vmatprep.subr.mxu0 0.0
    %2094 = vmatpush1.msra.mxu0 0.0
    %2095 = vmatprep.subr.mxu0 0.0
    %2096 = vmatpush1.msra.mxu0 0.0
    %2097 = vmatprep.subr.mxu0 0.0
    %2098 = vmatpush1.msra.mxu0 0.0
    %2099 = vmatprep.subr.mxu0 0.0
    %2100 = vmatpush1.msra.mxu0 0.0
    %2101 = vmatprep.subr.mxu0 0.0
    %2102 = vmatpush1.msra.mxu0 0.0
    %2103 = vmatprep.subr.mxu0 0.0
    %2104 = vmatpush1.msra.mxu0 0.0
    %2105 = vmatprep.subr.mxu0 0.0
    %2106 = vmatpush1.msra.mxu0 0.0
    %2107 = vmatprep.subr.mxu0 0.0
    %2108 = vmatpush1.msra.mxu0 0.0
    %2109 = vmatprep.mubr.f32.mxu0 0.0
    %2110 = vmatmul.mubr.f32.gmra.mrb[0].mxu0 %v2043
    %v2111 = vpop.f32.mrb[0].mxu0
    %v2112 = vadd.f32 %v264, %v2111
    %v2113 = vpop.f32.mrb[0].mxu0
    %2114 = vdwg.mxu0
    %v2115 = vld [vmem:[%s463] sm:$0xff]
    %v2116 = vxor.u32 %v2112, 2147483648
    %v2117 = vmul.f32 %v2116, 1.442695
    %v2118 = vpow.pop %v2117
    %v2119 = vadd.f32 %v2118, 1.0
    %v2120 = vrcp.pop %v2119
    %v2121 = vmul.f32 1.0, %v2120
    %v2122 = vtanh.pop %v2112
    %2124 = vrot.lane.b32.xlu0 %v2115, 32
    %v2125 = vpop.permute.xlu0 %2124
    %v2127 = vmul.f32 %v2121, %v2125
    %2129 = vrot.lane.b32.xlu0 %v2122, 32
    %v2130 = vpop.permute.xlu0 %2129
    %v2132 = vmul.f32 %v2121, %v2130
    %2134 = vrot.lane.b32.xlu0 %v2132, 32
    %v2135 = vpop.permute.xlu0 %2134
    %v2137 = vadd.f32 %v2127, %v2135
    %v2138 = vtanh.pop %v2137
    %2140 = vrot.lane.b32.xlu0 %v2138, 32
    %v2141 = vpop.permute.xlu0 %2140
    %v2143 = vmul.f32 %v2121, %v2141
    %2145 = vrot.lane.b32.xlu0 %v2143, 64
    %v2146 = vpop.permute.xlu0 %2145
    %2148 = vst.msk [vmem:[%s382] sm:$0xff] %vm268, %v2146
    %2150 = vrot.lane.b32.xlu0 %v2137, 96
    %v2151 = vpop.permute.xlu0 %2150
    %2153 = vst.msk [vmem:[%s463] sm:$0xff] %vm268, %v2151
    %s2154 = scalar_lea.vmem [#allocation5], 56
    %2155 = vst.msk [vmem:[%s2154] sm:$0xff] %vm268, %v2146
    %v2156 = vld [vmem:[#allocation5] sm:$0xff]
    %v2157 = vld [vmem:[#allocation5 + $0x8] sm:$0xff]
    %v2158 = vld [vmem:[#allocation5 + $0x10] sm:$0xff]
    %v2159 = vld [vmem:[#allocation5 + $0x18] sm:$0xff]
    %v2160 = vld [vmem:[#allocation5 + $0x20] sm:$0xff]
    %v2161 = vld [vmem:[#allocation5 + $0x28] sm:$0xff]
    %v2162 = vld [vmem:[#allocation5 + $0x30] sm:$0xff]
    %v2163 = vld [vmem:[#allocation5 + $0x38] sm:$0xff]
    %v2164 = vld [vmem:[%s6] sm:$0xff]
    %v2165 = vld [vmem:[%s6 + $0x8] sm:$0xff]
    %v2166 = vld [vmem:[%s7] sm:$0xff]
    %v2167 = vld [vmem:[%s7 + $0x8] sm:$0xff]
    %2169 = vset.pattern.permute.xlu0 0
    %2170 = vperm.xlu0 %2169, %v2166
    %v2171 = vpop.permute.xlu0 %2170
    %2174 = vset.pattern.permute.xlu0 0
    %2175 = vperm.xlu0 %2174, %v2167
    %v2176 = vpop.permute.xlu0 %2175
    %v2179 = vsel %vm268, %v2164, 0
    %v2182 = vsel %vm268, %v2165, 0
    %v2185 = vsel %vm268, %v2156, 0
    %v2188 = vsel %vm268, %v2157, 0
    %v2191 = vsel %vm268, %v2158, 0
    %v2194 = vsel %vm268, %v2159, 0
    %v2197 = vsel %vm268, %v2160, 0
    %v2200 = vsel %vm268, %v2161, 0
    %v2203 = vsel %vm268, %v2162, 0
    %v2206 = vsel %vm268, %v2163, 0
    %2208 = vmatprep.subr.mxu0 0.0
    %2209 = vmatpush1.xpose.msra.mxu0 %v2185
    %2210 = vmatprep.subr.mxu0 0.0
    %2211 = vmatpush1.xpose.msra.mxu0 %v2188
    %2212 = vmatprep.subr.mxu0 0.0
    %2213 = vmatpush1.xpose.msra.mxu0 %v2191
    %2214 = vmatprep.subr.mxu0 0.0
    %2215 = vmatpush1.xpose.msra.mxu0 %v2194
    %2216 = vmatprep.subr.mxu0 0.0
    %2217 = vmatpush1.xpose.msra.mxu0 %v2197
    %2218 = vmatprep.subr.mxu0 0.0
    %2219 = vmatpush1.xpose.msra.mxu0 %v2200
    %2220 = vmatprep.subr.mxu0 0.0
    %2221 = vmatpush1.xpose.msra.mxu0 %v2203
    %2222 = vmatprep.subr.mxu0 0.0
    %2223 = vmatpush1.xpose.msra.mxu0 %v2206
    %2224 = vmatprep.subr.mxu0 0.0
    %2225 = vmatpush1.xpose.msra.mxu0 0.0
    %2226 = vmatprep.subr.mxu0 0.0
    %2227 = vmatpush1.xpose.msra.mxu0 0.0
    %2228 = vmatprep.subr.mxu0 0.0
    %2229 = vmatpush1.xpose.msra.mxu0 0.0
    %2230 = vmatprep.subr.mxu0 0.0
    %2231 = vmatpush1.xpose.msra.mxu0 0.0
    %2232 = vmatprep.subr.mxu0 0.0
    %2233 = vmatpush1.xpose.msra.mxu0 0.0
    %2234 = vmatprep.subr.mxu0 0.0
    %2235 = vmatpush1.xpose.msra.mxu0 0.0
    %2236 = vmatprep.subr.mxu0 0.0
    %2237 = vmatpush1.xpose.msra.mxu0 0.0
    %2238 = vmatprep.subr.mxu0 0.0
    %2239 = vmatpush1.xpose.msra.mxu0 0.0
    %2240 = vmatprep.subr.mxu0 0.0
    %2241 = vmatpush1.xpose.msra.mxu0 0.0
    %2242 = vmatprep.subr.mxu0 0.0
    %2243 = vmatpush1.xpose.msra.mxu0 0.0
    %2244 = vmatprep.subr.mxu0 0.0
    %2245 = vmatpush1.xpose.msra.mxu0 0.0
    %2246 = vmatprep.subr.mxu0 0.0
    %2247 = vmatpush1.xpose.msra.mxu0 0.0
    %2248 = vmatprep.subr.mxu0 0.0
    %2249 = vmatpush1.xpose.msra.mxu0 0.0
    %2250 = vmatprep.subr.mxu0 0.0
    %2251 = vmatpush1.xpose.msra.mxu0 0.0
    %2252 = vmatprep.subr.mxu0 0.0
    %2253 = vmatpush1.xpose.msra.mxu0 0.0
    %2254 = vmatprep.subr.mxu0 0.0
    %2255 = vmatpush1.xpose.msra.mxu0 0.0
    %2256 = vmatprep.subr.mxu0 0.0
    %2257 = vmatpush1.xpose.msra.mxu0 0.0
    %2258 = vmatprep.subr.mxu0 0.0
    %2259 = vmatpush1.xpose.msra.mxu0 0.0
    %2260 = vmatprep.subr.mxu0 0.0
    %2261 = vmatpush1.xpose.msra.mxu0 0.0
    %2262 = vmatprep.subr.mxu0 0.0
    %2263 = vmatpush1.xpose.msra.mxu0 0.0
    %2264 = vmatprep.subr.mxu0 0.0
    %2265 = vmatpush1.xpose.msra.mxu0 0.0
    %2266 = vmatprep.subr.mxu0 0.0
    %2267 = vmatpush1.xpose.msra.mxu0 0.0
    %2268 = vmatprep.subr.mxu0 0.0
    %2269 = vmatpush1.xpose.msra.mxu0 0.0
    %2270 = vmatprep.subr.mxu0 0.0
    %2271 = vmatpush1.xpose.msra.mxu0 0.0
    %2272 = vmatprep.mubr.f32.mxu0 0.0
    %2273 = vmatmul.mubr.f32.gmra.mrb[0].mxu0 %v2179
    %v2274 = vpop.f32.mrb[0].mxu0
    %v2275 = vadd.f32 %v2171, %v2274
    %v2276 = vpop.f32.mrb[0].mxu0
    %2277 = vmatprep.mubr.f32.mxu0 0.0
    %2278 = vmatmul.mubr.f32.gmra.mrb[0].mxu0 %v2182
    %v2279 = vpop.f32.mrb[0].mxu0
    %v2280 = vadd.f32 %v2176, %v2279
    %v2281 = vpop.f32.mrb[0].mxu0
    %2282 = vdwg.mxu0
    %2283 = vst.msk [vmem:[#allocation14] sm:$0xff] %vm389, %v2275
    %2284 = vst.msk [vmem:[#allocation14 + $0x8] sm:$0xff] %vm389, %v2280
    // Predicated region
    $region54: #{tpu_custom_call.1} parent=1 // pred_check
      _
    $region55: #{tpu_custom_call.1} parent=1 // pred_check_branch
      %2286 = sbr.rel (0) target = $region57
    $region56: #{tpu_custom_call.1} parent=1 // pred_region
      %s2288 = ssub.s32 256, 256
      %2289 = vsyncadd [#allocation8], %s2288
      %s2290 = sshll.u32 [#allocation14], 4
      %s2291 = int_to_ptr.vmem [resolvable:$true] %s2290
      %2296 = dma.vmem_to_hbm [thread:$0]  %s2291, 256, %s8, [#allocation8], 128, 128, 8
    $region57: #{tpu_custom_call.1} parent=1 // pred_fallthru
      _
    // Predicated region
    $region58: #{tpu_custom_call.1} parent=1 // pred_check
      _
    $region59: #{tpu_custom_call.1} parent=1 // pred_check_branch
      %2298 = sbr.rel (0) target = $region61
    $region60: #{tpu_custom_call.1} parent=1 // pred_region
      %2299 = dma.done [#allocation8], 256
    $region61: #{tpu_custom_call.1} parent=1 // pred_fallthru
      _
    %2300 = vsyncpa [#allocation7], 1
    %2301 = vsyncpa [#allocation10], 1
    %2302 = vsyncpa [#allocation13], 1
    %2303 = vsyncpa [#allocation8], 1

</llo_original>
